<compile_context>
chip_gen: v6e
topology: v6e:2x2x1
jax: 0.10.0
libtpu: 0.0.40
codegen_flags: <defaults>
</compile_context>

<pallas_src>
import functools

import jax
import jax.numpy as jnp
from jax.experimental import pallas as pl
from jax.experimental.pallas import tpu as pltpu

_K = 4          # ConvTranspose kernel size (stride 2, padding 1)
_EPS = 1e-5     # BatchNorm eps
_TM = 512       # row tile for all Pallas grids


def _round_up(x, m):
    return (x + m - 1) // m * m


# -----------------------------------------------------------------------------
# Pallas kernels
# -----------------------------------------------------------------------------
def _matmul_kernel(x_ref, w_ref, o_ref):
    o_ref[...] = jnp.dot(
        x_ref[...], w_ref[...], preferred_element_type=jnp.float32
    ).astype(o_ref.dtype)


def _matmul_bias_kernel(x_ref, w_ref, b_ref, o_ref):
    y = jnp.dot(x_ref[...], w_ref[...], preferred_element_type=jnp.float32)
    o_ref[...] = (y + b_ref[...]).astype(o_ref.dtype)


def _stats_kernel(x_ref, s_ref, s2_ref):
    # Per-channel sum / sum-of-squares accumulated across the row-tile grid.
    @pl.when(pl.program_id(0) == 0)
    def _init():
        s_ref[...] = jnp.zeros_like(s_ref)
        s2_ref[...] = jnp.zeros_like(s2_ref)

    x = x_ref[...].astype(jnp.float32)
    s_ref[...] += jnp.sum(x, axis=0, keepdims=True)
    s2_ref[...] += jnp.sum(x * x, axis=0, keepdims=True)


def _scale_shift_act_kernel(x_ref, sc_ref, sh_ref, o_ref, *, act):
    y = x_ref[...].astype(jnp.float32) * sc_ref[...] + sh_ref[...]
    if act == "leaky":
        y = jnp.where(y >= 0.0, y, 0.2 * y)
    elif act == "sigmoid":
        # exp on the EUP + approximate reciprocal (off the VALU slot).
        y = pl.reciprocal(1.0 + jnp.exp(-y), approx=True)
    o_ref[...] = y.astype(o_ref.dtype)


# -----------------------------------------------------------------------------
# Pallas wrappers (row-tiled grids)
# -----------------------------------------------------------------------------
def _row_grid(M, tm):
    tm_eff = min(tm, _round_up(M, 16))
    return tm_eff, _round_up(M, tm_eff)


def _pad_rows(x, rows):
    if rows == x.shape[0]:
        return x
    return jnp.pad(x, ((0, rows - x.shape[0]), (0, 0)))


def matmul_pallas(x, w, bias=None, *, out_dtype=jnp.float32, tm=_TM):
    """(M, K) @ (K, N) [+ bias]; bf16 operands, f32 accumulation, row-tiled."""
    M, K = x.shape
    _, N = w.shape
    tm_eff, Mp = _row_grid(M, tm)
    xp = _pad_rows(x.astype(jnp.bfloat16), Mp)
    wb = w.astype(jnp.bfloat16)

    in_specs = [pl.BlockSpec((tm_eff, K), lambda i: (i, 0)),
                pl.BlockSpec((K, N), lambda i: (0, 0))]
    args = [xp, wb]
    if bias is not None:
        in_specs.append(pl.BlockSpec((1, N), lambda i: (0, 0)))
        args.append(bias.reshape(1, N).astype(jnp.float32))
        kernel = _matmul_bias_kernel
    else:
        kernel = _matmul_kernel

    out = pl.pallas_call(
        kernel,
        out_shape=jax.ShapeDtypeStruct((Mp, N), out_dtype),
        grid=(Mp // tm_eff,),
        in_specs=in_specs,
        out_specs=pl.BlockSpec((tm_eff, N), lambda i: (i, 0)),
        compiler_params=pltpu.CompilerParams(
            dimension_semantics=("parallel",)),
    )(*args)
    return out[:M] if Mp != M else out


def channel_stats_pallas(x, *, tm=_TM):
    """Per-channel sum and sum-of-squares of a (M, C) array -> two (C,) f32."""
    M, C = x.shape
    tm_eff, Mp = _row_grid(M, tm)
    xp = _pad_rows(x.astype(jnp.float32), Mp)   # zero rows do not bias the sums
    s, s2 = pl.pallas_call(
        _stats_kernel,
        out_shape=(jax.ShapeDtypeStruct((1, C), jnp.float32),
                   jax.ShapeDtypeStruct((1, C), jnp.float32)),
        grid=(Mp // tm_eff,),
        in_specs=[pl.BlockSpec((tm_eff, C), lambda i: (i, 0))],
        out_specs=(pl.BlockSpec((1, C), lambda i: (0, 0)),
                   pl.BlockSpec((1, C), lambda i: (0, 0))),
        compiler_params=pltpu.CompilerParams(
            dimension_semantics=("arbitrary",)),
    )(xp)
    return s[0], s2[0]


def scale_shift_act_pallas(x, scale, shift, *, act, out_dtype, tm=_TM):
    """Fused per-channel y*scale + shift followed by LeakyReLU / Sigmoid."""
    M, C = x.shape
    tm_eff, Mp = _row_grid(M, tm)
    xp = _pad_rows(x, Mp)
    kernel = functools.partial(_scale_shift_act_kernel, act=act)
    out = pl.pallas_call(
        kernel,
        out_shape=jax.ShapeDtypeStruct((Mp, C), out_dtype),
        grid=(Mp // tm_eff,),
        in_specs=[pl.BlockSpec((tm_eff, C), lambda i: (i, 0)),
                  pl.BlockSpec((1, C), lambda i: (0, 0)),
                  pl.BlockSpec((1, C), lambda i: (0, 0))],
        out_specs=pl.BlockSpec((tm_eff, C), lambda i: (i, 0)),
        compiler_params=pltpu.CompilerParams(
            dimension_semantics=("parallel",)),
    )(xp, scale.reshape(1, C).astype(jnp.float32),
      shift.reshape(1, C).astype(jnp.float32))
    return out[:M] if Mp != M else out


# -----------------------------------------------------------------------------
# Plain-JAX glue: col2im overlap-add for ConvTranspose2d(k=4, s=2, p=1)
#   output index = 2*i - 1 + k = 2*(i + _SHIFT[k]) + _PARITY[k]
# -----------------------------------------------------------------------------
_PARITY = (1, 0, 1, 0)
_SHIFT = (-1, 0, 0, 1)


def _shift2d(a, dy, dx):
    """result[:, m, n, :] = a[:, m - dy, n - dx, :]   (zero outside)."""
    _, H, W, _ = a.shape
    ap = jnp.pad(a, ((0, 0),
                     (max(dy, 0), max(-dy, 0)),
                     (max(dx, 0), max(-dx, 0)),
                     (0, 0)))
    oy, ox = max(-dy, 0), max(-dx, 0)
    return ap[:, oy:oy + H, ox:ox + W, :]


def _col2im_s2k4p1(y):
    """y: (B, H, W, 4, 4, C) per-pixel tap contributions -> (B, 2H, 2W, C)."""
    B, H, W, _, _, C = y.shape
    planes = []
    for py in (0, 1):
        row = []
        for px in (0, 1):
            acc = jnp.zeros((B, H, W, C), jnp.float32)
            for kh in range(_K):
                if _PARITY[kh] != py:
                    continue
                for kw in range(_K):
                    if _PARITY[kw] != px:
                        continue
                    acc = acc + _shift2d(
                        y[:, :, :, kh, kw, :].astype(jnp.float32),
                        _SHIFT[kh], _SHIFT[kw])
            row.append(acc)
        planes.append(jnp.stack(row, axis=3))      # (B, H, W, 2, C)  (px axis)
    out = jnp.stack(planes, axis=2)                # (B, H, 2, W, 2, C)
    return out.reshape(B, 2 * H, 2 * W, C)


# -----------------------------------------------------------------------------
# Decoder forward
# -----------------------------------------------------------------------------
def decoder_forward(z, params, shape_before_flattening):
    """z: (B, z_dim) -> image (B, out_channels, 16*H0, 16*W0), NCHW."""
    B = z.shape[0]
    F, H0, W0 = shape_before_flattening

    # fc: z @ W^T + b   (bias fused in-kernel; no BN / activation)
    x = matmul_pallas(z, params["fc_w"].T, bias=params["fc_b"],
                      out_dtype=jnp.bfloat16)
    x = x.reshape(B, F, H0, W0)              # NCHW (PyTorch .view)
    x = jnp.transpose(x, (0, 2, 3, 1))       # NHWC for the conv stack

    H, W, cin = H0, W0, F
    layer_cfg = [("1", True, "leaky"),
                 ("2", True, "leaky"),
                 ("3", True, "leaky"),
                 ("4", False, "sigmoid")]
    for idx, use_bn, act in layer_cfg:
        wt = params[f"w{idx}"]                                    # (Cin,Cout,4,4)
        cout = wt.shape[1]
        wmat = jnp.transpose(wt, (0, 2, 3, 1)).reshape(cin, _K * _K * cout)

        # One lane-dense matmul: all 16 kernel-tap contributions per pixel.
        y = matmul_pallas(x.reshape(B * H * W, cin), wmat,
                          out_dtype=jnp.float32)
        conv = _col2im_s2k4p1(y.reshape(B, H, W, _K, _K, cout))   # (B,2H,2W,C)

        H, W = 2 * H, 2 * W
        conv2d = conv.reshape(B * H * W, cout)
        if use_bn:
            # Conv bias is a no-op under batch-stat BatchNorm -> omitted.
            s, s2 = channel_stats_pallas(conv2d)
            n = float(conv2d.shape[0])
            mean = s / n
            var = jnp.maximum(s2 / n - mean * mean, 0.0)          # biased var
            scale = params[f"g{idx}"] * jax.lax.rsqrt(var + _EPS)
            shift = params[f"be{idx}"] - mean * scale
            out_dtype = jnp.bfloat16          # intermediate activations in bf16
        else:
            scale = jnp.ones((cout,), jnp.float32)
            shift = params[f"b{idx}"].astype(jnp.float32)
            out_dtype = jnp.float32
        xf = scale_shift_act_pallas(conv2d, scale, shift, act=act,
                                    out_dtype=out_dtype)
        x = xf.reshape(B, H, W, cout)
        cin = cout

    return jnp.transpose(x, (0, 3, 1, 2)).astype(jnp.float32)     # NCHW


# -----------------------------------------------------------------------------
# Pure-JAX f32 reference (independent formulation, for correctness check)
# -----------------------------------------------------------------------------
def reference_forward(z, params, shape_before_flattening):
    B = z.shape[0]
    F, H0, W0 = shape_before_flattening
    x = jnp.dot(z, params["fc_w"].T, precision="highest") + params["fc_b"]
    x = x.reshape(B, F, H0, W0)
    for i, last in zip(range(1, 5), (False, False, False, True)):
        wt = params[f"w{i}"]                      # (Cin, Cout, K, K)
        wc = jnp.transpose(wt[:, :, ::-1, ::-1], (1, 0, 2, 3))   # OIHW
        x = jax.lax.conv_general_dilated(
            x, wc, window_strides=(1, 1), padding=((2, 2), (2, 2)),
            lhs_dilation=(2, 2), dimension_numbers=("NCHW", "OIHW", "NCHW"),
            precision="highest")
        x = x + params[f"b{i}"].reshape(1, -1, 1, 1)
        if not last:
            mean = x.mean(axis=(0, 2, 3), keepdims=True)
            var = jnp.square(x - mean).mean(axis=(0, 2, 3), keepdims=True)
            x = (x - mean) / jnp.sqrt(var + _EPS)
            x = x * params[f"g{i}"].reshape(1, -1, 1, 1) \
                  + params[f"be{i}"].reshape(1, -1, 1, 1)
            x = jnp.where(x >= 0, x, 0.2 * x)
        else:
            x = jax.nn.sigmoid(x)
    return x


# -----------------------------------------------------------------------------
# Parameter init (deterministic, in-script)
# -----------------------------------------------------------------------------
def init_params(key, z_dim, num_features, out_channels):
    F = num_features
    ks = jax.random.split(key, 10)
    p = {
        "fc_w": 0.1 * jax.random.normal(ks[0], (F * 2 * 2, z_dim), jnp.float32),
        "fc_b": 0.1 * jax.random.normal(ks[1], (F * 2 * 2,), jnp.float32),
    }
    cins = [F, F, F, F]
    couts = [F, F, F, out_channels]
    for i in range(4):
        p[f"w{i + 1}"] = 0.1 * jax.random.normal(
            ks[2 + 2 * i], (cins[i], couts[i], _K, _K), jnp.float32)
        p[f"b{i + 1}"] = 0.1 * jax.random.normal(
            ks[3 + 2 * i], (couts[i],), jnp.float32)
    for i in range(1, 4):   # BatchNorm affine params (PyTorch init: 1 / 0)
        p[f"g{i}"] = jnp.ones((F,), jnp.float32)
        p[f"be{i}"] = jnp.zeros((F,), jnp.float32)
    return p


# -----------------------------------------------------------------------------
if __name__ == "__main__":
    # Small shapes consistent with the module: z_dim=32, num_features=16,
    # out_channels=3, batch=2, shape_before_flattening=(16, 2, 2) -> 32x32 out.
    Z_DIM, NUM_FEATURES, OUT_CHANNELS, BATCH = 32, 16, 3, 2
    SHAPE_BEFORE_FLATTEN = (NUM_FEATURES, 2, 2)

    key = jax.random.PRNGKey(0)
    kz, kp = jax.random.split(key)
    z = jax.random.normal(kz, (BATCH, Z_DIM), jnp.float32)
    params = init_params(kp, Z_DIM, NUM_FEATURES, OUT_CHANNELS)

    fwd = jax.jit(lambda zz, pp: decoder_forward(zz, pp, SHAPE_BEFORE_FLATTEN))
    out = jax.block_until_ready(fwd(z, params))

    assert out.shape == (BATCH, OUT_CHANNELS, 32, 32), out.shape

    ref = jax.block_until_ready(
        reference_forward(z, params, SHAPE_BEFORE_FLATTEN))
    max_err = float(jnp.max(jnp.abs(out - ref)))
    # bf16 matmul operands (f32 accumulation) -> small, bounded deviation.
    assert jnp.allclose(out, ref, rtol=3e-2, atol=3e-2), max_err

    print("KERNEL_OK")
</pallas_src>

<mosaic_0001>
module attributes {stable_mosaic.version = 11 : i64} {
  func.func @_matmul_bias_kernel(%arg0: i32, %arg1: memref<16x32xbf16, #tpu.memory_space<vmem>>, %arg2: memref<32x64xbf16, #tpu.memory_space<vmem>>, %arg3: memref<1x64xf32, #tpu.memory_space<vmem>>, %arg4: memref<16x64xbf16, #tpu.memory_space<vmem>>) attributes {dimension_semantics = [#tpu.dimension_semantics<parallel>], iteration_bounds = array<i64: 1>, scalar_prefetch = 0 : i64, scratch_operands = 0 : i64, tpu.core_type = #tpu.core_type<tc>, window_params = [{transform_indices = @transform_0, window_bounds = array<i64: 16, 32>}, {pipeline_mode = #tpu.pipeline_mode<synchronous>, transform_indices = @transform_1, window_bounds = array<i64: 32, 64>}, {pipeline_mode = #tpu.pipeline_mode<synchronous>, transform_indices = @transform_2, window_bounds = array<i64: 1, 64>}, {transform_indices = @transform_3, window_bounds = array<i64: 16, 64>}]} {
    %c0 = arith.constant 0 : index
    %c0_0 = arith.constant 0 : index
    %0 = vector.load %arg1[%c0, %c0_0] : memref<16x32xbf16, #tpu.memory_space<vmem>>, vector<16x32xbf16>
    %c0_1 = arith.constant 0 : index
    %c0_2 = arith.constant 0 : index
    %1 = vector.load %arg2[%c0_1, %c0_2] : memref<32x64xbf16, #tpu.memory_space<vmem>>, vector<32x64xbf16>
    %cst = arith.constant dense<0.000000e+00> : vector<16x64xf32>
    %2 = tpu.matmul %0, %1, %cst {dimension_numbers = #tpu.dot_dimension_numbers<[1], [0], [0], [1], [0, 0, 1, 1], [], []>} : vector<16x32xbf16>, vector<32x64xbf16>, vector<16x64xf32> -> vector<16x64xf32>
    %c0_3 = arith.constant 0 : index
    %c0_4 = arith.constant 0 : index
    %3 = vector.load %arg3[%c0_3, %c0_4] : memref<1x64xf32, #tpu.memory_space<vmem>>, vector<1x64xf32>
    %4 = vector.broadcast %3 : vector<1x64xf32> to vector<16x64xf32>
    %5 = arith.addf %2, %4 : vector<16x64xf32>
    %6 = arith.truncf %5 : vector<16x64xf32> to vector<16x64xbf16>
    %c0_5 = arith.constant 0 : index
    %c0_6 = arith.constant 0 : index
    %7 = vector.load %arg4[%c0_5, %c0_6] : memref<16x64xbf16, #tpu.memory_space<vmem>>, vector<16x64xbf16>
    tpu.vector_store %arg4[%c0_5, %c0_6], %6 {strides = array<i32>} : memref<16x64xbf16, #tpu.memory_space<vmem>>, vector<16x64xbf16>,
    return
  }
  func.func @transform_0(%arg0: i32) -> (i32, i32) {
    %c0_i32 = arith.constant 0 : i32
    %c0_i32_0 = arith.constant 0 : i32
    return %arg0, %c0_i32 : i32, i32
  }
  func.func @transform_1(%arg0: i32) -> (i32, i32) {
    %c0_i32 = arith.constant 0 : i32
    %c0_i32_0 = arith.constant 0 : i32
    %c0_i32_1 = arith.constant 0 : i32
    return %c0_i32, %c0_i32_0 : i32, i32
  }
  func.func @transform_2(%arg0: i32) -> (i32, i32) {
    %c0_i32 = arith.constant 0 : i32
    %c0_i32_0 = arith.constant 0 : i32
    %c0_i32_1 = arith.constant 0 : i32
    return %c0_i32, %c0_i32_0 : i32, i32
  }
  func.func @transform_3(%arg0: i32) -> (i32, i32) {
    %c0_i32 = arith.constant 0 : i32
    %c0_i32_0 = arith.constant 0 : i32
    return %arg0, %c0_i32 : i32, i32
  }
}

module attributes {stable_mosaic.version = 11 : i64} {
  func.func @_matmul_kernel(%arg0: i32, %arg1: memref<16x16xbf16, #tpu.memory_space<vmem>>, %arg2: memref<16x256xbf16, #tpu.memory_space<vmem>>, %arg3: memref<16x256xf32, #tpu.memory_space<vmem>>) attributes {dimension_semantics = [#tpu.dimension_semantics<parallel>], iteration_bounds = array<i64: 1>, scalar_prefetch = 0 : i64, scratch_operands = 0 : i64, tpu.core_type = #tpu.core_type<tc>, window_params = [{transform_indices = @transform_0, window_bounds = array<i64: 16, 16>}, {pipeline_mode = #tpu.pipeline_mode<synchronous>, transform_indices = @transform_1, window_bounds = array<i64: 16, 256>}, {transform_indices = @transform_2, window_bounds = array<i64: 16, 256>}]} {
    %c0 = arith.constant 0 : index
    %c0_0 = arith.constant 0 : index
    %0 = vector.load %arg1[%c0, %c0_0] : memref<16x16xbf16, #tpu.memory_space<vmem>>, vector<16x16xbf16>
    %c0_1 = arith.constant 0 : index
    %c0_2 = arith.constant 0 : index
    %1 = vector.load %arg2[%c0_1, %c0_2] : memref<16x256xbf16, #tpu.memory_space<vmem>>, vector<16x256xbf16>
    %cst = arith.constant dense<0.000000e+00> : vector<16x256xf32>
    %2 = tpu.matmul %0, %1, %cst {dimension_numbers = #tpu.dot_dimension_numbers<[1], [0], [0], [1], [0, 0, 1, 1], [], []>} : vector<16x16xbf16>, vector<16x256xbf16>, vector<16x256xf32> -> vector<16x256xf32>
    %c0_3 = arith.constant 0 : index
    %c0_4 = arith.constant 0 : index
    %3 = vector.load %arg3[%c0_3, %c0_4] : memref<16x256xf32, #tpu.memory_space<vmem>>, vector<16x256xf32>
    tpu.vector_store %arg3[%c0_3, %c0_4], %2 {strides = array<i32>} : memref<16x256xf32, #tpu.memory_space<vmem>>, vector<16x256xf32>,
    return
  }
  func.func @transform_0(%arg0: i32) -> (i32, i32) {
    %c0_i32 = arith.constant 0 : i32
    %c0_i32_0 = arith.constant 0 : i32
    return %arg0, %c0_i32 : i32, i32
  }
  func.func @transform_1(%arg0: i32) -> (i32, i32) {
    %c0_i32 = arith.constant 0 : i32
    %c0_i32_0 = arith.constant 0 : i32
    %c0_i32_1 = arith.constant 0 : i32
    return %c0_i32, %c0_i32_0 : i32, i32
  }
  func.func @transform_2(%arg0: i32) -> (i32, i32) {
    %c0_i32 = arith.constant 0 : i32
    %c0_i32_0 = arith.constant 0 : i32
    return %arg0, %c0_i32 : i32, i32
  }
}

module attributes {stable_mosaic.version = 11 : i64} {
  func.func @_matmul_kernel(%arg0: i32, %arg1: memref<32x16xbf16, #tpu.memory_space<vmem>>, %arg2: memref<16x256xbf16, #tpu.memory_space<vmem>>, %arg3: memref<32x256xf32, #tpu.memory_space<vmem>>) attributes {dimension_semantics = [#tpu.dimension_semantics<parallel>], iteration_bounds = array<i64: 1>, scalar_prefetch = 0 : i64, scratch_operands = 0 : i64, tpu.core_type = #tpu.core_type<tc>, window_params = [{transform_indices = @transform_0, window_bounds = array<i64: 32, 16>}, {pipeline_mode = #tpu.pipeline_mode<synchronous>, transform_indices = @transform_1, window_bounds = array<i64: 16, 256>}, {transform_indices = @transform_2, window_bounds = array<i64: 32, 256>}]} {
    %c0 = arith.constant 0 : index
    %c0_0 = arith.constant 0 : index
    %0 = vector.load %arg1[%c0, %c0_0] : memref<32x16xbf16, #tpu.memory_space<vmem>>, vector<32x16xbf16>
    %c0_1 = arith.constant 0 : index
    %c0_2 = arith.constant 0 : index
    %1 = vector.load %arg2[%c0_1, %c0_2] : memref<16x256xbf16, #tpu.memory_space<vmem>>, vector<16x256xbf16>
    %cst = arith.constant dense<0.000000e+00> : vector<32x256xf32>
    %2 = tpu.matmul %0, %1, %cst {dimension_numbers = #tpu.dot_dimension_numbers<[1], [0], [0], [1], [0, 0, 1, 1], [], []>} : vector<32x16xbf16>, vector<16x256xbf16>, vector<32x256xf32> -> vector<32x256xf32>
    %c0_3 = arith.constant 0 : index
    %c0_4 = arith.constant 0 : index
    %3 = vector.load %arg3[%c0_3, %c0_4] : memref<32x256xf32, #tpu.memory_space<vmem>>, vector<32x256xf32>
    tpu.vector_store %arg3[%c0_3, %c0_4], %2 {strides = array<i32>} : memref<32x256xf32, #tpu.memory_space<vmem>>, vector<32x256xf32>,
    return
  }
  func.func @transform_0(%arg0: i32) -> (i32, i32) {
    %c0_i32 = arith.constant 0 : i32
    %c0_i32_0 = arith.constant 0 : i32
    return %arg0, %c0_i32 : i32, i32
  }
  func.func @transform_1(%arg0: i32) -> (i32, i32) {
    %c0_i32 = arith.constant 0 : i32
    %c0_i32_0 = arith.constant 0 : i32
    %c0_i32_1 = arith.constant 0 : i32
    return %c0_i32, %c0_i32_0 : i32, i32
  }
  func.func @transform_2(%arg0: i32) -> (i32, i32) {
    %c0_i32 = arith.constant 0 : i32
    %c0_i32_0 = arith.constant 0 : i32
    return %arg0, %c0_i32 : i32, i32
  }
}

module attributes {stable_mosaic.version = 11 : i64} {
  func.func @_stats_kernel(%arg0: i32, %arg1: memref<32x16xf32, #tpu.memory_space<vmem>>, %arg2: memref<1x16xf32, #tpu.memory_space<vmem>>, %arg3: memref<1x16xf32, #tpu.memory_space<vmem>>) attributes {dimension_semantics = [#tpu.dimension_semantics<arbitrary>], iteration_bounds = array<i64: 1>, scalar_prefetch = 0 : i64, scratch_operands = 0 : i64, tpu.core_type = #tpu.core_type<tc>, window_params = [{transform_indices = @transform_0, window_bounds = array<i64: 32, 16>}, {pipeline_mode = #tpu.pipeline_mode<synchronous>, transform_indices = @transform_1, window_bounds = array<i64: 1, 16>}, {pipeline_mode = #tpu.pipeline_mode<synchronous>, transform_indices = @transform_2, window_bounds = array<i64: 1, 16>}]} {
    %c0_i32 = arith.constant 0 : i32
    %0 = arith.cmpi eq, %arg0, %c0_i32 : i32
    %1 = arith.extui %0 : i1 to i32
    %c0_i32_0 = arith.constant 0 : i32
    %2 = arith.cmpi ne, %1, %c0_i32_0 : i32
    scf.if %2 {
      %cst_11 = arith.constant 0.000000e+00 : f32
      %15 = vector.broadcast %cst_11 : f32 to vector<1x16xf32>
      %c0_12 = arith.constant 0 : index
      %c0_13 = arith.constant 0 : index
      %16 = vector.load %arg2[%c0_12, %c0_13] : memref<1x16xf32, #tpu.memory_space<vmem>>, vector<1x16xf32>
      tpu.vector_store %arg2[%c0_12, %c0_13], %15 {strides = array<i32>} : memref<1x16xf32, #tpu.memory_space<vmem>>, vector<1x16xf32>,
      %cst_14 = arith.constant 0.000000e+00 : f32
      %17 = vector.broadcast %cst_14 : f32 to vector<1x16xf32>
      %c0_15 = arith.constant 0 : index
      %c0_16 = arith.constant 0 : index
      %18 = vector.load %arg3[%c0_15, %c0_16] : memref<1x16xf32, #tpu.memory_space<vmem>>, vector<1x16xf32>
      tpu.vector_store %arg3[%c0_15, %c0_16], %17 {strides = array<i32>} : memref<1x16xf32, #tpu.memory_space<vmem>>, vector<1x16xf32>,
    } else {
    }
    %c0 = arith.constant 0 : index
    %c0_1 = arith.constant 0 : index
    %3 = vector.load %arg1[%c0, %c0_1] : memref<32x16xf32, #tpu.memory_space<vmem>>, vector<32x16xf32>
    %c0_2 = arith.constant 0 : index
    %c0_3 = arith.constant 0 : index
    %4 = vector.load %arg2[%c0_2, %c0_3] : memref<1x16xf32, #tpu.memory_space<vmem>>, vector<1x16xf32>
    %cst = arith.constant dense<0.000000e+00> : vector<16xf32>
    %5 = vector.multi_reduction <add>, %3, %cst [0] : vector<32x16xf32> to vector<16xf32>
    %6 = vector.shape_cast %5 : vector<16xf32> to vector<1x16xf32>
    %7 = arith.addf %4, %6 : vector<1x16xf32>
    %c0_4 = arith.constant 0 : index
    %c0_5 = arith.constant 0 : index
    %8 = vector.load %arg2[%c0_4, %c0_5] : memref<1x16xf32, #tpu.memory_space<vmem>>, vector<1x16xf32>
    tpu.vector_store %arg2[%c0_4, %c0_5], %7 {strides = array<i32>} : memref<1x16xf32, #tpu.memory_space<vmem>>, vector<1x16xf32>,
    %c0_6 = arith.constant 0 : index
    %c0_7 = arith.constant 0 : index
    %9 = vector.load %arg3[%c0_6, %c0_7] : memref<1x16xf32, #tpu.memory_space<vmem>>, vector<1x16xf32>
    %10 = arith.mulf %3, %3 : vector<32x16xf32>
    %cst_8 = arith.constant dense<0.000000e+00> : vector<16xf32>
    %11 = vector.multi_reduction <add>, %10, %cst_8 [0] : vector<32x16xf32> to vector<16xf32>
    %12 = vector.shape_cast %11 : vector<16xf32> to vector<1x16xf32>
    %13 = arith.addf %9, %12 : vector<1x16xf32>
    %c0_9 = arith.constant 0 : index
    %c0_10 = arith.constant 0 : index
    %14 = vector.load %arg3[%c0_9, %c0_10] : memref<1x16xf32, #tpu.memory_space<vmem>>, vector<1x16xf32>
    tpu.vector_store %arg3[%c0_9, %c0_10], %13 {strides = array<i32>} : memref<1x16xf32, #tpu.memory_space<vmem>>, vector<1x16xf32>,
    return
  }
  func.func @transform_0(%arg0: i32) -> (i32, i32) {
    %c0_i32 = arith.constant 0 : i32
    %c0_i32_0 = arith.constant 0 : i32
    return %arg0, %c0_i32 : i32, i32
  }
  func.func @transform_1(%arg0: i32) -> (i32, i32) {
    %c0_i32 = arith.constant 0 : i32
    %c0_i32_0 = arith.constant 0 : i32
    %c0_i32_1 = arith.constant 0 : i32
    return %c0_i32, %c0_i32_0 : i32, i32
  }
  func.func @transform_2(%arg0: i32) -> (i32, i32) {
    %c0_i32 = arith.constant 0 : i32
    %c0_i32_0 = arith.constant 0 : i32
    %c0_i32_1 = arith.constant 0 : i32
    return %c0_i32, %c0_i32_0 : i32, i32
  }
}

module attributes {stable_mosaic.version = 11 : i64} {
  func.func @_scale_shift_act_kernel(%arg0: i32, %arg1: memref<32x16xf32, #tpu.memory_space<vmem>>, %arg2: memref<1x16xf32, #tpu.memory_space<vmem>>, %arg3: memref<1x16xf32, #tpu.memory_space<vmem>>, %arg4: memref<32x16xbf16, #tpu.memory_space<vmem>>) attributes {dimension_semantics = [#tpu.dimension_semantics<parallel>], iteration_bounds = array<i64: 1>, scalar_prefetch = 0 : i64, scratch_operands = 0 : i64, tpu.core_type = #tpu.core_type<tc>, window_params = [{transform_indices = @transform_0, window_bounds = array<i64: 32, 16>}, {pipeline_mode = #tpu.pipeline_mode<synchronous>, transform_indices = @transform_1, window_bounds = array<i64: 1, 16>}, {pipeline_mode = #tpu.pipeline_mode<synchronous>, transform_indices = @transform_2, window_bounds = array<i64: 1, 16>}, {transform_indices = @transform_3, window_bounds = array<i64: 32, 16>}]} {
    %c0 = arith.constant 0 : index
    %c0_0 = arith.constant 0 : index
    %0 = vector.load %arg1[%c0, %c0_0] : memref<32x16xf32, #tpu.memory_space<vmem>>, vector<32x16xf32>
    %c0_1 = arith.constant 0 : index
    %c0_2 = arith.constant 0 : index
    %1 = vector.load %arg2[%c0_1, %c0_2] : memref<1x16xf32, #tpu.memory_space<vmem>>, vector<1x16xf32>
    %2 = vector.broadcast %1 : vector<1x16xf32> to vector<32x16xf32>
    %3 = arith.mulf %0, %2 : vector<32x16xf32>
    %c0_3 = arith.constant 0 : index
    %c0_4 = arith.constant 0 : index
    %4 = vector.load %arg3[%c0_3, %c0_4] : memref<1x16xf32, #tpu.memory_space<vmem>>, vector<1x16xf32>
    %5 = vector.broadcast %4 : vector<1x16xf32> to vector<32x16xf32>
    %6 = arith.addf %3, %5 : vector<32x16xf32>
    %cst = arith.constant 0.000000e+00 : f32
    %7 = vector.broadcast %cst : f32 to vector<32x16xf32>
    %8 = arith.cmpf oge, %6, %7 : vector<32x16xf32>
    %cst_5 = arith.constant 2.000000e-01 : f32
    %9 = vector.broadcast %cst_5 : f32 to vector<32x16xf32>
    %10 = arith.mulf %9, %6 : vector<32x16xf32>
    %11 = arith.select %8, %6, %10 : vector<32x16xi1>, vector<32x16xf32>
    %12 = arith.truncf %11 : vector<32x16xf32> to vector<32x16xbf16>
    %c0_6 = arith.constant 0 : index
    %c0_7 = arith.constant 0 : index
    %13 = vector.load %arg4[%c0_6, %c0_7] : memref<32x16xbf16, #tpu.memory_space<vmem>>, vector<32x16xbf16>
    tpu.vector_store %arg4[%c0_6, %c0_7], %12 {strides = array<i32>} : memref<32x16xbf16, #tpu.memory_space<vmem>>, vector<32x16xbf16>,
    return
  }
  func.func @transform_0(%arg0: i32) -> (i32, i32) {
    %c0_i32 = arith.constant 0 : i32
    %c0_i32_0 = arith.constant 0 : i32
    return %arg0, %c0_i32 : i32, i32
  }
  func.func @transform_1(%arg0: i32) -> (i32, i32) {
    %c0_i32 = arith.constant 0 : i32
    %c0_i32_0 = arith.constant 0 : i32
    %c0_i32_1 = arith.constant 0 : i32
    return %c0_i32, %c0_i32_0 : i32, i32
  }
  func.func @transform_2(%arg0: i32) -> (i32, i32) {
    %c0_i32 = arith.constant 0 : i32
    %c0_i32_0 = arith.constant 0 : i32
    %c0_i32_1 = arith.constant 0 : i32
    return %c0_i32, %c0_i32_0 : i32, i32
  }
  func.func @transform_3(%arg0: i32) -> (i32, i32) {
    %c0_i32 = arith.constant 0 : i32
    %c0_i32_0 = arith.constant 0 : i32
    return %arg0, %c0_i32 : i32, i32
  }
}

module attributes {stable_mosaic.version = 11 : i64} {
  func.func @_scale_shift_act_kernel(%arg0: i32, %arg1: memref<128x16xf32, #tpu.memory_space<vmem>>, %arg2: memref<1x16xf32, #tpu.memory_space<vmem>>, %arg3: memref<1x16xf32, #tpu.memory_space<vmem>>, %arg4: memref<128x16xbf16, #tpu.memory_space<vmem>>) attributes {dimension_semantics = [#tpu.dimension_semantics<parallel>], iteration_bounds = array<i64: 1>, scalar_prefetch = 0 : i64, scratch_operands = 0 : i64, tpu.core_type = #tpu.core_type<tc>, window_params = [{transform_indices = @transform_0, window_bounds = array<i64: 128, 16>}, {pipeline_mode = #tpu.pipeline_mode<synchronous>, transform_indices = @transform_1, window_bounds = array<i64: 1, 16>}, {pipeline_mode = #tpu.pipeline_mode<synchronous>, transform_indices = @transform_2, window_bounds = array<i64: 1, 16>}, {transform_indices = @transform_3, window_bounds = array<i64: 128, 16>}]} {
    %c0 = arith.constant 0 : index
    %c0_0 = arith.constant 0 : index
    %0 = vector.load %arg1[%c0, %c0_0] : memref<128x16xf32, #tpu.memory_space<vmem>>, vector<128x16xf32>
    %c0_1 = arith.constant 0 : index
    %c0_2 = arith.constant 0 : index
    %1 = vector.load %arg2[%c0_1, %c0_2] : memref<1x16xf32, #tpu.memory_space<vmem>>, vector<1x16xf32>
    %2 = vector.broadcast %1 : vector<1x16xf32> to vector<128x16xf32>
    %3 = arith.mulf %0, %2 : vector<128x16xf32>
    %c0_3 = arith.constant 0 : index
    %c0_4 = arith.constant 0 : index
    %4 = vector.load %arg3[%c0_3, %c0_4] : memref<1x16xf32, #tpu.memory_space<vmem>>, vector<1x16xf32>
    %5 = vector.broadcast %4 : vector<1x16xf32> to vector<128x16xf32>
    %6 = arith.addf %3, %5 : vector<128x16xf32>
    %cst = arith.constant 0.000000e+00 : f32
    %7 = vector.broadcast %cst : f32 to vector<128x16xf32>
    %8 = arith.cmpf oge, %6, %7 : vector<128x16xf32>
    %cst_5 = arith.constant 2.000000e-01 : f32
    %9 = vector.broadcast %cst_5 : f32 to vector<128x16xf32>
    %10 = arith.mulf %9, %6 : vector<128x16xf32>
    %11 = arith.select %8, %6, %10 : vector<128x16xi1>, vector<128x16xf32>
    %12 = arith.truncf %11 : vector<128x16xf32> to vector<128x16xbf16>
    %c0_6 = arith.constant 0 : index
    %c0_7 = arith.constant 0 : index
    %13 = vector.load %arg4[%c0_6, %c0_7] : memref<128x16xbf16, #tpu.memory_space<vmem>>, vector<128x16xbf16>
    tpu.vector_store %arg4[%c0_6, %c0_7], %12 {strides = array<i32>} : memref<128x16xbf16, #tpu.memory_space<vmem>>, vector<128x16xbf16>,
    return
  }
  func.func @transform_0(%arg0: i32) -> (i32, i32) {
    %c0_i32 = arith.constant 0 : i32
    %c0_i32_0 = arith.constant 0 : i32
    return %arg0, %c0_i32 : i32, i32
  }
  func.func @transform_1(%arg0: i32) -> (i32, i32) {
    %c0_i32 = arith.constant 0 : i32
    %c0_i32_0 = arith.constant 0 : i32
    %c0_i32_1 = arith.constant 0 : i32
    return %c0_i32, %c0_i32_0 : i32, i32
  }
  func.func @transform_2(%arg0: i32) -> (i32, i32) {
    %c0_i32 = arith.constant 0 : i32
    %c0_i32_0 = arith.constant 0 : i32
    %c0_i32_1 = arith.constant 0 : i32
    return %c0_i32, %c0_i32_0 : i32, i32
  }
  func.func @transform_3(%arg0: i32) -> (i32, i32) {
    %c0_i32 = arith.constant 0 : i32
    %c0_i32_0 = arith.constant 0 : i32
    return %arg0, %c0_i32 : i32, i32
  }
}

module attributes {stable_mosaic.version = 11 : i64} {
  func.func @_stats_kernel(%arg0: i32, %arg1: memref<128x16xf32, #tpu.memory_space<vmem>>, %arg2: memref<1x16xf32, #tpu.memory_space<vmem>>, %arg3: memref<1x16xf32, #tpu.memory_space<vmem>>) attributes {dimension_semantics = [#tpu.dimension_semantics<arbitrary>], iteration_bounds = array<i64: 1>, scalar_prefetch = 0 : i64, scratch_operands = 0 : i64, tpu.core_type = #tpu.core_type<tc>, window_params = [{transform_indices = @transform_0, window_bounds = array<i64: 128, 16>}, {pipeline_mode = #tpu.pipeline_mode<synchronous>, transform_indices = @transform_1, window_bounds = array<i64: 1, 16>}, {pipeline_mode = #tpu.pipeline_mode<synchronous>, transform_indices = @transform_2, window_bounds = array<i64: 1, 16>}]} {
    %c0_i32 = arith.constant 0 : i32
    %0 = arith.cmpi eq, %arg0, %c0_i32 : i32
    %1 = arith.extui %0 : i1 to i32
    %c0_i32_0 = arith.constant 0 : i32
    %2 = arith.cmpi ne, %1, %c0_i32_0 : i32
    scf.if %2 {
      %cst_11 = arith.constant 0.000000e+00 : f32
      %15 = vector.broadcast %cst_11 : f32 to vector<1x16xf32>
      %c0_12 = arith.constant 0 : index
      %c0_13 = arith.constant 0 : index
      %16 = vector.load %arg2[%c0_12, %c0_13] : memref<1x16xf32, #tpu.memory_space<vmem>>, vector<1x16xf32>
      tpu.vector_store %arg2[%c0_12, %c0_13], %15 {strides = array<i32>} : memref<1x16xf32, #tpu.memory_space<vmem>>, vector<1x16xf32>,
      %cst_14 = arith.constant 0.000000e+00 : f32
      %17 = vector.broadcast %cst_14 : f32 to vector<1x16xf32>
      %c0_15 = arith.constant 0 : index
      %c0_16 = arith.constant 0 : index
      %18 = vector.load %arg3[%c0_15, %c0_16] : memref<1x16xf32, #tpu.memory_space<vmem>>, vector<1x16xf32>
      tpu.vector_store %arg3[%c0_15, %c0_16], %17 {strides = array<i32>} : memref<1x16xf32, #tpu.memory_space<vmem>>, vector<1x16xf32>,
    } else {
    }
    %c0 = arith.constant 0 : index
    %c0_1 = arith.constant 0 : index
    %3 = vector.load %arg1[%c0, %c0_1] : memref<128x16xf32, #tpu.memory_space<vmem>>, vector<128x16xf32>
    %c0_2 = arith.constant 0 : index
    %c0_3 = arith.constant 0 : index
    %4 = vector.load %arg2[%c0_2, %c0_3] : memref<1x16xf32, #tpu.memory_space<vmem>>, vector<1x16xf32>
    %cst = arith.constant dense<0.000000e+00> : vector<16xf32>
    %5 = vector.multi_reduction <add>, %3, %cst [0] : vector<128x16xf32> to vector<16xf32>
    %6 = vector.shape_cast %5 : vector<16xf32> to vector<1x16xf32>
    %7 = arith.addf %4, %6 : vector<1x16xf32>
    %c0_4 = arith.constant 0 : index
    %c0_5 = arith.constant 0 : index
    %8 = vector.load %arg2[%c0_4, %c0_5] : memref<1x16xf32, #tpu.memory_space<vmem>>, vector<1x16xf32>
    tpu.vector_store %arg2[%c0_4, %c0_5], %7 {strides = array<i32>} : memref<1x16xf32, #tpu.memory_space<vmem>>, vector<1x16xf32>,
    %c0_6 = arith.constant 0 : index
    %c0_7 = arith.constant 0 : index
    %9 = vector.load %arg3[%c0_6, %c0_7] : memref<1x16xf32, #tpu.memory_space<vmem>>, vector<1x16xf32>
    %10 = arith.mulf %3, %3 : vector<128x16xf32>
    %cst_8 = arith.constant dense<0.000000e+00> : vector<16xf32>
    %11 = vector.multi_reduction <add>, %10, %cst_8 [0] : vector<128x16xf32> to vector<16xf32>
    %12 = vector.shape_cast %11 : vector<16xf32> to vector<1x16xf32>
    %13 = arith.addf %9, %12 : vector<1x16xf32>
    %c0_9 = arith.constant 0 : index
    %c0_10 = arith.constant 0 : index
    %14 = vector.load %arg3[%c0_9, %c0_10] : memref<1x16xf32, #tpu.memory_space<vmem>>, vector<1x16xf32>
    tpu.vector_store %arg3[%c0_9, %c0_10], %13 {strides = array<i32>} : memref<1x16xf32, #tpu.memory_space<vmem>>, vector<1x16xf32>,
    return
  }
  func.func @transform_0(%arg0: i32) -> (i32, i32) {
    %c0_i32 = arith.constant 0 : i32
    %c0_i32_0 = arith.constant 0 : i32
    return %arg0, %c0_i32 : i32, i32
  }
  func.func @transform_1(%arg0: i32) -> (i32, i32) {
    %c0_i32 = arith.constant 0 : i32
    %c0_i32_0 = arith.constant 0 : i32
    %c0_i32_1 = arith.constant 0 : i32
    return %c0_i32, %c0_i32_0 : i32, i32
  }
  func.func @transform_2(%arg0: i32) -> (i32, i32) {
    %c0_i32 = arith.constant 0 : i32
    %c0_i32_0 = arith.constant 0 : i32
    %c0_i32_1 = arith.constant 0 : i32
    return %c0_i32, %c0_i32_0 : i32, i32
  }
}

module attributes {stable_mosaic.version = 11 : i64} {
  func.func @_matmul_kernel(%arg0: i32, %arg1: memref<128x16xbf16, #tpu.memory_space<vmem>>, %arg2: memref<16x256xbf16, #tpu.memory_space<vmem>>, %arg3: memref<128x256xf32, #tpu.memory_space<vmem>>) attributes {dimension_semantics = [#tpu.dimension_semantics<parallel>], iteration_bounds = array<i64: 1>, scalar_prefetch = 0 : i64, scratch_operands = 0 : i64, tpu.core_type = #tpu.core_type<tc>, window_params = [{transform_indices = @transform_0, window_bounds = array<i64: 128, 16>}, {pipeline_mode = #tpu.pipeline_mode<synchronous>, transform_indices = @transform_1, window_bounds = array<i64: 16, 256>}, {transform_indices = @transform_2, window_bounds = array<i64: 128, 256>}]} {
    %c0 = arith.constant 0 : index
    %c0_0 = arith.constant 0 : index
    %0 = vector.load %arg1[%c0, %c0_0] : memref<128x16xbf16, #tpu.memory_space<vmem>>, vector<128x16xbf16>
    %c0_1 = arith.constant 0 : index
    %c0_2 = arith.constant 0 : index
    %1 = vector.load %arg2[%c0_1, %c0_2] : memref<16x256xbf16, #tpu.memory_space<vmem>>, vector<16x256xbf16>
    %cst = arith.constant dense<0.000000e+00> : vector<128x256xf32>
    %2 = tpu.matmul %0, %1, %cst {dimension_numbers = #tpu.dot_dimension_numbers<[1], [0], [0], [1], [0, 0, 1, 1], [], []>} : vector<128x16xbf16>, vector<16x256xbf16>, vector<128x256xf32> -> vector<128x256xf32>
    %c0_3 = arith.constant 0 : index
    %c0_4 = arith.constant 0 : index
    %3 = vector.load %arg3[%c0_3, %c0_4] : memref<128x256xf32, #tpu.memory_space<vmem>>, vector<128x256xf32>
    tpu.vector_store %arg3[%c0_3, %c0_4], %2 {strides = array<i32>} : memref<128x256xf32, #tpu.memory_space<vmem>>, vector<128x256xf32>,
    return
  }
  func.func @transform_0(%arg0: i32) -> (i32, i32) {
    %c0_i32 = arith.constant 0 : i32
    %c0_i32_0 = arith.constant 0 : i32
    return %arg0, %c0_i32 : i32, i32
  }
  func.func @transform_1(%arg0: i32) -> (i32, i32) {
    %c0_i32 = arith.constant 0 : i32
    %c0_i32_0 = arith.constant 0 : i32
    %c0_i32_1 = arith.constant 0 : i32
    return %c0_i32, %c0_i32_0 : i32, i32
  }
  func.func @transform_2(%arg0: i32) -> (i32, i32) {
    %c0_i32 = arith.constant 0 : i32
    %c0_i32_0 = arith.constant 0 : i32
    return %arg0, %c0_i32 : i32, i32
  }
}

module attributes {stable_mosaic.version = 11 : i64} {
  func.func @_stats_kernel(%arg0: i32, %arg1: memref<512x16xf32, #tpu.memory_space<vmem>>, %arg2: memref<1x16xf32, #tpu.memory_space<vmem>>, %arg3: memref<1x16xf32, #tpu.memory_space<vmem>>) attributes {dimension_semantics = [#tpu.dimension_semantics<arbitrary>], iteration_bounds = array<i64: 1>, scalar_prefetch = 0 : i64, scratch_operands = 0 : i64, tpu.core_type = #tpu.core_type<tc>, window_params = [{transform_indices = @transform_0, window_bounds = array<i64: 512, 16>}, {pipeline_mode = #tpu.pipeline_mode<synchronous>, transform_indices = @transform_1, window_bounds = array<i64: 1, 16>}, {pipeline_mode = #tpu.pipeline_mode<synchronous>, transform_indices = @transform_2, window_bounds = array<i64: 1, 16>}]} {
    %c0_i32 = arith.constant 0 : i32
    %0 = arith.cmpi eq, %arg0, %c0_i32 : i32
    %1 = arith.extui %0 : i1 to i32
    %c0_i32_0 = arith.constant 0 : i32
    %2 = arith.cmpi ne, %1, %c0_i32_0 : i32
    scf.if %2 {
      %cst_11 = arith.constant 0.000000e+00 : f32
      %15 = vector.broadcast %cst_11 : f32 to vector<1x16xf32>
      %c0_12 = arith.constant 0 : index
      %c0_13 = arith.constant 0 : index
      %16 = vector.load %arg2[%c0_12, %c0_13] : memref<1x16xf32, #tpu.memory_space<vmem>>, vector<1x16xf32>
      tpu.vector_store %arg2[%c0_12, %c0_13], %15 {strides = array<i32>} : memref<1x16xf32, #tpu.memory_space<vmem>>, vector<1x16xf32>,
      %cst_14 = arith.constant 0.000000e+00 : f32
      %17 = vector.broadcast %cst_14 : f32 to vector<1x16xf32>
      %c0_15 = arith.constant 0 : index
      %c0_16 = arith.constant 0 : index
      %18 = vector.load %arg3[%c0_15, %c0_16] : memref<1x16xf32, #tpu.memory_space<vmem>>, vector<1x16xf32>
      tpu.vector_store %arg3[%c0_15, %c0_16], %17 {strides = array<i32>} : memref<1x16xf32, #tpu.memory_space<vmem>>, vector<1x16xf32>,
    } else {
    }
    %c0 = arith.constant 0 : index
    %c0_1 = arith.constant 0 : index
    %3 = vector.load %arg1[%c0, %c0_1] : memref<512x16xf32, #tpu.memory_space<vmem>>, vector<512x16xf32>
    %c0_2 = arith.constant 0 : index
    %c0_3 = arith.constant 0 : index
    %4 = vector.load %arg2[%c0_2, %c0_3] : memref<1x16xf32, #tpu.memory_space<vmem>>, vector<1x16xf32>
    %cst = arith.constant dense<0.000000e+00> : vector<16xf32>
    %5 = vector.multi_reduction <add>, %3, %cst [0] : vector<512x16xf32> to vector<16xf32>
    %6 = vector.shape_cast %5 : vector<16xf32> to vector<1x16xf32>
    %7 = arith.addf %4, %6 : vector<1x16xf32>
    %c0_4 = arith.constant 0 : index
    %c0_5 = arith.constant 0 : index
    %8 = vector.load %arg2[%c0_4, %c0_5] : memref<1x16xf32, #tpu.memory_space<vmem>>, vector<1x16xf32>
    tpu.vector_store %arg2[%c0_4, %c0_5], %7 {strides = array<i32>} : memref<1x16xf32, #tpu.memory_space<vmem>>, vector<1x16xf32>,
    %c0_6 = arith.constant 0 : index
    %c0_7 = arith.constant 0 : index
    %9 = vector.load %arg3[%c0_6, %c0_7] : memref<1x16xf32, #tpu.memory_space<vmem>>, vector<1x16xf32>
    %10 = arith.mulf %3, %3 : vector<512x16xf32>
    %cst_8 = arith.constant dense<0.000000e+00> : vector<16xf32>
    %11 = vector.multi_reduction <add>, %10, %cst_8 [0] : vector<512x16xf32> to vector<16xf32>
    %12 = vector.shape_cast %11 : vector<16xf32> to vector<1x16xf32>
    %13 = arith.addf %9, %12 : vector<1x16xf32>
    %c0_9 = arith.constant 0 : index
    %c0_10 = arith.constant 0 : index
    %14 = vector.load %arg3[%c0_9, %c0_10] : memref<1x16xf32, #tpu.memory_space<vmem>>, vector<1x16xf32>
    tpu.vector_store %arg3[%c0_9, %c0_10], %13 {strides = array<i32>} : memref<1x16xf32, #tpu.memory_space<vmem>>, vector<1x16xf32>,
    return
  }
  func.func @transform_0(%arg0: i32) -> (i32, i32) {
    %c0_i32 = arith.constant 0 : i32
    %c0_i32_0 = arith.constant 0 : i32
    return %arg0, %c0_i32 : i32, i32
  }
  func.func @transform_1(%arg0: i32) -> (i32, i32) {
    %c0_i32 = arith.constant 0 : i32
    %c0_i32_0 = arith.constant 0 : i32
    %c0_i32_1 = arith.constant 0 : i32
    return %c0_i32, %c0_i32_0 : i32, i32
  }
  func.func @transform_2(%arg0: i32) -> (i32, i32) {
    %c0_i32 = arith.constant 0 : i32
    %c0_i32_0 = arith.constant 0 : i32
    %c0_i32_1 = arith.constant 0 : i32
    return %c0_i32, %c0_i32_0 : i32, i32
  }
}

module attributes {stable_mosaic.version = 11 : i64} {
  func.func @_scale_shift_act_kernel(%arg0: i32, %arg1: memref<512x16xf32, #tpu.memory_space<vmem>>, %arg2: memref<1x16xf32, #tpu.memory_space<vmem>>, %arg3: memref<1x16xf32, #tpu.memory_space<vmem>>, %arg4: memref<512x16xbf16, #tpu.memory_space<vmem>>) attributes {dimension_semantics = [#tpu.dimension_semantics<parallel>], iteration_bounds = array<i64: 1>, scalar_prefetch = 0 : i64, scratch_operands = 0 : i64, tpu.core_type = #tpu.core_type<tc>, window_params = [{transform_indices = @transform_0, window_bounds = array<i64: 512, 16>}, {pipeline_mode = #tpu.pipeline_mode<synchronous>, transform_indices = @transform_1, window_bounds = array<i64: 1, 16>}, {pipeline_mode = #tpu.pipeline_mode<synchronous>, transform_indices = @transform_2, window_bounds = array<i64: 1, 16>}, {transform_indices = @transform_3, window_bounds = array<i64: 512, 16>}]} {
    %c0 = arith.constant 0 : index
    %c0_0 = arith.constant 0 : index
    %0 = vector.load %arg1[%c0, %c0_0] : memref<512x16xf32, #tpu.memory_space<vmem>>, vector<512x16xf32>
    %c0_1 = arith.constant 0 : index
    %c0_2 = arith.constant 0 : index
    %1 = vector.load %arg2[%c0_1, %c0_2] : memref<1x16xf32, #tpu.memory_space<vmem>>, vector<1x16xf32>
    %2 = vector.broadcast %1 : vector<1x16xf32> to vector<512x16xf32>
    %3 = arith.mulf %0, %2 : vector<512x16xf32>
    %c0_3 = arith.constant 0 : index
    %c0_4 = arith.constant 0 : index
    %4 = vector.load %arg3[%c0_3, %c0_4] : memref<1x16xf32, #tpu.memory_space<vmem>>, vector<1x16xf32>
    %5 = vector.broadcast %4 : vector<1x16xf32> to vector<512x16xf32>
    %6 = arith.addf %3, %5 : vector<512x16xf32>
    %cst = arith.constant 0.000000e+00 : f32
    %7 = vector.broadcast %cst : f32 to vector<512x16xf32>
    %8 = arith.cmpf oge, %6, %7 : vector<512x16xf32>
    %cst_5 = arith.constant 2.000000e-01 : f32
    %9 = vector.broadcast %cst_5 : f32 to vector<512x16xf32>
    %10 = arith.mulf %9, %6 : vector<512x16xf32>
    %11 = arith.select %8, %6, %10 : vector<512x16xi1>, vector<512x16xf32>
    %12 = arith.truncf %11 : vector<512x16xf32> to vector<512x16xbf16>
    %c0_6 = arith.constant 0 : index
    %c0_7 = arith.constant 0 : index
    %13 = vector.load %arg4[%c0_6, %c0_7] : memref<512x16xbf16, #tpu.memory_space<vmem>>, vector<512x16xbf16>
    tpu.vector_store %arg4[%c0_6, %c0_7], %12 {strides = array<i32>} : memref<512x16xbf16, #tpu.memory_space<vmem>>, vector<512x16xbf16>,
    return
  }
  func.func @transform_0(%arg0: i32) -> (i32, i32) {
    %c0_i32 = arith.constant 0 : i32
    %c0_i32_0 = arith.constant 0 : i32
    return %arg0, %c0_i32 : i32, i32
  }
  func.func @transform_1(%arg0: i32) -> (i32, i32) {
    %c0_i32 = arith.constant 0 : i32
    %c0_i32_0 = arith.constant 0 : i32
    %c0_i32_1 = arith.constant 0 : i32
    return %c0_i32, %c0_i32_0 : i32, i32
  }
  func.func @transform_2(%arg0: i32) -> (i32, i32) {
    %c0_i32 = arith.constant 0 : i32
    %c0_i32_0 = arith.constant 0 : i32
    %c0_i32_1 = arith.constant 0 : i32
    return %c0_i32, %c0_i32_0 : i32, i32
  }
  func.func @transform_3(%arg0: i32) -> (i32, i32) {
    %c0_i32 = arith.constant 0 : i32
    %c0_i32_0 = arith.constant 0 : i32
    return %arg0, %c0_i32 : i32, i32
  }
}

module attributes {stable_mosaic.version = 11 : i64} {
  func.func @_matmul_kernel(%arg0: i32, %arg1: memref<512x16xbf16, #tpu.memory_space<vmem>>, %arg2: memref<16x48xbf16, #tpu.memory_space<vmem>>, %arg3: memref<512x48xf32, #tpu.memory_space<vmem>>) attributes {dimension_semantics = [#tpu.dimension_semantics<parallel>], iteration_bounds = array<i64: 1>, scalar_prefetch = 0 : i64, scratch_operands = 0 : i64, tpu.core_type = #tpu.core_type<tc>, window_params = [{transform_indices = @transform_0, window_bounds = array<i64: 512, 16>}, {pipeline_mode = #tpu.pipeline_mode<synchronous>, transform_indices = @transform_1, window_bounds = array<i64: 16, 48>}, {transform_indices = @transform_2, window_bounds = array<i64: 512, 48>}]} {
    %c0 = arith.constant 0 : index
    %c0_0 = arith.constant 0 : index
    %0 = vector.load %arg1[%c0, %c0_0] : memref<512x16xbf16, #tpu.memory_space<vmem>>, vector<512x16xbf16>
    %c0_1 = arith.constant 0 : index
    %c0_2 = arith.constant 0 : index
    %1 = vector.load %arg2[%c0_1, %c0_2] : memref<16x48xbf16, #tpu.memory_space<vmem>>, vector<16x48xbf16>
    %cst = arith.constant dense<0.000000e+00> : vector<512x48xf32>
    %2 = tpu.matmul %0, %1, %cst {dimension_numbers = #tpu.dot_dimension_numbers<[1], [0], [0], [1], [0, 0, 1, 1], [], []>} : vector<512x16xbf16>, vector<16x48xbf16>, vector<512x48xf32> -> vector<512x48xf32>
    %c0_3 = arith.constant 0 : index
    %c0_4 = arith.constant 0 : index
    %3 = vector.load %arg3[%c0_3, %c0_4] : memref<512x48xf32, #tpu.memory_space<vmem>>, vector<512x48xf32>
    tpu.vector_store %arg3[%c0_3, %c0_4], %2 {strides = array<i32>} : memref<512x48xf32, #tpu.memory_space<vmem>>, vector<512x48xf32>,
    return
  }
  func.func @transform_0(%arg0: i32) -> (i32, i32) {
    %c0_i32 = arith.constant 0 : i32
    %c0_i32_0 = arith.constant 0 : i32
    return %arg0, %c0_i32 : i32, i32
  }
  func.func @transform_1(%arg0: i32) -> (i32, i32) {
    %c0_i32 = arith.constant 0 : i32
    %c0_i32_0 = arith.constant 0 : i32
    %c0_i32_1 = arith.constant 0 : i32
    return %c0_i32, %c0_i32_0 : i32, i32
  }
  func.func @transform_2(%arg0: i32) -> (i32, i32) {
    %c0_i32 = arith.constant 0 : i32
    %c0_i32_0 = arith.constant 0 : i32
    return %arg0, %c0_i32 : i32, i32
  }
}

module attributes {stable_mosaic.version = 11 : i64} {
  func.func @_scale_shift_act_kernel(%arg0: i32, %arg1: memref<512x3xf32, #tpu.memory_space<vmem>>, %arg2: memref<1x3xf32, #tpu.memory_space<vmem>>, %arg3: memref<1x3xf32, #tpu.memory_space<vmem>>, %arg4: memref<512x3xf32, #tpu.memory_space<vmem>>) attributes {dimension_semantics = [#tpu.dimension_semantics<parallel>], iteration_bounds = array<i64: 4>, scalar_prefetch = 0 : i64, scratch_operands = 0 : i64, tpu.core_type = #tpu.core_type<tc>, window_params = [{transform_indices = @transform_0, window_bounds = array<i64: 512, 3>}, {pipeline_mode = #tpu.pipeline_mode<synchronous>, transform_indices = @transform_1, window_bounds = array<i64: 1, 3>}, {pipeline_mode = #tpu.pipeline_mode<synchronous>, transform_indices = @transform_2, window_bounds = array<i64: 1, 3>}, {transform_indices = @transform_3, window_bounds = array<i64: 512, 3>}]} {
    %c0 = arith.constant 0 : index
    %c0_0 = arith.constant 0 : index
    %0 = vector.load %arg1[%c0, %c0_0] : memref<512x3xf32, #tpu.memory_space<vmem>>, vector<512x3xf32>
    %c0_1 = arith.constant 0 : index
    %c0_2 = arith.constant 0 : index
    %1 = vector.load %arg2[%c0_1, %c0_2] : memref<1x3xf32, #tpu.memory_space<vmem>>, vector<1x3xf32>
    %2 = vector.broadcast %1 : vector<1x3xf32> to vector<512x3xf32>
    %3 = arith.mulf %0, %2 : vector<512x3xf32>
    %c0_3 = arith.constant 0 : index
    %c0_4 = arith.constant 0 : index
    %4 = vector.load %arg3[%c0_3, %c0_4] : memref<1x3xf32, #tpu.memory_space<vmem>>, vector<1x3xf32>
    %5 = vector.broadcast %4 : vector<1x3xf32> to vector<512x3xf32>
    %6 = arith.addf %3, %5 : vector<512x3xf32>
    %cst = arith.constant 0.000000e+00 : f32
    %7 = vector.broadcast %cst : f32 to vector<512x3xf32>
    %8 = arith.subf %7, %6 : vector<512x3xf32>
    %9 = math.exp %8 : vector<512x3xf32>
    %cst_5 = arith.constant 1.000000e+00 : f32
    %10 = vector.broadcast %cst_5 : f32 to vector<512x3xf32>
    %11 = arith.addf %10, %9 : vector<512x3xf32>
    %12 = tpu.reciprocal %11 {approx = true} : vector<512x3xf32> -> vector<512x3xf32>
    %c0_6 = arith.constant 0 : index
    %c0_7 = arith.constant 0 : index
    %13 = vector.load %arg4[%c0_6, %c0_7] : memref<512x3xf32, #tpu.memory_space<vmem>>, vector<512x3xf32>
    tpu.vector_store %arg4[%c0_6, %c0_7], %12 {strides = array<i32>} : memref<512x3xf32, #tpu.memory_space<vmem>>, vector<512x3xf32>,
    return
  }
  func.func @transform_0(%arg0: i32) -> (i32, i32) {
    %c0_i32 = arith.constant 0 : i32
    %c0_i32_0 = arith.constant 0 : i32
    return %arg0, %c0_i32 : i32, i32
  }
  func.func @transform_1(%arg0: i32) -> (i32, i32) {
    %c0_i32 = arith.constant 0 : i32
    %c0_i32_0 = arith.constant 0 : i32
    %c0_i32_1 = arith.constant 0 : i32
    return %c0_i32, %c0_i32_0 : i32, i32
  }
  func.func @transform_2(%arg0: i32) -> (i32, i32) {
    %c0_i32 = arith.constant 0 : i32
    %c0_i32_0 = arith.constant 0 : i32
    %c0_i32_1 = arith.constant 0 : i32
    return %c0_i32, %c0_i32_0 : i32, i32
  }
  func.func @transform_3(%arg0: i32) -> (i32, i32) {
    %c0_i32 = arith.constant 0 : i32
    %c0_i32_0 = arith.constant 0 : i32
    return %arg0, %c0_i32 : i32, i32
  }
}

</mosaic_0001>

<llo_original>
// kernel: _lambda_.12
$region0: #{_lambda_.12}
  #allocation0 [shape = 'u32[]', space=smem, size = 0x4, offset = 0x4, fixed_abs, tag = 'smem constant byte address 0x4 - core index']
  #allocation1 [shape = 'u32[144,128]{1,0:T(1,128)}', space=vmem, size = 0x12000, scoped, tag = 'internal scratch']
  %s0 = inlined_call_operand.vmem [shape: bf16[16,32], index: 0, kind: input, shape index: {}]
  %s1 = inlined_call_operand.vmem [shape: bf16[32,64], index: 1, kind: input, shape index: {}]
  %s2 = inlined_call_operand.vmem [shape: f32[1,64], index: 2, kind: input, shape index: {}]
  %s3 = inlined_call_operand.vmem [shape: bf16[16,64], index: 3, kind: output, shape index: {}]
  %s4 = sld [smem:[#allocation0]]
  $region22: #{_lambda_.12} parent=0
    _
  %s6 = ssub.s32 1, %s4
  %s7 = scalar_select 0, %s6, %s4
  // Predicated region
  $region2: #{_lambda_.12} parent=0 // pred_check
    _
  $region3: #{_lambda_.12} parent=0 // pred_check_branch
    %9 = sbr.rel (0) target = $region5
  $region4: #{_lambda_.12} parent=0 // pred_region
    _
  $region5: #{_lambda_.12} parent=0 // pred_fallthru
    _
  // Predicated region
  $region6: #{_lambda_.12} parent=0 // pred_check
    _
  $region7: #{_lambda_.12} parent=0 // pred_check_branch
    %11 = sbr.rel (0) target = $region9
  $region8: #{_lambda_.12} parent=0 // pred_region
    _
  $region9: #{_lambda_.12} parent=0 // pred_fallthru
    _
  // Predicated region
  $region10: #{_lambda_.12} parent=0 // pred_check
    _
  $region11: #{_lambda_.12} parent=0 // pred_check_branch
    %13 = sbr.rel (0) target = $region13
  $region12: #{_lambda_.12} parent=0 // pred_region
    _
  $region13: #{_lambda_.12} parent=0 // pred_fallthru
    _
  %v15 = vld [vmem:[%s0] sm:$0xf]
  %v16 = vld [vmem:[%s0 + $0x4] sm:$0xf]
  %v17 = vld [vmem:[%s1] sm:$0xf]
  %v18 = vld [vmem:[%s1 + $0x4] sm:$0xf]
  %v19 = vld [vmem:[%s1 + $0x8] sm:$0xf]
  %v20 = vld [vmem:[%s1 + $0xc] sm:$0xf]
  %v21 = vld [vmem:[%s2] sm:$0x1]
  %v23 = vlaneseq
  %v24 = vshrl.u32 %v23, 7
  %v25 = vsub.s32 0, %v24
  %v26 = vrot.slane %v21, %v25
  %v30 = vunpack.c.l.b16 %v15
  %v31 = vunpack.c.l.b16 %v16
  %v32 = vpack.c.b16 %v31, %v30
  %v37 = vunpack.c.l.b16 %v17
  %v38 = vunpack.c.l.b16 %v18
  %v39 = vunpack.c.l.b16 %v19
  %v40 = vunpack.c.l.b16 %v20
  %v41 = vpack.c.b16 %v38, %v37
  %v42 = vpack.c.b16 %v40, %v39
  %vm45 = vcmask 261120
  %v47 = vsel %vm45, %v32, 0
  %49 = vmatprep.subr.bf16.mxu0 0
  %50 = vmatpush1.bf16.msra.mxu0 0
  %51 = vmatprep.subr.bf16.mxu0 0
  %52 = vmatpush1.bf16.msra.mxu0 0
  %53 = vmatprep.subr.bf16.mxu0 0
  %54 = vmatpush1.bf16.msra.mxu0 0
  %55 = vmatprep.subr.bf16.mxu0 0
  %56 = vmatpush1.bf16.msra.mxu0 0
  %57 = vmatprep.subr.bf16.mxu0 0
  %58 = vmatpush1.bf16.msra.mxu0 0
  %59 = vmatprep.subr.bf16.mxu0 0
  %60 = vmatpush1.bf16.msra.mxu0 0
  %61 = vmatprep.subr.bf16.mxu0 0
  %62 = vmatpush1.bf16.msra.mxu0 %v42
  %63 = vmatprep.subr.bf16.mxu0 0
  %64 = vmatpush1.bf16.msra.mxu0 %v41
  %65 = vmatprep.subr.bf16.mxu0 0
  %66 = vmatpush2.bf16.msra.mxu0 0
  %67 = vmatprep.subr.bf16.mxu0 0
  %68 = vmatpush2.bf16.msra.mxu0 0
  %69 = vmatprep.subr.bf16.mxu0 0
  %70 = vmatpush2.bf16.msra.mxu0 0
  %71 = vmatprep.subr.bf16.mxu0 0
  %72 = vmatpush2.bf16.msra.mxu0 0
  %73 = vmatprep.subr.bf16.mxu0 0
  %74 = vmatpush2.bf16.msra.mxu0 0
  %75 = vmatprep.subr.bf16.mxu0 0
  %76 = vmatpush2.bf16.msra.mxu0 0
  %77 = vmatprep.subr.bf16.mxu0 0
  %78 = vmatpush2.bf16.msra.mxu0 0
  %79 = vmatprep.subr.bf16.mxu0 0
  %80 = vmatpush2.bf16.msra.mxu0 0
  %81 = vmatprep.mubr.bf16.mxu0 0
  %82 = vmatmul.mubr.bf16.gmra.mxu0 %v47
  %v83 = vpop.f32.mrf.mxu0
  %v84 = vadd.f32 %v26, %v83
  %v85 = vpop.f32.mrf.mxu0
  %v86 = vpop.f32.mrf.mxu0
  %v87 = vadd.f32 %v26, %v86
  %v88 = vpop.f32.mrf.mxu0
  %89 = vdwg.mxu0
  %v90 = vpack.c.bf16 %v87, %v84
  %v92 = vunpack.c.l.b16 %v90
  %v93 = vunpack.c.h.b16 %v90
  %v94 = vpack.c.b16 %v92, %v92
  %v95 = vpack.c.b16 %v93, %v93
  %vm98 = vcmask 519168
  %99 = vst.msk [vmem:[%s3] sm:$0xf] %vm98, %v94
  %100 = vst.msk [vmem:[%s3 + $0x4] sm:$0xf] %vm98, %v95
  // Predicated region
  $region14: #{_lambda_.12} parent=0 // pred_check
    _
  $region15: #{_lambda_.12} parent=0 // pred_check_branch
    %102 = sbr.rel (0) target = $region17
  $region16: #{_lambda_.12} parent=0 // pred_region
    _
  $region17: #{_lambda_.12} parent=0 // pred_fallthru
    _
  // Predicated region
  $region18: #{_lambda_.12} parent=0 // pred_check
    _
  $region19: #{_lambda_.12} parent=0 // pred_check_branch
    %104 = sbr.rel (0) target = $region21
  $region20: #{_lambda_.12} parent=0 // pred_region
    _
  $region21: #{_lambda_.12} parent=0 // pred_fallthru
    _

// kernel: _lambda_.13
$region0: #{_lambda_.13}
  #allocation0 [shape = 'u32[]', space=smem, size = 0x4, offset = 0x4, fixed_abs, tag = 'smem constant byte address 0x4 - core index']
  #allocation1 [shape = 'u32[144,128]{1,0:T(1,128)}', space=vmem, size = 0x12000, scoped, tag = 'internal scratch']
  %s0 = inlined_call_operand.vmem [shape: bf16[16,16], index: 0, kind: input, shape index: {}]
  %s1 = inlined_call_operand.vmem [shape: bf16[16,256], index: 1, kind: input, shape index: {}]
  %s2 = inlined_call_operand.vmem [shape: f32[16,256], index: 2, kind: output, shape index: {}]
  %s3 = sld [smem:[#allocation0]]
  $region18: #{_lambda_.13} parent=0
    _
  %s5 = ssub.s32 1, %s3
  %s6 = scalar_select 0, %s5, %s3
  // Predicated region
  $region2: #{_lambda_.13} parent=0 // pred_check
    _
  $region3: #{_lambda_.13} parent=0 // pred_check_branch
    %8 = sbr.rel (0) target = $region5
  $region4: #{_lambda_.13} parent=0 // pred_region
    _
  $region5: #{_lambda_.13} parent=0 // pred_fallthru
    _
  // Predicated region
  $region6: #{_lambda_.13} parent=0 // pred_check
    _
  $region7: #{_lambda_.13} parent=0 // pred_check_branch
    %10 = sbr.rel (0) target = $region9
  $region8: #{_lambda_.13} parent=0 // pred_region
    _
  $region9: #{_lambda_.13} parent=0 // pred_fallthru
    _
  %v12 = vld [vmem:[%s0] sm:$0xf]
  %v13 = vld [vmem:[%s0 + $0x4] sm:$0xf]
  %v14 = vld [vmem:[%s1] sm:$0xff]
  %v15 = vld [vmem:[%s1 + $0x8] sm:$0xff]
  %v18 = vunpack.c.l.b16 %v12
  %v19 = vunpack.c.l.b16 %v13
  %v20 = vpack.c.b16 %v19, %v18
  %v23 = vunpack.c.l.b16 %v14
  %v24 = vunpack.c.h.b16 %v14
  %v25 = vunpack.c.l.b16 %v15
  %v26 = vunpack.c.h.b16 %v15
  %v27 = vpack.c.b16 %v25, %v23
  %v28 = vpack.c.b16 %v26, %v24
  %vm31 = vcmask 130048
  %v33 = vsel %vm31, %v20, 0
  %35 = vmatprep.subr.bf16.mxu0 0
  %36 = vmatpush1.bf16.msra.mxu0 0
  %37 = vmatprep.subr.bf16.mxu0 0
  %38 = vmatpush1.bf16.msra.mxu0 0
  %39 = vmatprep.subr.bf16.mxu0 0
  %40 = vmatpush1.bf16.msra.mxu0 0
  %41 = vmatprep.subr.bf16.mxu0 0
  %42 = vmatpush1.bf16.msra.mxu0 0
  %43 = vmatprep.subr.bf16.mxu0 0
  %44 = vmatpush1.bf16.msra.mxu0 0
  %45 = vmatprep.subr.bf16.mxu0 0
  %46 = vmatpush1.bf16.msra.mxu0 0
  %47 = vmatprep.subr.bf16.mxu0 0
  %48 = vmatpush1.bf16.msra.mxu0 0
  %49 = vmatprep.subr.bf16.mxu0 %v28
  %50 = vmatpush1.bf16.msra.mxu0 %v27
  %51 = vmatprep.subr.bf16.mxu0 0
  %52 = vmatpush2.bf16.msra.mxu0 0
  %53 = vmatprep.subr.bf16.mxu0 0
  %54 = vmatpush2.bf16.msra.mxu0 0
  %55 = vmatprep.subr.bf16.mxu0 0
  %56 = vmatpush2.bf16.msra.mxu0 0
  %57 = vmatprep.subr.bf16.mxu0 0
  %58 = vmatpush2.bf16.msra.mxu0 0
  %59 = vmatprep.subr.bf16.mxu0 0
  %60 = vmatpush2.bf16.msra.mxu0 0
  %61 = vmatprep.subr.bf16.mxu0 0
  %62 = vmatpush2.bf16.msra.mxu0 0
  %63 = vmatprep.subr.bf16.mxu0 0
  %64 = vmatpush2.bf16.msra.mxu0 0
  %65 = vmatprep.subr.bf16.mxu0 0
  %66 = vmatpush2.bf16.msra.mxu0 0
  %67 = vmatprep.mubr.bf16.mxu0 0
  %68 = vmatmul.mubr.bf16.gmra.mxu0 %v33
  %v69 = vpop.f32.mrf.mxu0
  %v70 = vadd.f32 0.0, %v69
  %v71 = vpop.f32.mrf.mxu0
  %v72 = vadd.f32 0.0, %v71
  %v73 = vpop.f32.mrf.mxu0
  %v74 = vadd.f32 0.0, %v73
  %v75 = vpop.f32.mrf.mxu0
  %v76 = vadd.f32 0.0, %v75
  %77 = vdwg.mxu0
  %78 = vst [vmem:[%s2] sm:$0xff] %v70
  %79 = vst [vmem:[%s2 + $0x8] sm:$0xff] %v72
  %80 = vst [vmem:[%s2 + $0x10] sm:$0xff] %v74
  %81 = vst [vmem:[%s2 + $0x18] sm:$0xff] %v76
  // Predicated region
  $region10: #{_lambda_.13} parent=0 // pred_check
    _
  $region11: #{_lambda_.13} parent=0 // pred_check_branch
    %83 = sbr.rel (0) target = $region13
  $region12: #{_lambda_.13} parent=0 // pred_region
    _
  $region13: #{_lambda_.13} parent=0 // pred_fallthru
    _
  // Predicated region
  $region14: #{_lambda_.13} parent=0 // pred_check
    _
  $region15: #{_lambda_.13} parent=0 // pred_check_branch
    %85 = sbr.rel (0) target = $region17
  $region16: #{_lambda_.13} parent=0 // pred_region
    _
  $region17: #{_lambda_.13} parent=0 // pred_fallthru
    _

// kernel: _lambda_.14
$region0: #{_lambda_.14}
  #allocation0 [shape = 'u32[]', space=smem, size = 0x4, offset = 0x4, fixed_abs, tag = 'smem constant byte address 0x4 - core index']
  #allocation1 [shape = 'u32[144,128]{1,0:T(1,128)}', space=vmem, size = 0x12000, scoped, tag = 'internal scratch']
  %s0 = inlined_call_operand.vmem [shape: f32[32,16], index: 0, kind: input, shape index: {}]
  %s1 = inlined_call_operand.vmem [shape: f32[1,16], index: 1, kind: output, shape index: {0}]
  %s2 = inlined_call_operand.vmem [shape: f32[1,16], index: 2, kind: output, shape index: {1}]
  %3 = xla_tuple %s1, %s2
  %s4 = sld [smem:[#allocation0]]
  $region26: #{_lambda_.14} parent=0
    _
  %s6 = ssub.s32 1, %s4
  %s7 = scalar_select 0, %s6, %s4
  // Predicated region
  $region2: #{_lambda_.14} parent=0 // pred_check
    _
  $region3: #{_lambda_.14} parent=0 // pred_check_branch
    %9 = sbr.rel (0) target = $region5
  $region4: #{_lambda_.14} parent=0 // pred_region
    _
  $region5: #{_lambda_.14} parent=0 // pred_fallthru
    _
  %p10 = scmp.eq.s32.totalorder 0, 0
  // Predicated region
  $region6: #{_lambda_.14} parent=0 // pred_check
    %p11 = pneg %p10
  $region7: #{_lambda_.14} parent=0 // pred_check_branch
    %13 = sbr.rel (%p11) target = $region9
  $region8: #{_lambda_.14} parent=0 // pred_region
    %vm14 = vcmask 122880
    %15 = vst.msk [vmem:[%s1] sm:$0x1] %vm14, 0.0
    %16 = vst.msk [vmem:[%s2] sm:$0x1] %vm14, 0.0
  $region9: #{_lambda_.14} parent=0 // pred_fallthru
    _
  %v17 = vld [vmem:[%s0] sm:$0xff]
  %v18 = vld [vmem:[%s0 + $0x8] sm:$0xff]
  %v19 = vld [vmem:[%s0 + $0x10] sm:$0xff]
  %v20 = vld [vmem:[%s0 + $0x18] sm:$0xff]
  %v21 = vld [vmem:[%s1] sm:$0x1]
  %vm22 = vcmask 130048
  %v23 = vsel %vm22, %v17, 0.0
  %v24 = vsel %vm22, %v18, 0.0
  %v25 = vadd.f32 %v23, %v24
  %v26 = vsel %vm22, %v19, 0.0
  %v27 = vadd.f32 %v25, %v26
  %v28 = vsel %vm22, %v20, 0.0
  %v29 = vadd.f32 %v27, %v28
  %v30 = vrot.slane %v29, 4
  %v31 = vadd.f32 %v29, %v30
  %v32 = vrot.slane %v31, 2
  %v33 = vadd.f32 %v31, %v32
  %v34 = vrot.slane %v33, 1
  %v35 = vadd.f32 %v33, %v34
  %v36 = vadd.f32 %v21, %v35
  %vm37 = vcmask 122880
  %38 = vst.msk [vmem:[%s1] sm:$0x1] %vm37, %v36
  %v39 = vld [vmem:[%s2] sm:$0x1]
  %v40 = vmul.f32 %v17, %v17
  %v41 = vmul.f32 %v18, %v18
  %v42 = vmul.f32 %v19, %v19
  %v43 = vmul.f32 %v20, %v20
  %v44 = vsel %vm22, %v40, 0.0
  %v45 = vsel %vm22, %v41, 0.0
  %v46 = vadd.f32 %v44, %v45
  %v47 = vsel %vm22, %v42, 0.0
  %v48 = vadd.f32 %v46, %v47
  %v49 = vsel %vm22, %v43, 0.0
  %v50 = vadd.f32 %v48, %v49
  %v51 = vrot.slane %v50, 4
  %v52 = vadd.f32 %v50, %v51
  %v53 = vrot.slane %v52, 2
  %v54 = vadd.f32 %v52, %v53
  %v55 = vrot.slane %v54, 1
  %v56 = vadd.f32 %v54, %v55
  %v57 = vadd.f32 %v39, %v56
  %58 = vst.msk [vmem:[%s2] sm:$0x1] %vm37, %v57
  // Predicated region
  $region10: #{_lambda_.14} parent=0 // pred_check
    _
  $region11: #{_lambda_.14} parent=0 // pred_check_branch
    %60 = sbr.rel (0) target = $region13
  $region12: #{_lambda_.14} parent=0 // pred_region
    _
  $region13: #{_lambda_.14} parent=0 // pred_fallthru
    _
  // Predicated region
  $region14: #{_lambda_.14} parent=0 // pred_check
    _
  $region15: #{_lambda_.14} parent=0 // pred_check_branch
    %62 = sbr.rel (0) target = $region17
  $region16: #{_lambda_.14} parent=0 // pred_region
    _
  $region17: #{_lambda_.14} parent=0 // pred_fallthru
    _
  // Predicated region
  $region18: #{_lambda_.14} parent=0 // pred_check
    _
  $region19: #{_lambda_.14} parent=0 // pred_check_branch
    %64 = sbr.rel (0) target = $region21
  $region20: #{_lambda_.14} parent=0 // pred_region
    _
  $region21: #{_lambda_.14} parent=0 // pred_fallthru
    _
  // Predicated region
  $region22: #{_lambda_.14} parent=0 // pred_check
    _
  $region23: #{_lambda_.14} parent=0 // pred_check_branch
    %66 = sbr.rel (0) target = $region25
  $region24: #{_lambda_.14} parent=0 // pred_region
    _
  $region25: #{_lambda_.14} parent=0 // pred_fallthru
    _

// kernel: _lambda_.16
$region0: #{_lambda_.16}
  #allocation0 [shape = 'u32[]', space=smem, size = 0x4, offset = 0x4, fixed_abs, tag = 'smem constant byte address 0x4 - core index']
  #allocation1 [shape = 'u32[144,128]{1,0:T(1,128)}', space=vmem, size = 0x12000, scoped, tag = 'internal scratch']
  %s0 = inlined_call_operand.vmem [shape: bf16[32,16], index: 0, kind: input, shape index: {}]
  %s1 = inlined_call_operand.vmem [shape: bf16[16,256], index: 1, kind: input, shape index: {}]
  %s2 = inlined_call_operand.vmem [shape: f32[32,256], index: 2, kind: output, shape index: {}]
  %s3 = sld [smem:[#allocation0]]
  $region18: #{_lambda_.16} parent=0
    _
  %s5 = ssub.s32 1, %s3
  %s6 = scalar_select 0, %s5, %s3
  // Predicated region
  $region2: #{_lambda_.16} parent=0 // pred_check
    _
  $region3: #{_lambda_.16} parent=0 // pred_check_branch
    %8 = sbr.rel (0) target = $region5
  $region4: #{_lambda_.16} parent=0 // pred_region
    _
  $region5: #{_lambda_.16} parent=0 // pred_fallthru
    _
  // Predicated region
  $region6: #{_lambda_.16} parent=0 // pred_check
    _
  $region7: #{_lambda_.16} parent=0 // pred_check_branch
    %10 = sbr.rel (0) target = $region9
  $region8: #{_lambda_.16} parent=0 // pred_region
    _
  $region9: #{_lambda_.16} parent=0 // pred_fallthru
    _
  %v12 = vld [vmem:[%s0] sm:$0xf]
  %v13 = vld [vmem:[%s0 + $0x4] sm:$0xf]
  %v14 = vld [vmem:[%s0 + $0x8] sm:$0xf]
  %v15 = vld [vmem:[%s0 + $0xc] sm:$0xf]
  %v16 = vld [vmem:[%s1] sm:$0xff]
  %v17 = vld [vmem:[%s1 + $0x8] sm:$0xff]
  %v22 = vunpack.c.l.b16 %v12
  %v23 = vunpack.c.l.b16 %v13
  %v24 = vunpack.c.l.b16 %v14
  %v25 = vunpack.c.l.b16 %v15
  %v26 = vpack.c.b16 %v23, %v22
  %v27 = vpack.c.b16 %v25, %v24
  %v30 = vunpack.c.l.b16 %v16
  %v31 = vunpack.c.h.b16 %v16
  %v32 = vunpack.c.l.b16 %v17
  %v33 = vunpack.c.h.b16 %v17
  %v34 = vpack.c.b16 %v32, %v30
  %v35 = vpack.c.b16 %v33, %v31
  %vm38 = vcmask 130048
  %v40 = vsel %vm38, %v26, 0
  %v43 = vsel %vm38, %v27, 0
  %45 = vmatprep.subr.bf16.mxu0 0
  %46 = vmatpush1.bf16.msra.mxu0 0
  %47 = vmatprep.subr.bf16.mxu0 0
  %48 = vmatpush1.bf16.msra.mxu0 0
  %49 = vmatprep.subr.bf16.mxu0 0
  %50 = vmatpush1.bf16.msra.mxu0 0
  %51 = vmatprep.subr.bf16.mxu0 0
  %52 = vmatpush1.bf16.msra.mxu0 0
  %53 = vmatprep.subr.bf16.mxu0 0
  %54 = vmatpush1.bf16.msra.mxu0 0
  %55 = vmatprep.subr.bf16.mxu0 0
  %56 = vmatpush1.bf16.msra.mxu0 0
  %57 = vmatprep.subr.bf16.mxu0 0
  %58 = vmatpush1.bf16.msra.mxu0 0
  %59 = vmatprep.subr.bf16.mxu0 %v35
  %60 = vmatpush1.bf16.msra.mxu0 %v34
  %61 = vmatprep.subr.bf16.mxu0 0
  %62 = vmatpush2.bf16.msra.mxu0 0
  %63 = vmatprep.subr.bf16.mxu0 0
  %64 = vmatpush2.bf16.msra.mxu0 0
  %65 = vmatprep.subr.bf16.mxu0 0
  %66 = vmatpush2.bf16.msra.mxu0 0
  %67 = vmatprep.subr.bf16.mxu0 0
  %68 = vmatpush2.bf16.msra.mxu0 0
  %69 = vmatprep.subr.bf16.mxu0 0
  %70 = vmatpush2.bf16.msra.mxu0 0
  %71 = vmatprep.subr.bf16.mxu0 0
  %72 = vmatpush2.bf16.msra.mxu0 0
  %73 = vmatprep.subr.bf16.mxu0 0
  %74 = vmatpush2.bf16.msra.mxu0 0
  %75 = vmatprep.subr.bf16.mxu0 0
  %76 = vmatpush2.bf16.msra.mxu0 0
  %77 = vmatprep.mubr.bf16.mxu0 0
  %78 = vmatmul.mubr.bf16.gmra.mxu0 %v40
  %v79 = vpop.f32.mrf.mxu0
  %v80 = vadd.f32 0.0, %v79
  %v81 = vpop.f32.mrf.mxu0
  %v82 = vadd.f32 0.0, %v81
  %v83 = vpop.f32.mrf.mxu0
  %v84 = vadd.f32 0.0, %v83
  %v85 = vpop.f32.mrf.mxu0
  %v86 = vadd.f32 0.0, %v85
  %87 = vmatprep.mubr.bf16.mxu0 0
  %88 = vmatmul.mubr.bf16.gmra.mxu0 %v43
  %v89 = vpop.f32.mrf.mxu0
  %v90 = vadd.f32 0.0, %v89
  %v91 = vpop.f32.mrf.mxu0
  %v92 = vadd.f32 0.0, %v91
  %v93 = vpop.f32.mrf.mxu0
  %v94 = vadd.f32 0.0, %v93
  %v95 = vpop.f32.mrf.mxu0
  %v96 = vadd.f32 0.0, %v95
  %97 = vdwg.mxu0
  %98 = vst [vmem:[%s2] sm:$0xff] %v80
  %99 = vst [vmem:[%s2 + $0x8] sm:$0xff] %v82
  %100 = vst [vmem:[%s2 + $0x10] sm:$0xff] %v84
  %101 = vst [vmem:[%s2 + $0x18] sm:$0xff] %v86
  %102 = vst [vmem:[%s2 + $0x20] sm:$0xff] %v90
  %103 = vst [vmem:[%s2 + $0x28] sm:$0xff] %v92
  %104 = vst [vmem:[%s2 + $0x30] sm:$0xff] %v94
  %105 = vst [vmem:[%s2 + $0x38] sm:$0xff] %v96
  // Predicated region
  $region10: #{_lambda_.16} parent=0 // pred_check
    _
  $region11: #{_lambda_.16} parent=0 // pred_check_branch
    %107 = sbr.rel (0) target = $region13
  $region12: #{_lambda_.16} parent=0 // pred_region
    _
  $region13: #{_lambda_.16} parent=0 // pred_fallthru
    _
  // Predicated region
  $region14: #{_lambda_.16} parent=0 // pred_check
    _
  $region15: #{_lambda_.16} parent=0 // pred_check_branch
    %109 = sbr.rel (0) target = $region17
  $region16: #{_lambda_.16} parent=0 // pred_region
    _
  $region17: #{_lambda_.16} parent=0 // pred_fallthru
    _

// kernel: _lambda_.15
$region0: #{_lambda_.15}
  #allocation0 [shape = 'u32[]', space=smem, size = 0x4, offset = 0x4, fixed_abs, tag = 'smem constant byte address 0x4 - core index']
  #allocation1 [shape = 'u32[144,128]{1,0:T(1,128)}', space=vmem, size = 0x12000, scoped, tag = 'internal scratch']
  %s0 = inlined_call_operand.vmem [shape: f32[32,16], index: 0, kind: input, shape index: {}]
  %s1 = inlined_call_operand.vmem [shape: f32[1,16], index: 1, kind: input, shape index: {}]
  %s2 = inlined_call_operand.vmem [shape: f32[1,16], index: 2, kind: input, shape index: {}]
  %s3 = inlined_call_operand.vmem [shape: bf16[32,16], index: 3, kind: output, shape index: {}]
  %s4 = sld [smem:[#allocation0]]
  $region22: #{_lambda_.15} parent=0
    _
  %s6 = ssub.s32 1, %s4
  %s7 = scalar_select 0, %s6, %s4
  // Predicated region
  $region2: #{_lambda_.15} parent=0 // pred_check
    _
  $region3: #{_lambda_.15} parent=0 // pred_check_branch
    %9 = sbr.rel (0) target = $region5
  $region4: #{_lambda_.15} parent=0 // pred_region
    _
  $region5: #{_lambda_.15} parent=0 // pred_fallthru
    _
  // Predicated region
  $region6: #{_lambda_.15} parent=0 // pred_check
    _
  $region7: #{_lambda_.15} parent=0 // pred_check_branch
    %11 = sbr.rel (0) target = $region9
  $region8: #{_lambda_.15} parent=0 // pred_region
    _
  $region9: #{_lambda_.15} parent=0 // pred_fallthru
    _
  // Predicated region
  $region10: #{_lambda_.15} parent=0 // pred_check
    _
  $region11: #{_lambda_.15} parent=0 // pred_check_branch
    %13 = sbr.rel (0) target = $region13
  $region12: #{_lambda_.15} parent=0 // pred_region
    _
  $region13: #{_lambda_.15} parent=0 // pred_fallthru
    _
  %v14 = vld [vmem:[%s0] sm:$0xff]
  %v15 = vld [vmem:[%s0 + $0x8] sm:$0xff]
  %v16 = vld [vmem:[%s0 + $0x10] sm:$0xff]
  %v17 = vld [vmem:[%s0 + $0x18] sm:$0xff]
  %v18 = vld [vmem:[%s1] sm:$0x1]
  %v20 = vlaneseq
  %v21 = vshrl.u32 %v20, 7
  %v22 = vsub.s32 0, %v21
  %v23 = vrot.slane %v18, %v22
  %v25 = vmul.f32 %v14, %v23
  %v26 = vmul.f32 %v15, %v23
  %v27 = vmul.f32 %v16, %v23
  %v28 = vmul.f32 %v17, %v23
  %v29 = vld [vmem:[%s2] sm:$0x1]
  %v31 = vlaneseq
  %v32 = vshrl.u32 %v31, 7
  %v33 = vsub.s32 0, %v32
  %v34 = vrot.slane %v29, %v33
  %v36 = vadd.f32 %v25, %v34
  %v37 = vadd.f32 %v26, %v34
  %v38 = vadd.f32 %v27, %v34
  %v39 = vadd.f32 %v28, %v34
  %vm40 = vcmp.ge.f32.partialorder %v36, 0.0
  %vm41 = vcmp.ge.f32.partialorder %v37, 0.0
  %vm42 = vcmp.ge.f32.partialorder %v38, 0.0
  %vm43 = vcmp.ge.f32.partialorder %v39, 0.0
  %v44 = vmul.f32 %v36, 0.2
  %v45 = vmul.f32 %v37, 0.2
  %v46 = vmul.f32 %v38, 0.2
  %v47 = vmul.f32 %v39, 0.2
  %v48 = vsel %vm40, %v36, %v44
  %v49 = vsel %vm41, %v37, %v45
  %v50 = vsel %vm42, %v38, %v46
  %v51 = vsel %vm43, %v39, %v47
  %v52 = vpack.c.bf16 %v49, %v48
  %v53 = vpack.c.bf16 %v51, %v50
  %v56 = vunpack.c.l.b16 %v52
  %v57 = vunpack.c.h.b16 %v52
  %v58 = vunpack.c.l.b16 %v53
  %v59 = vunpack.c.h.b16 %v53
  %v60 = vpack.c.b16 %v56, %v56
  %v61 = vpack.c.b16 %v57, %v57
  %v62 = vpack.c.b16 %v58, %v58
  %v63 = vpack.c.b16 %v59, %v59
  %vm68 = vcmask 125952
  %69 = vst.msk [vmem:[%s3] sm:$0xf] %vm68, %v60
  %70 = vst.msk [vmem:[%s3 + $0x4] sm:$0xf] %vm68, %v61
  %71 = vst.msk [vmem:[%s3 + $0x8] sm:$0xf] %vm68, %v62
  %72 = vst.msk [vmem:[%s3 + $0xc] sm:$0xf] %vm68, %v63
  // Predicated region
  $region14: #{_lambda_.15} parent=0 // pred_check
    _
  $region15: #{_lambda_.15} parent=0 // pred_check_branch
    %74 = sbr.rel (0) target = $region17
  $region16: #{_lambda_.15} parent=0 // pred_region
    _
  $region17: #{_lambda_.15} parent=0 // pred_fallthru
    _
  // Predicated region
  $region18: #{_lambda_.15} parent=0 // pred_check
    _
  $region19: #{_lambda_.15} parent=0 // pred_check_branch
    %76 = sbr.rel (0) target = $region21
  $region20: #{_lambda_.15} parent=0 // pred_region
    _
  $region21: #{_lambda_.15} parent=0 // pred_fallthru
    _

// kernel: _lambda_.18
$region0: #{_lambda_.18}
  #allocation0 [shape = 'u32[]', space=smem, size = 0x4, offset = 0x4, fixed_abs, tag = 'smem constant byte address 0x4 - core index']
  #allocation1 [shape = 'u32[144,128]{1,0:T(1,128)}', space=vmem, size = 0x12000, scoped, tag = 'internal scratch']
  %s0 = inlined_call_operand.vmem [shape: f32[128,16], index: 0, kind: input, shape index: {}]
  %s1 = inlined_call_operand.vmem [shape: f32[1,16], index: 1, kind: input, shape index: {}]
  %s2 = inlined_call_operand.vmem [shape: f32[1,16], index: 2, kind: input, shape index: {}]
  %s3 = inlined_call_operand.vmem [shape: bf16[128,16], index: 3, kind: output, shape index: {}]
  %s4 = sld [smem:[#allocation0]]
  $region22: #{_lambda_.18} parent=0
    _
  %s6 = ssub.s32 1, %s4
  %s7 = scalar_select 0, %s6, %s4
  // Predicated region
  $region2: #{_lambda_.18} parent=0 // pred_check
    _
  $region3: #{_lambda_.18} parent=0 // pred_check_branch
    %9 = sbr.rel (0) target = $region5
  $region4: #{_lambda_.18} parent=0 // pred_region
    _
  $region5: #{_lambda_.18} parent=0 // pred_fallthru
    _
  // Predicated region
  $region6: #{_lambda_.18} parent=0 // pred_check
    _
  $region7: #{_lambda_.18} parent=0 // pred_check_branch
    %11 = sbr.rel (0) target = $region9
  $region8: #{_lambda_.18} parent=0 // pred_region
    _
  $region9: #{_lambda_.18} parent=0 // pred_fallthru
    _
  // Predicated region
  $region10: #{_lambda_.18} parent=0 // pred_check
    _
  $region11: #{_lambda_.18} parent=0 // pred_check_branch
    %13 = sbr.rel (0) target = $region13
  $region12: #{_lambda_.18} parent=0 // pred_region
    _
  $region13: #{_lambda_.18} parent=0 // pred_fallthru
    _
  %v14 = vld [vmem:[%s0] sm:$0xff]
  %v15 = vld [vmem:[%s0 + $0x8] sm:$0xff]
  %v16 = vld [vmem:[%s0 + $0x10] sm:$0xff]
  %v17 = vld [vmem:[%s0 + $0x18] sm:$0xff]
  %v18 = vld [vmem:[%s0 + $0x20] sm:$0xff]
  %v19 = vld [vmem:[%s0 + $0x28] sm:$0xff]
  %v20 = vld [vmem:[%s0 + $0x30] sm:$0xff]
  %v21 = vld [vmem:[%s0 + $0x38] sm:$0xff]
  %v22 = vld [vmem:[%s0 + $0x40] sm:$0xff]
  %v23 = vld [vmem:[%s0 + $0x48] sm:$0xff]
  %v24 = vld [vmem:[%s0 + $0x50] sm:$0xff]
  %v25 = vld [vmem:[%s0 + $0x58] sm:$0xff]
  %v26 = vld [vmem:[%s0 + $0x60] sm:$0xff]
  %v27 = vld [vmem:[%s0 + $0x68] sm:$0xff]
  %v28 = vld [vmem:[%s0 + $0x70] sm:$0xff]
  %v29 = vld [vmem:[%s0 + $0x78] sm:$0xff]
  %v30 = vld [vmem:[%s1] sm:$0x1]
  %v32 = vlaneseq
  %v33 = vshrl.u32 %v32, 7
  %v34 = vsub.s32 0, %v33
  %v35 = vrot.slane %v30, %v34
  %v37 = vmul.f32 %v14, %v35
  %v38 = vmul.f32 %v15, %v35
  %v39 = vmul.f32 %v16, %v35
  %v40 = vmul.f32 %v17, %v35
  %v41 = vmul.f32 %v18, %v35
  %v42 = vmul.f32 %v19, %v35
  %v43 = vmul.f32 %v20, %v35
  %v44 = vmul.f32 %v21, %v35
  %v45 = vmul.f32 %v22, %v35
  %v46 = vmul.f32 %v23, %v35
  %v47 = vmul.f32 %v24, %v35
  %v48 = vmul.f32 %v25, %v35
  %v49 = vmul.f32 %v26, %v35
  %v50 = vmul.f32 %v27, %v35
  %v51 = vmul.f32 %v28, %v35
  %v52 = vmul.f32 %v29, %v35
  %v53 = vld [vmem:[%s2] sm:$0x1]
  %v55 = vlaneseq
  %v56 = vshrl.u32 %v55, 7
  %v57 = vsub.s32 0, %v56
  %v58 = vrot.slane %v53, %v57
  %v60 = vadd.f32 %v37, %v58
  %v61 = vadd.f32 %v38, %v58
  %v62 = vadd.f32 %v39, %v58
  %v63 = vadd.f32 %v40, %v58
  %v64 = vadd.f32 %v41, %v58
  %v65 = vadd.f32 %v42, %v58
  %v66 = vadd.f32 %v43, %v58
  %v67 = vadd.f32 %v44, %v58
  %v68 = vadd.f32 %v45, %v58
  %v69 = vadd.f32 %v46, %v58
  %v70 = vadd.f32 %v47, %v58
  %v71 = vadd.f32 %v48, %v58
  %v72 = vadd.f32 %v49, %v58
  %v73 = vadd.f32 %v50, %v58
  %v74 = vadd.f32 %v51, %v58
  %v75 = vadd.f32 %v52, %v58
  %vm76 = vcmp.ge.f32.partialorder %v60, 0.0
  %vm77 = vcmp.ge.f32.partialorder %v61, 0.0
  %vm78 = vcmp.ge.f32.partialorder %v62, 0.0
  %vm79 = vcmp.ge.f32.partialorder %v63, 0.0
  %vm80 = vcmp.ge.f32.partialorder %v64, 0.0
  %vm81 = vcmp.ge.f32.partialorder %v65, 0.0
  %vm82 = vcmp.ge.f32.partialorder %v66, 0.0
  %vm83 = vcmp.ge.f32.partialorder %v67, 0.0
  %vm84 = vcmp.ge.f32.partialorder %v68, 0.0
  %vm85 = vcmp.ge.f32.partialorder %v69, 0.0
  %vm86 = vcmp.ge.f32.partialorder %v70, 0.0
  %vm87 = vcmp.ge.f32.partialorder %v71, 0.0
  %vm88 = vcmp.ge.f32.partialorder %v72, 0.0
  %vm89 = vcmp.ge.f32.partialorder %v73, 0.0
  %vm90 = vcmp.ge.f32.partialorder %v74, 0.0
  %vm91 = vcmp.ge.f32.partialorder %v75, 0.0
  %v92 = vmul.f32 %v60, 0.2
  %v93 = vmul.f32 %v61, 0.2
  %v94 = vmul.f32 %v62, 0.2
  %v95 = vmul.f32 %v63, 0.2
  %v96 = vmul.f32 %v64, 0.2
  %v97 = vmul.f32 %v65, 0.2
  %v98 = vmul.f32 %v66, 0.2
  %v99 = vmul.f32 %v67, 0.2
  %v100 = vmul.f32 %v68, 0.2
  %v101 = vmul.f32 %v69, 0.2
  %v102 = vmul.f32 %v70, 0.2
  %v103 = vmul.f32 %v71, 0.2
  %v104 = vmul.f32 %v72, 0.2
  %v105 = vmul.f32 %v73, 0.2
  %v106 = vmul.f32 %v74, 0.2
  %v107 = vmul.f32 %v75, 0.2
  %v108 = vsel %vm76, %v60, %v92
  %v109 = vsel %vm77, %v61, %v93
  %v110 = vsel %vm78, %v62, %v94
  %v111 = vsel %vm79, %v63, %v95
  %v112 = vsel %vm80, %v64, %v96
  %v113 = vsel %vm81, %v65, %v97
  %v114 = vsel %vm82, %v66, %v98
  %v115 = vsel %vm83, %v67, %v99
  %v116 = vsel %vm84, %v68, %v100
  %v117 = vsel %vm85, %v69, %v101
  %v118 = vsel %vm86, %v70, %v102
  %v119 = vsel %vm87, %v71, %v103
  %v120 = vsel %vm88, %v72, %v104
  %v121 = vsel %vm89, %v73, %v105
  %v122 = vsel %vm90, %v74, %v106
  %v123 = vsel %vm91, %v75, %v107
  %v124 = vpack.c.bf16 %v109, %v108
  %v125 = vpack.c.bf16 %v111, %v110
  %v126 = vpack.c.bf16 %v113, %v112
  %v127 = vpack.c.bf16 %v115, %v114
  %v128 = vpack.c.bf16 %v117, %v116
  %v129 = vpack.c.bf16 %v119, %v118
  %v130 = vpack.c.bf16 %v121, %v120
  %v131 = vpack.c.bf16 %v123, %v122
  %v140 = vunpack.c.l.b16 %v124
  %v141 = vunpack.c.h.b16 %v124
  %v142 = vunpack.c.l.b16 %v125
  %v143 = vunpack.c.h.b16 %v125
  %v144 = vunpack.c.l.b16 %v126
  %v145 = vunpack.c.h.b16 %v126
  %v146 = vunpack.c.l.b16 %v127
  %v147 = vunpack.c.h.b16 %v127
  %v148 = vunpack.c.l.b16 %v128
  %v149 = vunpack.c.h.b16 %v128
  %v150 = vunpack.c.l.b16 %v129
  %v151 = vunpack.c.h.b16 %v129
  %v152 = vunpack.c.l.b16 %v130
  %v153 = vunpack.c.h.b16 %v130
  %v154 = vunpack.c.l.b16 %v131
  %v155 = vunpack.c.h.b16 %v131
  %v156 = vpack.c.b16 %v140, %v140
  %v157 = vpack.c.b16 %v141, %v141
  %v158 = vpack.c.b16 %v142, %v142
  %v159 = vpack.c.b16 %v143, %v143
  %v160 = vpack.c.b16 %v144, %v144
  %v161 = vpack.c.b16 %v145, %v145
  %v162 = vpack.c.b16 %v146, %v146
  %v163 = vpack.c.b16 %v147, %v147
  %v164 = vpack.c.b16 %v148, %v148
  %v165 = vpack.c.b16 %v149, %v149
  %v166 = vpack.c.b16 %v150, %v150
  %v167 = vpack.c.b16 %v151, %v151
  %v168 = vpack.c.b16 %v152, %v152
  %v169 = vpack.c.b16 %v153, %v153
  %v170 = vpack.c.b16 %v154, %v154
  %v171 = vpack.c.b16 %v155, %v155
  %vm188 = vcmask 125952
  %189 = vst.msk [vmem:[%s3] sm:$0xf] %vm188, %v156
  %190 = vst.msk [vmem:[%s3 + $0x4] sm:$0xf] %vm188, %v157
  %191 = vst.msk [vmem:[%s3 + $0x8] sm:$0xf] %vm188, %v158
  %192 = vst.msk [vmem:[%s3 + $0xc] sm:$0xf] %vm188, %v159
  %193 = vst.msk [vmem:[%s3 + $0x10] sm:$0xf] %vm188, %v160
  %194 = vst.msk [vmem:[%s3 + $0x14] sm:$0xf] %vm188, %v161
  %195 = vst.msk [vmem:[%s3 + $0x18] sm:$0xf] %vm188, %v162
  %196 = vst.msk [vmem:[%s3 + $0x1c] sm:$0xf] %vm188, %v163
  %197 = vst.msk [vmem:[%s3 + $0x20] sm:$0xf] %vm188, %v164
  %198 = vst.msk [vmem:[%s3 + $0x24] sm:$0xf] %vm188, %v165
  %199 = vst.msk [vmem:[%s3 + $0x28] sm:$0xf] %vm188, %v166
  %200 = vst.msk [vmem:[%s3 + $0x2c] sm:$0xf] %vm188, %v167
  %201 = vst.msk [vmem:[%s3 + $0x30] sm:$0xf] %vm188, %v168
  %202 = vst.msk [vmem:[%s3 + $0x34] sm:$0xf] %vm188, %v169
  %203 = vst.msk [vmem:[%s3 + $0x38] sm:$0xf] %vm188, %v170
  %204 = vst.msk [vmem:[%s3 + $0x3c] sm:$0xf] %vm188, %v171
  // Predicated region
  $region14: #{_lambda_.18} parent=0 // pred_check
    _
  $region15: #{_lambda_.18} parent=0 // pred_check_branch
    %206 = sbr.rel (0) target = $region17
  $region16: #{_lambda_.18} parent=0 // pred_region
    _
  $region17: #{_lambda_.18} parent=0 // pred_fallthru
    _
  // Predicated region
  $region18: #{_lambda_.18} parent=0 // pred_check
    _
  $region19: #{_lambda_.18} parent=0 // pred_check_branch
    %208 = sbr.rel (0) target = $region21
  $region20: #{_lambda_.18} parent=0 // pred_region
    _
  $region21: #{_lambda_.18} parent=0 // pred_fallthru
    _

// kernel: _lambda_.17
$region0: #{_lambda_.17}
  #allocation0 [shape = 'u32[]', space=smem, size = 0x4, offset = 0x4, fixed_abs, tag = 'smem constant byte address 0x4 - core index']
  #allocation1 [shape = 'u32[144,128]{1,0:T(1,128)}', space=vmem, size = 0x12000, scoped, tag = 'internal scratch']
  %s0 = inlined_call_operand.vmem [shape: f32[128,16], index: 0, kind: input, shape index: {}]
  %s1 = inlined_call_operand.vmem [shape: f32[1,16], index: 1, kind: output, shape index: {0}]
  %s2 = inlined_call_operand.vmem [shape: f32[1,16], index: 2, kind: output, shape index: {1}]
  %3 = xla_tuple %s1, %s2
  %s4 = sld [smem:[#allocation0]]
  $region26: #{_lambda_.17} parent=0
    _
  %s6 = ssub.s32 1, %s4
  %s7 = scalar_select 0, %s6, %s4
  // Predicated region
  $region2: #{_lambda_.17} parent=0 // pred_check
    _
  $region3: #{_lambda_.17} parent=0 // pred_check_branch
    %9 = sbr.rel (0) target = $region5
  $region4: #{_lambda_.17} parent=0 // pred_region
    _
  $region5: #{_lambda_.17} parent=0 // pred_fallthru
    _
  %p10 = scmp.eq.s32.totalorder 0, 0
  // Predicated region
  $region6: #{_lambda_.17} parent=0 // pred_check
    %p11 = pneg %p10
  $region7: #{_lambda_.17} parent=0 // pred_check_branch
    %13 = sbr.rel (%p11) target = $region9
  $region8: #{_lambda_.17} parent=0 // pred_region
    %vm14 = vcmask 122880
    %15 = vst.msk [vmem:[%s1] sm:$0x1] %vm14, 0.0
    %16 = vst.msk [vmem:[%s2] sm:$0x1] %vm14, 0.0
  $region9: #{_lambda_.17} parent=0 // pred_fallthru
    _
  %v17 = vld [vmem:[%s0] sm:$0xff]
  %v18 = vld [vmem:[%s0 + $0x8] sm:$0xff]
  %v19 = vld [vmem:[%s0 + $0x10] sm:$0xff]
  %v20 = vld [vmem:[%s0 + $0x18] sm:$0xff]
  %v21 = vld [vmem:[%s0 + $0x20] sm:$0xff]
  %v22 = vld [vmem:[%s0 + $0x28] sm:$0xff]
  %v23 = vld [vmem:[%s0 + $0x30] sm:$0xff]
  %v24 = vld [vmem:[%s0 + $0x38] sm:$0xff]
  %v25 = vld [vmem:[%s0 + $0x40] sm:$0xff]
  %v26 = vld [vmem:[%s0 + $0x48] sm:$0xff]
  %v27 = vld [vmem:[%s0 + $0x50] sm:$0xff]
  %v28 = vld [vmem:[%s0 + $0x58] sm:$0xff]
  %v29 = vld [vmem:[%s0 + $0x60] sm:$0xff]
  %v30 = vld [vmem:[%s0 + $0x68] sm:$0xff]
  %v31 = vld [vmem:[%s0 + $0x70] sm:$0xff]
  %v32 = vld [vmem:[%s0 + $0x78] sm:$0xff]
  %v33 = vld [vmem:[%s1] sm:$0x1]
  %vm34 = vcmask 130048
  %v35 = vsel %vm34, %v17, 0.0
  %v36 = vsel %vm34, %v18, 0.0
  %v37 = vadd.f32 %v35, %v36
  %v38 = vsel %vm34, %v19, 0.0
  %v39 = vadd.f32 %v37, %v38
  %v40 = vsel %vm34, %v20, 0.0
  %v41 = vadd.f32 %v39, %v40
  %v42 = vsel %vm34, %v21, 0.0
  %v43 = vadd.f32 %v41, %v42
  %v44 = vsel %vm34, %v22, 0.0
  %v45 = vadd.f32 %v43, %v44
  %v46 = vsel %vm34, %v23, 0.0
  %v47 = vadd.f32 %v45, %v46
  %v48 = vsel %vm34, %v24, 0.0
  %v49 = vadd.f32 %v47, %v48
  %v50 = vsel %vm34, %v25, 0.0
  %v51 = vadd.f32 %v49, %v50
  %v52 = vsel %vm34, %v26, 0.0
  %v53 = vadd.f32 %v51, %v52
  %v54 = vsel %vm34, %v27, 0.0
  %v55 = vadd.f32 %v53, %v54
  %v56 = vsel %vm34, %v28, 0.0
  %v57 = vadd.f32 %v55, %v56
  %v58 = vsel %vm34, %v29, 0.0
  %v59 = vadd.f32 %v57, %v58
  %v60 = vsel %vm34, %v30, 0.0
  %v61 = vadd.f32 %v59, %v60
  %v62 = vsel %vm34, %v31, 0.0
  %v63 = vadd.f32 %v61, %v62
  %v64 = vsel %vm34, %v32, 0.0
  %v65 = vadd.f32 %v63, %v64
  %v66 = vrot.slane %v65, 4
  %v67 = vadd.f32 %v65, %v66
  %v68 = vrot.slane %v67, 2
  %v69 = vadd.f32 %v67, %v68
  %v70 = vrot.slane %v69, 1
  %v71 = vadd.f32 %v69, %v70
  %v72 = vadd.f32 %v33, %v71
  %vm73 = vcmask 122880
  %74 = vst.msk [vmem:[%s1] sm:$0x1] %vm73, %v72
  %v75 = vld [vmem:[%s2] sm:$0x1]
  %v76 = vmul.f32 %v17, %v17
  %v77 = vmul.f32 %v18, %v18
  %v78 = vmul.f32 %v19, %v19
  %v79 = vmul.f32 %v20, %v20
  %v80 = vmul.f32 %v21, %v21
  %v81 = vmul.f32 %v22, %v22
  %v82 = vmul.f32 %v23, %v23
  %v83 = vmul.f32 %v24, %v24
  %v84 = vmul.f32 %v25, %v25
  %v85 = vmul.f32 %v26, %v26
  %v86 = vmul.f32 %v27, %v27
  %v87 = vmul.f32 %v28, %v28
  %v88 = vmul.f32 %v29, %v29
  %v89 = vmul.f32 %v30, %v30
  %v90 = vmul.f32 %v31, %v31
  %v91 = vmul.f32 %v32, %v32
  %v92 = vsel %vm34, %v76, 0.0
  %v93 = vsel %vm34, %v77, 0.0
  %v94 = vadd.f32 %v92, %v93
  %v95 = vsel %vm34, %v78, 0.0
  %v96 = vadd.f32 %v94, %v95
  %v97 = vsel %vm34, %v79, 0.0
  %v98 = vadd.f32 %v96, %v97
  %v99 = vsel %vm34, %v80, 0.0
  %v100 = vadd.f32 %v98, %v99
  %v101 = vsel %vm34, %v81, 0.0
  %v102 = vadd.f32 %v100, %v101
  %v103 = vsel %vm34, %v82, 0.0
  %v104 = vadd.f32 %v102, %v103
  %v105 = vsel %vm34, %v83, 0.0
  %v106 = vadd.f32 %v104, %v105
  %v107 = vsel %vm34, %v84, 0.0
  %v108 = vadd.f32 %v106, %v107
  %v109 = vsel %vm34, %v85, 0.0
  %v110 = vadd.f32 %v108, %v109
  %v111 = vsel %vm34, %v86, 0.0
  %v112 = vadd.f32 %v110, %v111
  %v113 = vsel %vm34, %v87, 0.0
  %v114 = vadd.f32 %v112, %v113
  %v115 = vsel %vm34, %v88, 0.0
  %v116 = vadd.f32 %v114, %v115
  %v117 = vsel %vm34, %v89, 0.0
  %v118 = vadd.f32 %v116, %v117
  %v119 = vsel %vm34, %v90, 0.0
  %v120 = vadd.f32 %v118, %v119
  %v121 = vsel %vm34, %v91, 0.0
  %v122 = vadd.f32 %v120, %v121
  %v123 = vrot.slane %v122, 4
  %v124 = vadd.f32 %v122, %v123
  %v125 = vrot.slane %v124, 2
  %v126 = vadd.f32 %v124, %v125
  %v127 = vrot.slane %v126, 1
  %v128 = vadd.f32 %v126, %v127
  %v129 = vadd.f32 %v75, %v128
  %130 = vst.msk [vmem:[%s2] sm:$0x1] %vm73, %v129
  // Predicated region
  $region10: #{_lambda_.17} parent=0 // pred_check
    _
  $region11: #{_lambda_.17} parent=0 // pred_check_branch
    %132 = sbr.rel (0) target = $region13
  $region12: #{_lambda_.17} parent=0 // pred_region
    _
  $region13: #{_lambda_.17} parent=0 // pred_fallthru
    _
  // Predicated region
  $region14: #{_lambda_.17} parent=0 // pred_check
    _
  $region15: #{_lambda_.17} parent=0 // pred_check_branch
    %134 = sbr.rel (0) target = $region17
  $region16: #{_lambda_.17} parent=0 // pred_region
    _
  $region17: #{_lambda_.17} parent=0 // pred_fallthru
    _
  // Predicated region
  $region18: #{_lambda_.17} parent=0 // pred_check
    _
  $region19: #{_lambda_.17} parent=0 // pred_check_branch
    %136 = sbr.rel (0) target = $region21
  $region20: #{_lambda_.17} parent=0 // pred_region
    _
  $region21: #{_lambda_.17} parent=0 // pred_fallthru
    _
  // Predicated region
  $region22: #{_lambda_.17} parent=0 // pred_check
    _
  $region23: #{_lambda_.17} parent=0 // pred_check_branch
    %138 = sbr.rel (0) target = $region25
  $region24: #{_lambda_.17} parent=0 // pred_region
    _
  $region25: #{_lambda_.17} parent=0 // pred_fallthru
    _

// kernel: _lambda_.19
$region0: #{_lambda_.19}
  #allocation0 [shape = 'u32[]', space=smem, size = 0x4, offset = 0x4, fixed_abs, tag = 'smem constant byte address 0x4 - core index']
  #allocation1 [shape = 'u32[144,128]{1,0:T(1,128)}', space=vmem, size = 0x12000, scoped, tag = 'internal scratch']
  %s0 = inlined_call_operand.vmem [shape: bf16[128,16], index: 0, kind: input, shape index: {}]
  %s1 = inlined_call_operand.vmem [shape: bf16[16,256], index: 1, kind: input, shape index: {}]
  %s2 = inlined_call_operand.vmem [shape: f32[128,256], index: 2, kind: output, shape index: {}]
  %s3 = sld [smem:[#allocation0]]
  $region18: #{_lambda_.19} parent=0
    _
  %s5 = ssub.s32 1, %s3
  %s6 = scalar_select 0, %s5, %s3
  // Predicated region
  $region2: #{_lambda_.19} parent=0 // pred_check
    _
  $region3: #{_lambda_.19} parent=0 // pred_check_branch
    %8 = sbr.rel (0) target = $region5
  $region4: #{_lambda_.19} parent=0 // pred_region
    _
  $region5: #{_lambda_.19} parent=0 // pred_fallthru
    _
  // Predicated region
  $region6: #{_lambda_.19} parent=0 // pred_check
    _
  $region7: #{_lambda_.19} parent=0 // pred_check_branch
    %10 = sbr.rel (0) target = $region9
  $region8: #{_lambda_.19} parent=0 // pred_region
    _
  $region9: #{_lambda_.19} parent=0 // pred_fallthru
    _
  %v12 = vld [vmem:[%s0] sm:$0xf]
  %v13 = vld [vmem:[%s0 + $0x4] sm:$0xf]
  %v14 = vld [vmem:[%s0 + $0x8] sm:$0xf]
  %v15 = vld [vmem:[%s0 + $0xc] sm:$0xf]
  %v16 = vld [vmem:[%s0 + $0x10] sm:$0xf]
  %v17 = vld [vmem:[%s0 + $0x14] sm:$0xf]
  %v18 = vld [vmem:[%s0 + $0x18] sm:$0xf]
  %v19 = vld [vmem:[%s0 + $0x1c] sm:$0xf]
  %v20 = vld [vmem:[%s0 + $0x20] sm:$0xf]
  %v21 = vld [vmem:[%s0 + $0x24] sm:$0xf]
  %v22 = vld [vmem:[%s0 + $0x28] sm:$0xf]
  %v23 = vld [vmem:[%s0 + $0x2c] sm:$0xf]
  %v24 = vld [vmem:[%s0 + $0x30] sm:$0xf]
  %v25 = vld [vmem:[%s0 + $0x34] sm:$0xf]
  %v26 = vld [vmem:[%s0 + $0x38] sm:$0xf]
  %v27 = vld [vmem:[%s0 + $0x3c] sm:$0xf]
  %v28 = vld [vmem:[%s1] sm:$0xff]
  %v29 = vld [vmem:[%s1 + $0x8] sm:$0xff]
  %v46 = vunpack.c.l.b16 %v12
  %v47 = vunpack.c.l.b16 %v13
  %v48 = vunpack.c.l.b16 %v14
  %v49 = vunpack.c.l.b16 %v15
  %v50 = vunpack.c.l.b16 %v16
  %v51 = vunpack.c.l.b16 %v17
  %v52 = vunpack.c.l.b16 %v18
  %v53 = vunpack.c.l.b16 %v19
  %v54 = vunpack.c.l.b16 %v20
  %v55 = vunpack.c.l.b16 %v21
  %v56 = vunpack.c.l.b16 %v22
  %v57 = vunpack.c.l.b16 %v23
  %v58 = vunpack.c.l.b16 %v24
  %v59 = vunpack.c.l.b16 %v25
  %v60 = vunpack.c.l.b16 %v26
  %v61 = vunpack.c.l.b16 %v27
  %v62 = vpack.c.b16 %v47, %v46
  %v63 = vpack.c.b16 %v49, %v48
  %v64 = vpack.c.b16 %v51, %v50
  %v65 = vpack.c.b16 %v53, %v52
  %v66 = vpack.c.b16 %v55, %v54
  %v67 = vpack.c.b16 %v57, %v56
  %v68 = vpack.c.b16 %v59, %v58
  %v69 = vpack.c.b16 %v61, %v60
  %v72 = vunpack.c.l.b16 %v28
  %v73 = vunpack.c.h.b16 %v28
  %v74 = vunpack.c.l.b16 %v29
  %v75 = vunpack.c.h.b16 %v29
  %v76 = vpack.c.b16 %v74, %v72
  %v77 = vpack.c.b16 %v75, %v73
  %vm80 = vcmask 130048
  %v82 = vsel %vm80, %v62, 0
  %v85 = vsel %vm80, %v63, 0
  %v88 = vsel %vm80, %v64, 0
  %v91 = vsel %vm80, %v65, 0
  %v94 = vsel %vm80, %v66, 0
  %v97 = vsel %vm80, %v67, 0
  %v100 = vsel %vm80, %v68, 0
  %v103 = vsel %vm80, %v69, 0
  %105 = vmatprep.subr.bf16.mxu0 0
  %106 = vmatpush1.bf16.msra.mxu0 0
  %107 = vmatprep.subr.bf16.mxu0 0
  %108 = vmatpush1.bf16.msra.mxu0 0
  %109 = vmatprep.subr.bf16.mxu0 0
  %110 = vmatpush1.bf16.msra.mxu0 0
  %111 = vmatprep.subr.bf16.mxu0 0
  %112 = vmatpush1.bf16.msra.mxu0 0
  %113 = vmatprep.subr.bf16.mxu0 0
  %114 = vmatpush1.bf16.msra.mxu0 0
  %115 = vmatprep.subr.bf16.mxu0 0
  %116 = vmatpush1.bf16.msra.mxu0 0
  %117 = vmatprep.subr.bf16.mxu0 0
  %118 = vmatpush1.bf16.msra.mxu0 0
  %119 = vmatprep.subr.bf16.mxu0 %v77
  %120 = vmatpush1.bf16.msra.mxu0 %v76
  %121 = vmatprep.subr.bf16.mxu0 0
  %122 = vmatpush2.bf16.msra.mxu0 0
  %123 = vmatprep.subr.bf16.mxu0 0
  %124 = vmatpush2.bf16.msra.mxu0 0
  %125 = vmatprep.subr.bf16.mxu0 0
  %126 = vmatpush2.bf16.msra.mxu0 0
  %127 = vmatprep.subr.bf16.mxu0 0
  %128 = vmatpush2.bf16.msra.mxu0 0
  %129 = vmatprep.subr.bf16.mxu0 0
  %130 = vmatpush2.bf16.msra.mxu0 0
  %131 = vmatprep.subr.bf16.mxu0 0
  %132 = vmatpush2.bf16.msra.mxu0 0
  %133 = vmatprep.subr.bf16.mxu0 0
  %134 = vmatpush2.bf16.msra.mxu0 0
  %135 = vmatprep.subr.bf16.mxu0 0
  %136 = vmatpush2.bf16.msra.mxu0 0
  %137 = vmatprep.mubr.bf16.mxu0 0
  %138 = vmatmul.mubr.bf16.gmra.mxu0 %v82
  %v139 = vpop.f32.mrf.mxu0
  %v140 = vadd.f32 0.0, %v139
  %v141 = vpop.f32.mrf.mxu0
  %v142 = vadd.f32 0.0, %v141
  %v143 = vpop.f32.mrf.mxu0
  %v144 = vadd.f32 0.0, %v143
  %v145 = vpop.f32.mrf.mxu0
  %v146 = vadd.f32 0.0, %v145
  %147 = vmatprep.mubr.bf16.mxu0 0
  %148 = vmatmul.mubr.bf16.gmra.mxu0 %v85
  %v149 = vpop.f32.mrf.mxu0
  %v150 = vadd.f32 0.0, %v149
  %v151 = vpop.f32.mrf.mxu0
  %v152 = vadd.f32 0.0, %v151
  %v153 = vpop.f32.mrf.mxu0
  %v154 = vadd.f32 0.0, %v153
  %v155 = vpop.f32.mrf.mxu0
  %v156 = vadd.f32 0.0, %v155
  %157 = vmatprep.mubr.bf16.mxu0 0
  %158 = vmatmul.mubr.bf16.gmra.mxu0 %v88
  %v159 = vpop.f32.mrf.mxu0
  %v160 = vadd.f32 0.0, %v159
  %v161 = vpop.f32.mrf.mxu0
  %v162 = vadd.f32 0.0, %v161
  %v163 = vpop.f32.mrf.mxu0
  %v164 = vadd.f32 0.0, %v163
  %v165 = vpop.f32.mrf.mxu0
  %v166 = vadd.f32 0.0, %v165
  %167 = vmatprep.mubr.bf16.mxu0 0
  %168 = vmatmul.mubr.bf16.gmra.mxu0 %v91
  %v169 = vpop.f32.mrf.mxu0
  %v170 = vadd.f32 0.0, %v169
  %v171 = vpop.f32.mrf.mxu0
  %v172 = vadd.f32 0.0, %v171
  %v173 = vpop.f32.mrf.mxu0
  %v174 = vadd.f32 0.0, %v173
  %v175 = vpop.f32.mrf.mxu0
  %v176 = vadd.f32 0.0, %v175
  %177 = vmatprep.mubr.bf16.mxu0 0
  %178 = vmatmul.mubr.bf16.gmra.mxu0 %v94
  %v179 = vpop.f32.mrf.mxu0
  %v180 = vadd.f32 0.0, %v179
  %v181 = vpop.f32.mrf.mxu0
  %v182 = vadd.f32 0.0, %v181
  %v183 = vpop.f32.mrf.mxu0
  %v184 = vadd.f32 0.0, %v183
  %v185 = vpop.f32.mrf.mxu0
  %v186 = vadd.f32 0.0, %v185
  %187 = vmatprep.mubr.bf16.mxu0 0
  %188 = vmatmul.mubr.bf16.gmra.mxu0 %v97
  %v189 = vpop.f32.mrf.mxu0
  %v190 = vadd.f32 0.0, %v189
  %v191 = vpop.f32.mrf.mxu0
  %v192 = vadd.f32 0.0, %v191
  %v193 = vpop.f32.mrf.mxu0
  %v194 = vadd.f32 0.0, %v193
  %v195 = vpop.f32.mrf.mxu0
  %v196 = vadd.f32 0.0, %v195
  %197 = vmatprep.mubr.bf16.mxu0 0
  %198 = vmatmul.mubr.bf16.gmra.mxu0 %v100
  %v199 = vpop.f32.mrf.mxu0
  %v200 = vadd.f32 0.0, %v199
  %v201 = vpop.f32.mrf.mxu0
  %v202 = vadd.f32 0.0, %v201
  %v203 = vpop.f32.mrf.mxu0
  %v204 = vadd.f32 0.0, %v203
  %v205 = vpop.f32.mrf.mxu0
  %v206 = vadd.f32 0.0, %v205
  %207 = vmatprep.mubr.bf16.mxu0 0
  %208 = vmatmul.mubr.bf16.gmra.mxu0 %v103
  %v209 = vpop.f32.mrf.mxu0
  %v210 = vadd.f32 0.0, %v209
  %v211 = vpop.f32.mrf.mxu0
  %v212 = vadd.f32 0.0, %v211
  %v213 = vpop.f32.mrf.mxu0
  %v214 = vadd.f32 0.0, %v213
  %v215 = vpop.f32.mrf.mxu0
  %v216 = vadd.f32 0.0, %v215
  %217 = vdwg.mxu0
  %218 = vst [vmem:[%s2] sm:$0xff] %v140
  %219 = vst [vmem:[%s2 + $0x8] sm:$0xff] %v142
  %220 = vst [vmem:[%s2 + $0x10] sm:$0xff] %v144
  %221 = vst [vmem:[%s2 + $0x18] sm:$0xff] %v146
  %222 = vst [vmem:[%s2 + $0x20] sm:$0xff] %v150
  %223 = vst [vmem:[%s2 + $0x28] sm:$0xff] %v152
  %224 = vst [vmem:[%s2 + $0x30] sm:$0xff] %v154
  %225 = vst [vmem:[%s2 + $0x38] sm:$0xff] %v156
  %226 = vst [vmem:[%s2 + $0x40] sm:$0xff] %v160
  %227 = vst [vmem:[%s2 + $0x48] sm:$0xff] %v162
  %228 = vst [vmem:[%s2 + $0x50] sm:$0xff] %v164
  %229 = vst [vmem:[%s2 + $0x58] sm:$0xff] %v166
  %230 = vst [vmem:[%s2 + $0x60] sm:$0xff] %v170
  %231 = vst [vmem:[%s2 + $0x68] sm:$0xff] %v172
  %232 = vst [vmem:[%s2 + $0x70] sm:$0xff] %v174
  %233 = vst [vmem:[%s2 + $0x78] sm:$0xff] %v176
  %234 = vst [vmem:[%s2 + $0x80] sm:$0xff] %v180
  %235 = vst [vmem:[%s2 + $0x88] sm:$0xff] %v182
  %236 = vst [vmem:[%s2 + $0x90] sm:$0xff] %v184
  %237 = vst [vmem:[%s2 + $0x98] sm:$0xff] %v186
  %238 = vst [vmem:[%s2 + $0xa0] sm:$0xff] %v190
  %239 = vst [vmem:[%s2 + $0xa8] sm:$0xff] %v192
  %240 = vst [vmem:[%s2 + $0xb0] sm:$0xff] %v194
  %241 = vst [vmem:[%s2 + $0xb8] sm:$0xff] %v196
  %242 = vst [vmem:[%s2 + $0xc0] sm:$0xff] %v200
  %243 = vst [vmem:[%s2 + $0xc8] sm:$0xff] %v202
  %244 = vst [vmem:[%s2 + $0xd0] sm:$0xff] %v204
  %245 = vst [vmem:[%s2 + $0xd8] sm:$0xff] %v206
  %246 = vst [vmem:[%s2 + $0xe0] sm:$0xff] %v210
  %247 = vst [vmem:[%s2 + $0xe8] sm:$0xff] %v212
  %248 = vst [vmem:[%s2 + $0xf0] sm:$0xff] %v214
  %249 = vst [vmem:[%s2 + $0xf8] sm:$0xff] %v216
  // Predicated region
  $region10: #{_lambda_.19} parent=0 // pred_check
    _
  $region11: #{_lambda_.19} parent=0 // pred_check_branch
    %251 = sbr.rel (0) target = $region13
  $region12: #{_lambda_.19} parent=0 // pred_region
    _
  $region13: #{_lambda_.19} parent=0 // pred_fallthru
    _
  // Predicated region
  $region14: #{_lambda_.19} parent=0 // pred_check
    _
  $region15: #{_lambda_.19} parent=0 // pred_check_branch
    %253 = sbr.rel (0) target = $region17
  $region16: #{_lambda_.19} parent=0 // pred_region
    _
  $region17: #{_lambda_.19} parent=0 // pred_fallthru
    _

// kernel: _lambda_.20
$region0: #{_lambda_.20}
  #allocation0 [shape = 'u32[]', space=smem, size = 0x4, offset = 0x4, fixed_abs, tag = 'smem constant byte address 0x4 - core index']
  #allocation1 [shape = 'u32[144,128]{1,0:T(1,128)}', space=vmem, size = 0x12000, scoped, tag = 'internal scratch']
  %s0 = inlined_call_operand.vmem [shape: f32[512,16], index: 0, kind: input, shape index: {}]
  %s1 = inlined_call_operand.vmem [shape: f32[1,16], index: 1, kind: output, shape index: {0}]
  %s2 = inlined_call_operand.vmem [shape: f32[1,16], index: 2, kind: output, shape index: {1}]
  %3 = xla_tuple %s1, %s2
  %s4 = sld [smem:[#allocation0]]
  $region26: #{_lambda_.20} parent=0
    _
  %s6 = ssub.s32 1, %s4
  %s7 = scalar_select 0, %s6, %s4
  // Predicated region
  $region2: #{_lambda_.20} parent=0 // pred_check
    _
  $region3: #{_lambda_.20} parent=0 // pred_check_branch
    %9 = sbr.rel (0) target = $region5
  $region4: #{_lambda_.20} parent=0 // pred_region
    _
  $region5: #{_lambda_.20} parent=0 // pred_fallthru
    _
  %p10 = scmp.eq.s32.totalorder 0, 0
  // Predicated region
  $region6: #{_lambda_.20} parent=0 // pred_check
    %p11 = pneg %p10
  $region7: #{_lambda_.20} parent=0 // pred_check_branch
    %13 = sbr.rel (%p11) target = $region9
  $region8: #{_lambda_.20} parent=0 // pred_region
    %vm14 = vcmask 122880
    %15 = vst.msk [vmem:[%s1] sm:$0x1] %vm14, 0.0
    %16 = vst.msk [vmem:[%s2] sm:$0x1] %vm14, 0.0
  $region9: #{_lambda_.20} parent=0 // pred_fallthru
    _
  %v17 = vld [vmem:[%s0] sm:$0xff]
  %v18 = vld [vmem:[%s0 + $0x8] sm:$0xff]
  %v19 = vld [vmem:[%s0 + $0x10] sm:$0xff]
  %v20 = vld [vmem:[%s0 + $0x18] sm:$0xff]
  %v21 = vld [vmem:[%s0 + $0x20] sm:$0xff]
  %v22 = vld [vmem:[%s0 + $0x28] sm:$0xff]
  %v23 = vld [vmem:[%s0 + $0x30] sm:$0xff]
  %v24 = vld [vmem:[%s0 + $0x38] sm:$0xff]
  %v25 = vld [vmem:[%s0 + $0x40] sm:$0xff]
  %v26 = vld [vmem:[%s0 + $0x48] sm:$0xff]
  %v27 = vld [vmem:[%s0 + $0x50] sm:$0xff]
  %v28 = vld [vmem:[%s0 + $0x58] sm:$0xff]
  %v29 = vld [vmem:[%s0 + $0x60] sm:$0xff]
  %v30 = vld [vmem:[%s0 + $0x68] sm:$0xff]
  %v31 = vld [vmem:[%s0 + $0x70] sm:$0xff]
  %v32 = vld [vmem:[%s0 + $0x78] sm:$0xff]
  %v33 = vld [vmem:[%s0 + $0x80] sm:$0xff]
  %v34 = vld [vmem:[%s0 + $0x88] sm:$0xff]
  %v35 = vld [vmem:[%s0 + $0x90] sm:$0xff]
  %v36 = vld [vmem:[%s0 + $0x98] sm:$0xff]
  %v37 = vld [vmem:[%s0 + $0xa0] sm:$0xff]
  %v38 = vld [vmem:[%s0 + $0xa8] sm:$0xff]
  %v39 = vld [vmem:[%s0 + $0xb0] sm:$0xff]
  %v40 = vld [vmem:[%s0 + $0xb8] sm:$0xff]
  %v41 = vld [vmem:[%s0 + $0xc0] sm:$0xff]
  %v42 = vld [vmem:[%s0 + $0xc8] sm:$0xff]
  %v43 = vld [vmem:[%s0 + $0xd0] sm:$0xff]
  %v44 = vld [vmem:[%s0 + $0xd8] sm:$0xff]
  %v45 = vld [vmem:[%s0 + $0xe0] sm:$0xff]
  %v46 = vld [vmem:[%s0 + $0xe8] sm:$0xff]
  %v47 = vld [vmem:[%s0 + $0xf0] sm:$0xff]
  %v48 = vld [vmem:[%s0 + $0xf8] sm:$0xff]
  %v49 = vld [vmem:[%s0 + $0x100] sm:$0xff]
  %v50 = vld [vmem:[%s0 + $0x108] sm:$0xff]
  %v51 = vld [vmem:[%s0 + $0x110] sm:$0xff]
  %v52 = vld [vmem:[%s0 + $0x118] sm:$0xff]
  %v53 = vld [vmem:[%s0 + $0x120] sm:$0xff]
  %v54 = vld [vmem:[%s0 + $0x128] sm:$0xff]
  %v55 = vld [vmem:[%s0 + $0x130] sm:$0xff]
  %v56 = vld [vmem:[%s0 + $0x138] sm:$0xff]
  %v57 = vld [vmem:[%s0 + $0x140] sm:$0xff]
  %v58 = vld [vmem:[%s0 + $0x148] sm:$0xff]
  %v59 = vld [vmem:[%s0 + $0x150] sm:$0xff]
  %v60 = vld [vmem:[%s0 + $0x158] sm:$0xff]
  %v61 = vld [vmem:[%s0 + $0x160] sm:$0xff]
  %v62 = vld [vmem:[%s0 + $0x168] sm:$0xff]
  %v63 = vld [vmem:[%s0 + $0x170] sm:$0xff]
  %v64 = vld [vmem:[%s0 + $0x178] sm:$0xff]
  %v65 = vld [vmem:[%s0 + $0x180] sm:$0xff]
  %v66 = vld [vmem:[%s0 + $0x188] sm:$0xff]
  %v67 = vld [vmem:[%s0 + $0x190] sm:$0xff]
  %v68 = vld [vmem:[%s0 + $0x198] sm:$0xff]
  %v69 = vld [vmem:[%s0 + $0x1a0] sm:$0xff]
  %v70 = vld [vmem:[%s0 + $0x1a8] sm:$0xff]
  %v71 = vld [vmem:[%s0 + $0x1b0] sm:$0xff]
  %v72 = vld [vmem:[%s0 + $0x1b8] sm:$0xff]
  %v73 = vld [vmem:[%s0 + $0x1c0] sm:$0xff]
  %v74 = vld [vmem:[%s0 + $0x1c8] sm:$0xff]
  %v75 = vld [vmem:[%s0 + $0x1d0] sm:$0xff]
  %v76 = vld [vmem:[%s0 + $0x1d8] sm:$0xff]
  %v77 = vld [vmem:[%s0 + $0x1e0] sm:$0xff]
  %v78 = vld [vmem:[%s0 + $0x1e8] sm:$0xff]
  %v79 = vld [vmem:[%s0 + $0x1f0] sm:$0xff]
  %v80 = vld [vmem:[%s0 + $0x1f8] sm:$0xff]
  %v81 = vld [vmem:[%s1] sm:$0x1]
  %vm82 = vcmask 130048
  %v83 = vsel %vm82, %v17, 0.0
  %v84 = vsel %vm82, %v18, 0.0
  %v85 = vadd.f32 %v83, %v84
  %v86 = vsel %vm82, %v19, 0.0
  %v87 = vadd.f32 %v85, %v86
  %v88 = vsel %vm82, %v20, 0.0
  %v89 = vadd.f32 %v87, %v88
  %v90 = vsel %vm82, %v21, 0.0
  %v91 = vadd.f32 %v89, %v90
  %v92 = vsel %vm82, %v22, 0.0
  %v93 = vadd.f32 %v91, %v92
  %v94 = vsel %vm82, %v23, 0.0
  %v95 = vadd.f32 %v93, %v94
  %v96 = vsel %vm82, %v24, 0.0
  %v97 = vadd.f32 %v95, %v96
  %v98 = vsel %vm82, %v25, 0.0
  %v99 = vadd.f32 %v97, %v98
  %v100 = vsel %vm82, %v26, 0.0
  %v101 = vadd.f32 %v99, %v100
  %v102 = vsel %vm82, %v27, 0.0
  %v103 = vadd.f32 %v101, %v102
  %v104 = vsel %vm82, %v28, 0.0
  %v105 = vadd.f32 %v103, %v104
  %v106 = vsel %vm82, %v29, 0.0
  %v107 = vadd.f32 %v105, %v106
  %v108 = vsel %vm82, %v30, 0.0
  %v109 = vadd.f32 %v107, %v108
  %v110 = vsel %vm82, %v31, 0.0
  %v111 = vadd.f32 %v109, %v110
  %v112 = vsel %vm82, %v32, 0.0
  %v113 = vadd.f32 %v111, %v112
  %v114 = vsel %vm82, %v33, 0.0
  %v115 = vadd.f32 %v113, %v114
  %v116 = vsel %vm82, %v34, 0.0
  %v117 = vadd.f32 %v115, %v116
  %v118 = vsel %vm82, %v35, 0.0
  %v119 = vadd.f32 %v117, %v118
  %v120 = vsel %vm82, %v36, 0.0
  %v121 = vadd.f32 %v119, %v120
  %v122 = vsel %vm82, %v37, 0.0
  %v123 = vadd.f32 %v121, %v122
  %v124 = vsel %vm82, %v38, 0.0
  %v125 = vadd.f32 %v123, %v124
  %v126 = vsel %vm82, %v39, 0.0
  %v127 = vadd.f32 %v125, %v126
  %v128 = vsel %vm82, %v40, 0.0
  %v129 = vadd.f32 %v127, %v128
  %v130 = vsel %vm82, %v41, 0.0
  %v131 = vadd.f32 %v129, %v130
  %v132 = vsel %vm82, %v42, 0.0
  %v133 = vadd.f32 %v131, %v132
  %v134 = vsel %vm82, %v43, 0.0
  %v135 = vadd.f32 %v133, %v134
  %v136 = vsel %vm82, %v44, 0.0
  %v137 = vadd.f32 %v135, %v136
  %v138 = vsel %vm82, %v45, 0.0
  %v139 = vadd.f32 %v137, %v138
  %v140 = vsel %vm82, %v46, 0.0
  %v141 = vadd.f32 %v139, %v140
  %v142 = vsel %vm82, %v47, 0.0
  %v143 = vadd.f32 %v141, %v142
  %v144 = vsel %vm82, %v48, 0.0
  %v145 = vadd.f32 %v143, %v144
  %v146 = vsel %vm82, %v49, 0.0
  %v147 = vadd.f32 %v145, %v146
  %v148 = vsel %vm82, %v50, 0.0
  %v149 = vadd.f32 %v147, %v148
  %v150 = vsel %vm82, %v51, 0.0
  %v151 = vadd.f32 %v149, %v150
  %v152 = vsel %vm82, %v52, 0.0
  %v153 = vadd.f32 %v151, %v152
  %v154 = vsel %vm82, %v53, 0.0
  %v155 = vadd.f32 %v153, %v154
  %v156 = vsel %vm82, %v54, 0.0
  %v157 = vadd.f32 %v155, %v156
  %v158 = vsel %vm82, %v55, 0.0
  %v159 = vadd.f32 %v157, %v158
  %v160 = vsel %vm82, %v56, 0.0
  %v161 = vadd.f32 %v159, %v160
  %v162 = vsel %vm82, %v57, 0.0
  %v163 = vadd.f32 %v161, %v162
  %v164 = vsel %vm82, %v58, 0.0
  %v165 = vadd.f32 %v163, %v164
  %v166 = vsel %vm82, %v59, 0.0
  %v167 = vadd.f32 %v165, %v166
  %v168 = vsel %vm82, %v60, 0.0
  %v169 = vadd.f32 %v167, %v168
  %v170 = vsel %vm82, %v61, 0.0
  %v171 = vadd.f32 %v169, %v170
  %v172 = vsel %vm82, %v62, 0.0
  %v173 = vadd.f32 %v171, %v172
  %v174 = vsel %vm82, %v63, 0.0
  %v175 = vadd.f32 %v173, %v174
  %v176 = vsel %vm82, %v64, 0.0
  %v177 = vadd.f32 %v175, %v176
  %v178 = vsel %vm82, %v65, 0.0
  %v179 = vadd.f32 %v177, %v178
  %v180 = vsel %vm82, %v66, 0.0
  %v181 = vadd.f32 %v179, %v180
  %v182 = vsel %vm82, %v67, 0.0
  %v183 = vadd.f32 %v181, %v182
  %v184 = vsel %vm82, %v68, 0.0
  %v185 = vadd.f32 %v183, %v184
  %v186 = vsel %vm82, %v69, 0.0
  %v187 = vadd.f32 %v185, %v186
  %v188 = vsel %vm82, %v70, 0.0
  %v189 = vadd.f32 %v187, %v188
  %v190 = vsel %vm82, %v71, 0.0
  %v191 = vadd.f32 %v189, %v190
  %v192 = vsel %vm82, %v72, 0.0
  %v193 = vadd.f32 %v191, %v192
  %v194 = vsel %vm82, %v73, 0.0
  %v195 = vadd.f32 %v193, %v194
  %v196 = vsel %vm82, %v74, 0.0
  %v197 = vadd.f32 %v195, %v196
  %v198 = vsel %vm82, %v75, 0.0
  %v199 = vadd.f32 %v197, %v198
  %v200 = vsel %vm82, %v76, 0.0
  %v201 = vadd.f32 %v199, %v200
  %v202 = vsel %vm82, %v77, 0.0
  %v203 = vadd.f32 %v201, %v202
  %v204 = vsel %vm82, %v78, 0.0
  %v205 = vadd.f32 %v203, %v204
  %v206 = vsel %vm82, %v79, 0.0
  %v207 = vadd.f32 %v205, %v206
  %v208 = vsel %vm82, %v80, 0.0
  %v209 = vadd.f32 %v207, %v208
  %v210 = vrot.slane %v209, 4
  %v211 = vadd.f32 %v209, %v210
  %v212 = vrot.slane %v211, 2
  %v213 = vadd.f32 %v211, %v212
  %v214 = vrot.slane %v213, 1
  %v215 = vadd.f32 %v213, %v214
  %v216 = vadd.f32 %v81, %v215
  %vm217 = vcmask 122880
  %218 = vst.msk [vmem:[%s1] sm:$0x1] %vm217, %v216
  %v219 = vld [vmem:[%s2] sm:$0x1]
  %v220 = vmul.f32 %v17, %v17
  %v221 = vmul.f32 %v18, %v18
  %v222 = vmul.f32 %v19, %v19
  %v223 = vmul.f32 %v20, %v20
  %v224 = vmul.f32 %v21, %v21
  %v225 = vmul.f32 %v22, %v22
  %v226 = vmul.f32 %v23, %v23
  %v227 = vmul.f32 %v24, %v24
  %v228 = vmul.f32 %v25, %v25
  %v229 = vmul.f32 %v26, %v26
  %v230 = vmul.f32 %v27, %v27
  %v231 = vmul.f32 %v28, %v28
  %v232 = vmul.f32 %v29, %v29
  %v233 = vmul.f32 %v30, %v30
  %v234 = vmul.f32 %v31, %v31
  %v235 = vmul.f32 %v32, %v32
  %v236 = vmul.f32 %v33, %v33
  %v237 = vmul.f32 %v34, %v34
  %v238 = vmul.f32 %v35, %v35
  %v239 = vmul.f32 %v36, %v36
  %v240 = vmul.f32 %v37, %v37
  %v241 = vmul.f32 %v38, %v38
  %v242 = vmul.f32 %v39, %v39
  %v243 = vmul.f32 %v40, %v40
  %v244 = vmul.f32 %v41, %v41
  %v245 = vmul.f32 %v42, %v42
  %v246 = vmul.f32 %v43, %v43
  %v247 = vmul.f32 %v44, %v44
  %v248 = vmul.f32 %v45, %v45
  %v249 = vmul.f32 %v46, %v46
  %v250 = vmul.f32 %v47, %v47
  %v251 = vmul.f32 %v48, %v48
  %v252 = vmul.f32 %v49, %v49
  %v253 = vmul.f32 %v50, %v50
  %v254 = vmul.f32 %v51, %v51
  %v255 = vmul.f32 %v52, %v52
  %v256 = vmul.f32 %v53, %v53
  %v257 = vmul.f32 %v54, %v54
  %v258 = vmul.f32 %v55, %v55
  %v259 = vmul.f32 %v56, %v56
  %v260 = vmul.f32 %v57, %v57
  %v261 = vmul.f32 %v58, %v58
  %v262 = vmul.f32 %v59, %v59
  %v263 = vmul.f32 %v60, %v60
  %v264 = vmul.f32 %v61, %v61
  %v265 = vmul.f32 %v62, %v62
  %v266 = vmul.f32 %v63, %v63
  %v267 = vmul.f32 %v64, %v64
  %v268 = vmul.f32 %v65, %v65
  %v269 = vmul.f32 %v66, %v66
  %v270 = vmul.f32 %v67, %v67
  %v271 = vmul.f32 %v68, %v68
  %v272 = vmul.f32 %v69, %v69
  %v273 = vmul.f32 %v70, %v70
  %v274 = vmul.f32 %v71, %v71
  %v275 = vmul.f32 %v72, %v72
  %v276 = vmul.f32 %v73, %v73
  %v277 = vmul.f32 %v74, %v74
  %v278 = vmul.f32 %v75, %v75
  %v279 = vmul.f32 %v76, %v76
  %v280 = vmul.f32 %v77, %v77
  %v281 = vmul.f32 %v78, %v78
  %v282 = vmul.f32 %v79, %v79
  %v283 = vmul.f32 %v80, %v80
  %v284 = vsel %vm82, %v220, 0.0
  %v285 = vsel %vm82, %v221, 0.0
  %v286 = vadd.f32 %v284, %v285
  %v287 = vsel %vm82, %v222, 0.0
  %v288 = vadd.f32 %v286, %v287
  %v289 = vsel %vm82, %v223, 0.0
  %v290 = vadd.f32 %v288, %v289
  %v291 = vsel %vm82, %v224, 0.0
  %v292 = vadd.f32 %v290, %v291
  %v293 = vsel %vm82, %v225, 0.0
  %v294 = vadd.f32 %v292, %v293
  %v295 = vsel %vm82, %v226, 0.0
  %v296 = vadd.f32 %v294, %v295
  %v297 = vsel %vm82, %v227, 0.0
  %v298 = vadd.f32 %v296, %v297
  %v299 = vsel %vm82, %v228, 0.0
  %v300 = vadd.f32 %v298, %v299
  %v301 = vsel %vm82, %v229, 0.0
  %v302 = vadd.f32 %v300, %v301
  %v303 = vsel %vm82, %v230, 0.0
  %v304 = vadd.f32 %v302, %v303
  %v305 = vsel %vm82, %v231, 0.0
  %v306 = vadd.f32 %v304, %v305
  %v307 = vsel %vm82, %v232, 0.0
  %v308 = vadd.f32 %v306, %v307
  %v309 = vsel %vm82, %v233, 0.0
  %v310 = vadd.f32 %v308, %v309
  %v311 = vsel %vm82, %v234, 0.0
  %v312 = vadd.f32 %v310, %v311
  %v313 = vsel %vm82, %v235, 0.0
  %v314 = vadd.f32 %v312, %v313
  %v315 = vsel %vm82, %v236, 0.0
  %v316 = vadd.f32 %v314, %v315
  %v317 = vsel %vm82, %v237, 0.0
  %v318 = vadd.f32 %v316, %v317
  %v319 = vsel %vm82, %v238, 0.0
  %v320 = vadd.f32 %v318, %v319
  %v321 = vsel %vm82, %v239, 0.0
  %v322 = vadd.f32 %v320, %v321
  %v323 = vsel %vm82, %v240, 0.0
  %v324 = vadd.f32 %v322, %v323
  %v325 = vsel %vm82, %v241, 0.0
  %v326 = vadd.f32 %v324, %v325
  %v327 = vsel %vm82, %v242, 0.0
  %v328 = vadd.f32 %v326, %v327
  %v329 = vsel %vm82, %v243, 0.0
  %v330 = vadd.f32 %v328, %v329
  %v331 = vsel %vm82, %v244, 0.0
  %v332 = vadd.f32 %v330, %v331
  %v333 = vsel %vm82, %v245, 0.0
  %v334 = vadd.f32 %v332, %v333
  %v335 = vsel %vm82, %v246, 0.0
  %v336 = vadd.f32 %v334, %v335
  %v337 = vsel %vm82, %v247, 0.0
  %v338 = vadd.f32 %v336, %v337
  %v339 = vsel %vm82, %v248, 0.0
  %v340 = vadd.f32 %v338, %v339
  %v341 = vsel %vm82, %v249, 0.0
  %v342 = vadd.f32 %v340, %v341
  %v343 = vsel %vm82, %v250, 0.0
  %v344 = vadd.f32 %v342, %v343
  %v345 = vsel %vm82, %v251, 0.0
  %v346 = vadd.f32 %v344, %v345
  %v347 = vsel %vm82, %v252, 0.0
  %v348 = vadd.f32 %v346, %v347
  %v349 = vsel %vm82, %v253, 0.0
  %v350 = vadd.f32 %v348, %v349
  %v351 = vsel %vm82, %v254, 0.0
  %v352 = vadd.f32 %v350, %v351
  %v353 = vsel %vm82, %v255, 0.0
  %v354 = vadd.f32 %v352, %v353
  %v355 = vsel %vm82, %v256, 0.0
  %v356 = vadd.f32 %v354, %v355
  %v357 = vsel %vm82, %v257, 0.0
  %v358 = vadd.f32 %v356, %v357
  %v359 = vsel %vm82, %v258, 0.0
  %v360 = vadd.f32 %v358, %v359
  %v361 = vsel %vm82, %v259, 0.0
  %v362 = vadd.f32 %v360, %v361
  %v363 = vsel %vm82, %v260, 0.0
  %v364 = vadd.f32 %v362, %v363
  %v365 = vsel %vm82, %v261, 0.0
  %v366 = vadd.f32 %v364, %v365
  %v367 = vsel %vm82, %v262, 0.0
  %v368 = vadd.f32 %v366, %v367
  %v369 = vsel %vm82, %v263, 0.0
  %v370 = vadd.f32 %v368, %v369
  %v371 = vsel %vm82, %v264, 0.0
  %v372 = vadd.f32 %v370, %v371
  %v373 = vsel %vm82, %v265, 0.0
  %v374 = vadd.f32 %v372, %v373
  %v375 = vsel %vm82, %v266, 0.0
  %v376 = vadd.f32 %v374, %v375
  %v377 = vsel %vm82, %v267, 0.0
  %v378 = vadd.f32 %v376, %v377
  %v379 = vsel %vm82, %v268, 0.0
  %v380 = vadd.f32 %v378, %v379
  %v381 = vsel %vm82, %v269, 0.0
  %v382 = vadd.f32 %v380, %v381
  %v383 = vsel %vm82, %v270, 0.0
  %v384 = vadd.f32 %v382, %v383
  %v385 = vsel %vm82, %v271, 0.0
  %v386 = vadd.f32 %v384, %v385
  %v387 = vsel %vm82, %v272, 0.0
  %v388 = vadd.f32 %v386, %v387
  %v389 = vsel %vm82, %v273, 0.0
  %v390 = vadd.f32 %v388, %v389
  %v391 = vsel %vm82, %v274, 0.0
  %v392 = vadd.f32 %v390, %v391
  %v393 = vsel %vm82, %v275, 0.0
  %v394 = vadd.f32 %v392, %v393
  %v395 = vsel %vm82, %v276, 0.0
  %v396 = vadd.f32 %v394, %v395
  %v397 = vsel %vm82, %v277, 0.0
  %v398 = vadd.f32 %v396, %v397
  %v399 = vsel %vm82, %v278, 0.0
  %v400 = vadd.f32 %v398, %v399
  %v401 = vsel %vm82, %v279, 0.0
  %v402 = vadd.f32 %v400, %v401
  %v403 = vsel %vm82, %v280, 0.0
  %v404 = vadd.f32 %v402, %v403
  %v405 = vsel %vm82, %v281, 0.0
  %v406 = vadd.f32 %v404, %v405
  %v407 = vsel %vm82, %v282, 0.0
  %v408 = vadd.f32 %v406, %v407
  %v409 = vsel %vm82, %v283, 0.0
  %v410 = vadd.f32 %v408, %v409
  %v411 = vrot.slane %v410, 4
  %v412 = vadd.f32 %v410, %v411
  %v413 = vrot.slane %v412, 2
  %v414 = vadd.f32 %v412, %v413
  %v415 = vrot.slane %v414, 1
  %v416 = vadd.f32 %v414, %v415
  %v417 = vadd.f32 %v219, %v416
  %418 = vst.msk [vmem:[%s2] sm:$0x1] %vm217, %v417
  // Predicated region
  $region10: #{_lambda_.20} parent=0 // pred_check
    _
  $region11: #{_lambda_.20} parent=0 // pred_check_branch
    %420 = sbr.rel (0) target = $region13
  $region12: #{_lambda_.20} parent=0 // pred_region
    _
  $region13: #{_lambda_.20} parent=0 // pred_fallthru
    _
  // Predicated region
  $region14: #{_lambda_.20} parent=0 // pred_check
    _
  $region15: #{_lambda_.20} parent=0 // pred_check_branch
    %422 = sbr.rel (0) target = $region17
  $region16: #{_lambda_.20} parent=0 // pred_region
    _
  $region17: #{_lambda_.20} parent=0 // pred_fallthru
    _
  // Predicated region
  $region18: #{_lambda_.20} parent=0 // pred_check
    _
  $region19: #{_lambda_.20} parent=0 // pred_check_branch
    %424 = sbr.rel (0) target = $region21
  $region20: #{_lambda_.20} parent=0 // pred_region
    _
  $region21: #{_lambda_.20} parent=0 // pred_fallthru
    _
  // Predicated region
  $region22: #{_lambda_.20} parent=0 // pred_check
    _
  $region23: #{_lambda_.20} parent=0 // pred_check_branch
    %426 = sbr.rel (0) target = $region25
  $region24: #{_lambda_.20} parent=0 // pred_region
    _
  $region25: #{_lambda_.20} parent=0 // pred_fallthru
    _

// kernel: _lambda_.21
$region0: #{_lambda_.21}
  #allocation0 [shape = 'u32[]', space=smem, size = 0x4, offset = 0x4, fixed_abs, tag = 'smem constant byte address 0x4 - core index']
  #allocation1 [shape = 'u32[144,128]{1,0:T(1,128)}', space=vmem, size = 0x12000, scoped, tag = 'internal scratch']
  %s0 = inlined_call_operand.vmem [shape: f32[512,16], index: 0, kind: input, shape index: {}]
  %s1 = inlined_call_operand.vmem [shape: f32[1,16], index: 1, kind: input, shape index: {}]
  %s2 = inlined_call_operand.vmem [shape: f32[1,16], index: 2, kind: input, shape index: {}]
  %s3 = inlined_call_operand.vmem [shape: bf16[512,16], index: 3, kind: output, shape index: {}]
  %s4 = sld [smem:[#allocation0]]
  $region22: #{_lambda_.21} parent=0
    _
  %s6 = ssub.s32 1, %s4
  %s7 = scalar_select 0, %s6, %s4
  // Predicated region
  $region2: #{_lambda_.21} parent=0 // pred_check
    _
  $region3: #{_lambda_.21} parent=0 // pred_check_branch
    %9 = sbr.rel (0) target = $region5
  $region4: #{_lambda_.21} parent=0 // pred_region
    _
  $region5: #{_lambda_.21} parent=0 // pred_fallthru
    _
  // Predicated region
  $region6: #{_lambda_.21} parent=0 // pred_check
    _
  $region7: #{_lambda_.21} parent=0 // pred_check_branch
    %11 = sbr.rel (0) target = $region9
  $region8: #{_lambda_.21} parent=0 // pred_region
    _
  $region9: #{_lambda_.21} parent=0 // pred_fallthru
    _
  // Predicated region
  $region10: #{_lambda_.21} parent=0 // pred_check
    _
  $region11: #{_lambda_.21} parent=0 // pred_check_branch
    %13 = sbr.rel (0) target = $region13
  $region12: #{_lambda_.21} parent=0 // pred_region
    _
  $region13: #{_lambda_.21} parent=0 // pred_fallthru
    _
  %v14 = vld [vmem:[%s0] sm:$0xff]
  %v15 = vld [vmem:[%s0 + $0x8] sm:$0xff]
  %v16 = vld [vmem:[%s0 + $0x10] sm:$0xff]
  %v17 = vld [vmem:[%s0 + $0x18] sm:$0xff]
  %v18 = vld [vmem:[%s0 + $0x20] sm:$0xff]
  %v19 = vld [vmem:[%s0 + $0x28] sm:$0xff]
  %v20 = vld [vmem:[%s0 + $0x30] sm:$0xff]
  %v21 = vld [vmem:[%s0 + $0x38] sm:$0xff]
  %v22 = vld [vmem:[%s0 + $0x40] sm:$0xff]
  %v23 = vld [vmem:[%s0 + $0x48] sm:$0xff]
  %v24 = vld [vmem:[%s0 + $0x50] sm:$0xff]
  %v25 = vld [vmem:[%s0 + $0x58] sm:$0xff]
  %v26 = vld [vmem:[%s0 + $0x60] sm:$0xff]
  %v27 = vld [vmem:[%s0 + $0x68] sm:$0xff]
  %v28 = vld [vmem:[%s0 + $0x70] sm:$0xff]
  %v29 = vld [vmem:[%s0 + $0x78] sm:$0xff]
  %v30 = vld [vmem:[%s0 + $0x80] sm:$0xff]
  %v31 = vld [vmem:[%s0 + $0x88] sm:$0xff]
  %v32 = vld [vmem:[%s0 + $0x90] sm:$0xff]
  %v33 = vld [vmem:[%s0 + $0x98] sm:$0xff]
  %v34 = vld [vmem:[%s0 + $0xa0] sm:$0xff]
  %v35 = vld [vmem:[%s0 + $0xa8] sm:$0xff]
  %v36 = vld [vmem:[%s0 + $0xb0] sm:$0xff]
  %v37 = vld [vmem:[%s0 + $0xb8] sm:$0xff]
  %v38 = vld [vmem:[%s0 + $0xc0] sm:$0xff]
  %v39 = vld [vmem:[%s0 + $0xc8] sm:$0xff]
  %v40 = vld [vmem:[%s0 + $0xd0] sm:$0xff]
  %v41 = vld [vmem:[%s0 + $0xd8] sm:$0xff]
  %v42 = vld [vmem:[%s0 + $0xe0] sm:$0xff]
  %v43 = vld [vmem:[%s0 + $0xe8] sm:$0xff]
  %v44 = vld [vmem:[%s0 + $0xf0] sm:$0xff]
  %v45 = vld [vmem:[%s0 + $0xf8] sm:$0xff]
  %v46 = vld [vmem:[%s0 + $0x100] sm:$0xff]
  %v47 = vld [vmem:[%s0 + $0x108] sm:$0xff]
  %v48 = vld [vmem:[%s0 + $0x110] sm:$0xff]
  %v49 = vld [vmem:[%s0 + $0x118] sm:$0xff]
  %v50 = vld [vmem:[%s0 + $0x120] sm:$0xff]
  %v51 = vld [vmem:[%s0 + $0x128] sm:$0xff]
  %v52 = vld [vmem:[%s0 + $0x130] sm:$0xff]
  %v53 = vld [vmem:[%s0 + $0x138] sm:$0xff]
  %v54 = vld [vmem:[%s0 + $0x140] sm:$0xff]
  %v55 = vld [vmem:[%s0 + $0x148] sm:$0xff]
  %v56 = vld [vmem:[%s0 + $0x150] sm:$0xff]
  %v57 = vld [vmem:[%s0 + $0x158] sm:$0xff]
  %v58 = vld [vmem:[%s0 + $0x160] sm:$0xff]
  %v59 = vld [vmem:[%s0 + $0x168] sm:$0xff]
  %v60 = vld [vmem:[%s0 + $0x170] sm:$0xff]
  %v61 = vld [vmem:[%s0 + $0x178] sm:$0xff]
  %v62 = vld [vmem:[%s0 + $0x180] sm:$0xff]
  %v63 = vld [vmem:[%s0 + $0x188] sm:$0xff]
  %v64 = vld [vmem:[%s0 + $0x190] sm:$0xff]
  %v65 = vld [vmem:[%s0 + $0x198] sm:$0xff]
  %v66 = vld [vmem:[%s0 + $0x1a0] sm:$0xff]
  %v67 = vld [vmem:[%s0 + $0x1a8] sm:$0xff]
  %v68 = vld [vmem:[%s0 + $0x1b0] sm:$0xff]
  %v69 = vld [vmem:[%s0 + $0x1b8] sm:$0xff]
  %v70 = vld [vmem:[%s0 + $0x1c0] sm:$0xff]
  %v71 = vld [vmem:[%s0 + $0x1c8] sm:$0xff]
  %v72 = vld [vmem:[%s0 + $0x1d0] sm:$0xff]
  %v73 = vld [vmem:[%s0 + $0x1d8] sm:$0xff]
  %v74 = vld [vmem:[%s0 + $0x1e0] sm:$0xff]
  %v75 = vld [vmem:[%s0 + $0x1e8] sm:$0xff]
  %v76 = vld [vmem:[%s0 + $0x1f0] sm:$0xff]
  %v77 = vld [vmem:[%s0 + $0x1f8] sm:$0xff]
  %v78 = vld [vmem:[%s1] sm:$0x1]
  %v80 = vlaneseq
  %v81 = vshrl.u32 %v80, 7
  %v82 = vsub.s32 0, %v81
  %v83 = vrot.slane %v78, %v82
  %v85 = vmul.f32 %v14, %v83
  %v86 = vmul.f32 %v15, %v83
  %v87 = vmul.f32 %v16, %v83
  %v88 = vmul.f32 %v17, %v83
  %v89 = vmul.f32 %v18, %v83
  %v90 = vmul.f32 %v19, %v83
  %v91 = vmul.f32 %v20, %v83
  %v92 = vmul.f32 %v21, %v83
  %v93 = vmul.f32 %v22, %v83
  %v94 = vmul.f32 %v23, %v83
  %v95 = vmul.f32 %v24, %v83
  %v96 = vmul.f32 %v25, %v83
  %v97 = vmul.f32 %v26, %v83
  %v98 = vmul.f32 %v27, %v83
  %v99 = vmul.f32 %v28, %v83
  %v100 = vmul.f32 %v29, %v83
  %v101 = vmul.f32 %v30, %v83
  %v102 = vmul.f32 %v31, %v83
  %v103 = vmul.f32 %v32, %v83
  %v104 = vmul.f32 %v33, %v83
  %v105 = vmul.f32 %v34, %v83
  %v106 = vmul.f32 %v35, %v83
  %v107 = vmul.f32 %v36, %v83
  %v108 = vmul.f32 %v37, %v83
  %v109 = vmul.f32 %v38, %v83
  %v110 = vmul.f32 %v39, %v83
  %v111 = vmul.f32 %v40, %v83
  %v112 = vmul.f32 %v41, %v83
  %v113 = vmul.f32 %v42, %v83
  %v114 = vmul.f32 %v43, %v83
  %v115 = vmul.f32 %v44, %v83
  %v116 = vmul.f32 %v45, %v83
  %v117 = vmul.f32 %v46, %v83
  %v118 = vmul.f32 %v47, %v83
  %v119 = vmul.f32 %v48, %v83
  %v120 = vmul.f32 %v49, %v83
  %v121 = vmul.f32 %v50, %v83
  %v122 = vmul.f32 %v51, %v83
  %v123 = vmul.f32 %v52, %v83
  %v124 = vmul.f32 %v53, %v83
  %v125 = vmul.f32 %v54, %v83
  %v126 = vmul.f32 %v55, %v83
  %v127 = vmul.f32 %v56, %v83
  %v128 = vmul.f32 %v57, %v83
  %v129 = vmul.f32 %v58, %v83
  %v130 = vmul.f32 %v59, %v83
  %v131 = vmul.f32 %v60, %v83
  %v132 = vmul.f32 %v61, %v83
  %v133 = vmul.f32 %v62, %v83
  %v134 = vmul.f32 %v63, %v83
  %v135 = vmul.f32 %v64, %v83
  %v136 = vmul.f32 %v65, %v83
  %v137 = vmul.f32 %v66, %v83
  %v138 = vmul.f32 %v67, %v83
  %v139 = vmul.f32 %v68, %v83
  %v140 = vmul.f32 %v69, %v83
  %v141 = vmul.f32 %v70, %v83
  %v142 = vmul.f32 %v71, %v83
  %v143 = vmul.f32 %v72, %v83
  %v144 = vmul.f32 %v73, %v83
  %v145 = vmul.f32 %v74, %v83
  %v146 = vmul.f32 %v75, %v83
  %v147 = vmul.f32 %v76, %v83
  %v148 = vmul.f32 %v77, %v83
  %v149 = vld [vmem:[%s2] sm:$0x1]
  %v151 = vlaneseq
  %v152 = vshrl.u32 %v151, 7
  %v153 = vsub.s32 0, %v152
  %v154 = vrot.slane %v149, %v153
  %v156 = vadd.f32 %v85, %v154
  %v157 = vadd.f32 %v86, %v154
  %v158 = vadd.f32 %v87, %v154
  %v159 = vadd.f32 %v88, %v154
  %v160 = vadd.f32 %v89, %v154
  %v161 = vadd.f32 %v90, %v154
  %v162 = vadd.f32 %v91, %v154
  %v163 = vadd.f32 %v92, %v154
  %v164 = vadd.f32 %v93, %v154
  %v165 = vadd.f32 %v94, %v154
  %v166 = vadd.f32 %v95, %v154
  %v167 = vadd.f32 %v96, %v154
  %v168 = vadd.f32 %v97, %v154
  %v169 = vadd.f32 %v98, %v154
  %v170 = vadd.f32 %v99, %v154
  %v171 = vadd.f32 %v100, %v154
  %v172 = vadd.f32 %v101, %v154
  %v173 = vadd.f32 %v102, %v154
  %v174 = vadd.f32 %v103, %v154
  %v175 = vadd.f32 %v104, %v154
  %v176 = vadd.f32 %v105, %v154
  %v177 = vadd.f32 %v106, %v154
  %v178 = vadd.f32 %v107, %v154
  %v179 = vadd.f32 %v108, %v154
  %v180 = vadd.f32 %v109, %v154
  %v181 = vadd.f32 %v110, %v154
  %v182 = vadd.f32 %v111, %v154
  %v183 = vadd.f32 %v112, %v154
  %v184 = vadd.f32 %v113, %v154
  %v185 = vadd.f32 %v114, %v154
  %v186 = vadd.f32 %v115, %v154
  %v187 = vadd.f32 %v116, %v154
  %v188 = vadd.f32 %v117, %v154
  %v189 = vadd.f32 %v118, %v154
  %v190 = vadd.f32 %v119, %v154
  %v191 = vadd.f32 %v120, %v154
  %v192 = vadd.f32 %v121, %v154
  %v193 = vadd.f32 %v122, %v154
  %v194 = vadd.f32 %v123, %v154
  %v195 = vadd.f32 %v124, %v154
  %v196 = vadd.f32 %v125, %v154
  %v197 = vadd.f32 %v126, %v154
  %v198 = vadd.f32 %v127, %v154
  %v199 = vadd.f32 %v128, %v154
  %v200 = vadd.f32 %v129, %v154
  %v201 = vadd.f32 %v130, %v154
  %v202 = vadd.f32 %v131, %v154
  %v203 = vadd.f32 %v132, %v154
  %v204 = vadd.f32 %v133, %v154
  %v205 = vadd.f32 %v134, %v154
  %v206 = vadd.f32 %v135, %v154
  %v207 = vadd.f32 %v136, %v154
  %v208 = vadd.f32 %v137, %v154
  %v209 = vadd.f32 %v138, %v154
  %v210 = vadd.f32 %v139, %v154
  %v211 = vadd.f32 %v140, %v154
  %v212 = vadd.f32 %v141, %v154
  %v213 = vadd.f32 %v142, %v154
  %v214 = vadd.f32 %v143, %v154
  %v215 = vadd.f32 %v144, %v154
  %v216 = vadd.f32 %v145, %v154
  %v217 = vadd.f32 %v146, %v154
  %v218 = vadd.f32 %v147, %v154
  %v219 = vadd.f32 %v148, %v154
  %vm220 = vcmp.ge.f32.partialorder %v156, 0.0
  %vm221 = vcmp.ge.f32.partialorder %v157, 0.0
  %vm222 = vcmp.ge.f32.partialorder %v158, 0.0
  %vm223 = vcmp.ge.f32.partialorder %v159, 0.0
  %vm224 = vcmp.ge.f32.partialorder %v160, 0.0
  %vm225 = vcmp.ge.f32.partialorder %v161, 0.0
  %vm226 = vcmp.ge.f32.partialorder %v162, 0.0
  %vm227 = vcmp.ge.f32.partialorder %v163, 0.0
  %vm228 = vcmp.ge.f32.partialorder %v164, 0.0
  %vm229 = vcmp.ge.f32.partialorder %v165, 0.0
  %vm230 = vcmp.ge.f32.partialorder %v166, 0.0
  %vm231 = vcmp.ge.f32.partialorder %v167, 0.0
  %vm232 = vcmp.ge.f32.partialorder %v168, 0.0
  %vm233 = vcmp.ge.f32.partialorder %v169, 0.0
  %vm234 = vcmp.ge.f32.partialorder %v170, 0.0
  %vm235 = vcmp.ge.f32.partialorder %v171, 0.0
  %vm236 = vcmp.ge.f32.partialorder %v172, 0.0
  %vm237 = vcmp.ge.f32.partialorder %v173, 0.0
  %vm238 = vcmp.ge.f32.partialorder %v174, 0.0
  %vm239 = vcmp.ge.f32.partialorder %v175, 0.0
  %vm240 = vcmp.ge.f32.partialorder %v176, 0.0
  %vm241 = vcmp.ge.f32.partialorder %v177, 0.0
  %vm242 = vcmp.ge.f32.partialorder %v178, 0.0
  %vm243 = vcmp.ge.f32.partialorder %v179, 0.0
  %vm244 = vcmp.ge.f32.partialorder %v180, 0.0
  %vm245 = vcmp.ge.f32.partialorder %v181, 0.0
  %vm246 = vcmp.ge.f32.partialorder %v182, 0.0
  %vm247 = vcmp.ge.f32.partialorder %v183, 0.0
  %vm248 = vcmp.ge.f32.partialorder %v184, 0.0
  %vm249 = vcmp.ge.f32.partialorder %v185, 0.0
  %vm250 = vcmp.ge.f32.partialorder %v186, 0.0
  %vm251 = vcmp.ge.f32.partialorder %v187, 0.0
  %vm252 = vcmp.ge.f32.partialorder %v188, 0.0
  %vm253 = vcmp.ge.f32.partialorder %v189, 0.0
  %vm254 = vcmp.ge.f32.partialorder %v190, 0.0
  %vm255 = vcmp.ge.f32.partialorder %v191, 0.0
  %vm256 = vcmp.ge.f32.partialorder %v192, 0.0
  %vm257 = vcmp.ge.f32.partialorder %v193, 0.0
  %vm258 = vcmp.ge.f32.partialorder %v194, 0.0
  %vm259 = vcmp.ge.f32.partialorder %v195, 0.0
  %vm260 = vcmp.ge.f32.partialorder %v196, 0.0
  %vm261 = vcmp.ge.f32.partialorder %v197, 0.0
  %vm262 = vcmp.ge.f32.partialorder %v198, 0.0
  %vm263 = vcmp.ge.f32.partialorder %v199, 0.0
  %vm264 = vcmp.ge.f32.partialorder %v200, 0.0
  %vm265 = vcmp.ge.f32.partialorder %v201, 0.0
  %vm266 = vcmp.ge.f32.partialorder %v202, 0.0
  %vm267 = vcmp.ge.f32.partialorder %v203, 0.0
  %vm268 = vcmp.ge.f32.partialorder %v204, 0.0
  %vm269 = vcmp.ge.f32.partialorder %v205, 0.0
  %vm270 = vcmp.ge.f32.partialorder %v206, 0.0
  %vm271 = vcmp.ge.f32.partialorder %v207, 0.0
  %vm272 = vcmp.ge.f32.partialorder %v208, 0.0
  %vm273 = vcmp.ge.f32.partialorder %v209, 0.0
  %vm274 = vcmp.ge.f32.partialorder %v210, 0.0
  %vm275 = vcmp.ge.f32.partialorder %v211, 0.0
  %vm276 = vcmp.ge.f32.partialorder %v212, 0.0
  %vm277 = vcmp.ge.f32.partialorder %v213, 0.0
  %vm278 = vcmp.ge.f32.partialorder %v214, 0.0
  %vm279 = vcmp.ge.f32.partialorder %v215, 0.0
  %vm280 = vcmp.ge.f32.partialorder %v216, 0.0
  %vm281 = vcmp.ge.f32.partialorder %v217, 0.0
  %vm282 = vcmp.ge.f32.partialorder %v218, 0.0
  %vm283 = vcmp.ge.f32.partialorder %v219, 0.0
  %v284 = vmul.f32 %v156, 0.2
  %v285 = vmul.f32 %v157, 0.2
  %v286 = vmul.f32 %v158, 0.2
  %v287 = vmul.f32 %v159, 0.2
  %v288 = vmul.f32 %v160, 0.2
  %v289 = vmul.f32 %v161, 0.2
  %v290 = vmul.f32 %v162, 0.2
  %v291 = vmul.f32 %v163, 0.2
  %v292 = vmul.f32 %v164, 0.2
  %v293 = vmul.f32 %v165, 0.2
  %v294 = vmul.f32 %v166, 0.2
  %v295 = vmul.f32 %v167, 0.2
  %v296 = vmul.f32 %v168, 0.2
  %v297 = vmul.f32 %v169, 0.2
  %v298 = vmul.f32 %v170, 0.2
  %v299 = vmul.f32 %v171, 0.2
  %v300 = vmul.f32 %v172, 0.2
  %v301 = vmul.f32 %v173, 0.2
  %v302 = vmul.f32 %v174, 0.2
  %v303 = vmul.f32 %v175, 0.2
  %v304 = vmul.f32 %v176, 0.2
  %v305 = vmul.f32 %v177, 0.2
  %v306 = vmul.f32 %v178, 0.2
  %v307 = vmul.f32 %v179, 0.2
  %v308 = vmul.f32 %v180, 0.2
  %v309 = vmul.f32 %v181, 0.2
  %v310 = vmul.f32 %v182, 0.2
  %v311 = vmul.f32 %v183, 0.2
  %v312 = vmul.f32 %v184, 0.2
  %v313 = vmul.f32 %v185, 0.2
  %v314 = vmul.f32 %v186, 0.2
  %v315 = vmul.f32 %v187, 0.2
  %v316 = vmul.f32 %v188, 0.2
  %v317 = vmul.f32 %v189, 0.2
  %v318 = vmul.f32 %v190, 0.2
  %v319 = vmul.f32 %v191, 0.2
  %v320 = vmul.f32 %v192, 0.2
  %v321 = vmul.f32 %v193, 0.2
  %v322 = vmul.f32 %v194, 0.2
  %v323 = vmul.f32 %v195, 0.2
  %v324 = vmul.f32 %v196, 0.2
  %v325 = vmul.f32 %v197, 0.2
  %v326 = vmul.f32 %v198, 0.2
  %v327 = vmul.f32 %v199, 0.2
  %v328 = vmul.f32 %v200, 0.2
  %v329 = vmul.f32 %v201, 0.2
  %v330 = vmul.f32 %v202, 0.2
  %v331 = vmul.f32 %v203, 0.2
  %v332 = vmul.f32 %v204, 0.2
  %v333 = vmul.f32 %v205, 0.2
  %v334 = vmul.f32 %v206, 0.2
  %v335 = vmul.f32 %v207, 0.2
  %v336 = vmul.f32 %v208, 0.2
  %v337 = vmul.f32 %v209, 0.2
  %v338 = vmul.f32 %v210, 0.2
  %v339 = vmul.f32 %v211, 0.2
  %v340 = vmul.f32 %v212, 0.2
  %v341 = vmul.f32 %v213, 0.2
  %v342 = vmul.f32 %v214, 0.2
  %v343 = vmul.f32 %v215, 0.2
  %v344 = vmul.f32 %v216, 0.2
  %v345 = vmul.f32 %v217, 0.2
  %v346 = vmul.f32 %v218, 0.2
  %v347 = vmul.f32 %v219, 0.2
  %v348 = vsel %vm220, %v156, %v284
  %v349 = vsel %vm221, %v157, %v285
  %v350 = vsel %vm222, %v158, %v286
  %v351 = vsel %vm223, %v159, %v287
  %v352 = vsel %vm224, %v160, %v288
  %v353 = vsel %vm225, %v161, %v289
  %v354 = vsel %vm226, %v162, %v290
  %v355 = vsel %vm227, %v163, %v291
  %v356 = vsel %vm228, %v164, %v292
  %v357 = vsel %vm229, %v165, %v293
  %v358 = vsel %vm230, %v166, %v294
  %v359 = vsel %vm231, %v167, %v295
  %v360 = vsel %vm232, %v168, %v296
  %v361 = vsel %vm233, %v169, %v297
  %v362 = vsel %vm234, %v170, %v298
  %v363 = vsel %vm235, %v171, %v299
  %v364 = vsel %vm236, %v172, %v300
  %v365 = vsel %vm237, %v173, %v301
  %v366 = vsel %vm238, %v174, %v302
  %v367 = vsel %vm239, %v175, %v303
  %v368 = vsel %vm240, %v176, %v304
  %v369 = vsel %vm241, %v177, %v305
  %v370 = vsel %vm242, %v178, %v306
  %v371 = vsel %vm243, %v179, %v307
  %v372 = vsel %vm244, %v180, %v308
  %v373 = vsel %vm245, %v181, %v309
  %v374 = vsel %vm246, %v182, %v310
  %v375 = vsel %vm247, %v183, %v311
  %v376 = vsel %vm248, %v184, %v312
  %v377 = vsel %vm249, %v185, %v313
  %v378 = vsel %vm250, %v186, %v314
  %v379 = vsel %vm251, %v187, %v315
  %v380 = vsel %vm252, %v188, %v316
  %v381 = vsel %vm253, %v189, %v317
  %v382 = vsel %vm254, %v190, %v318
  %v383 = vsel %vm255, %v191, %v319
  %v384 = vsel %vm256, %v192, %v320
  %v385 = vsel %vm257, %v193, %v321
  %v386 = vsel %vm258, %v194, %v322
  %v387 = vsel %vm259, %v195, %v323
  %v388 = vsel %vm260, %v196, %v324
  %v389 = vsel %vm261, %v197, %v325
  %v390 = vsel %vm262, %v198, %v326
  %v391 = vsel %vm263, %v199, %v327
  %v392 = vsel %vm264, %v200, %v328
  %v393 = vsel %vm265, %v201, %v329
  %v394 = vsel %vm266, %v202, %v330
  %v395 = vsel %vm267, %v203, %v331
  %v396 = vsel %vm268, %v204, %v332
  %v397 = vsel %vm269, %v205, %v333
  %v398 = vsel %vm270, %v206, %v334
  %v399 = vsel %vm271, %v207, %v335
  %v400 = vsel %vm272, %v208, %v336
  %v401 = vsel %vm273, %v209, %v337
  %v402 = vsel %vm274, %v210, %v338
  %v403 = vsel %vm275, %v211, %v339
  %v404 = vsel %vm276, %v212, %v340
  %v405 = vsel %vm277, %v213, %v341
  %v406 = vsel %vm278, %v214, %v342
  %v407 = vsel %vm279, %v215, %v343
  %v408 = vsel %vm280, %v216, %v344
  %v409 = vsel %vm281, %v217, %v345
  %v410 = vsel %vm282, %v218, %v346
  %v411 = vsel %vm283, %v219, %v347
  %v412 = vpack.c.bf16 %v349, %v348
  %v413 = vpack.c.bf16 %v351, %v350
  %v414 = vpack.c.bf16 %v353, %v352
  %v415 = vpack.c.bf16 %v355, %v354
  %v416 = vpack.c.bf16 %v357, %v356
  %v417 = vpack.c.bf16 %v359, %v358
  %v418 = vpack.c.bf16 %v361, %v360
  %v419 = vpack.c.bf16 %v363, %v362
  %v420 = vpack.c.bf16 %v365, %v364
  %v421 = vpack.c.bf16 %v367, %v366
  %v422 = vpack.c.bf16 %v369, %v368
  %v423 = vpack.c.bf16 %v371, %v370
  %v424 = vpack.c.bf16 %v373, %v372
  %v425 = vpack.c.bf16 %v375, %v374
  %v426 = vpack.c.bf16 %v377, %v376
  %v427 = vpack.c.bf16 %v379, %v378
  %v428 = vpack.c.bf16 %v381, %v380
  %v429 = vpack.c.bf16 %v383, %v382
  %v430 = vpack.c.bf16 %v385, %v384
  %v431 = vpack.c.bf16 %v387, %v386
  %v432 = vpack.c.bf16 %v389, %v388
  %v433 = vpack.c.bf16 %v391, %v390
  %v434 = vpack.c.bf16 %v393, %v392
  %v435 = vpack.c.bf16 %v395, %v394
  %v436 = vpack.c.bf16 %v397, %v396
  %v437 = vpack.c.bf16 %v399, %v398
  %v438 = vpack.c.bf16 %v401, %v400
  %v439 = vpack.c.bf16 %v403, %v402
  %v440 = vpack.c.bf16 %v405, %v404
  %v441 = vpack.c.bf16 %v407, %v406
  %v442 = vpack.c.bf16 %v409, %v408
  %v443 = vpack.c.bf16 %v411, %v410
  %v476 = vunpack.c.l.b16 %v412
  %v477 = vunpack.c.h.b16 %v412
  %v478 = vunpack.c.l.b16 %v413
  %v479 = vunpack.c.h.b16 %v413
  %v480 = vunpack.c.l.b16 %v414
  %v481 = vunpack.c.h.b16 %v414
  %v482 = vunpack.c.l.b16 %v415
  %v483 = vunpack.c.h.b16 %v415
  %v484 = vunpack.c.l.b16 %v416
  %v485 = vunpack.c.h.b16 %v416
  %v486 = vunpack.c.l.b16 %v417
  %v487 = vunpack.c.h.b16 %v417
  %v488 = vunpack.c.l.b16 %v418
  %v489 = vunpack.c.h.b16 %v418
  %v490 = vunpack.c.l.b16 %v419
  %v491 = vunpack.c.h.b16 %v419
  %v492 = vunpack.c.l.b16 %v420
  %v493 = vunpack.c.h.b16 %v420
  %v494 = vunpack.c.l.b16 %v421
  %v495 = vunpack.c.h.b16 %v421
  %v496 = vunpack.c.l.b16 %v422
  %v497 = vunpack.c.h.b16 %v422
  %v498 = vunpack.c.l.b16 %v423
  %v499 = vunpack.c.h.b16 %v423
  %v500 = vunpack.c.l.b16 %v424
  %v501 = vunpack.c.h.b16 %v424
  %v502 = vunpack.c.l.b16 %v425
  %v503 = vunpack.c.h.b16 %v425
  %v504 = vunpack.c.l.b16 %v426
  %v505 = vunpack.c.h.b16 %v426
  %v506 = vunpack.c.l.b16 %v427
  %v507 = vunpack.c.h.b16 %v427
  %v508 = vunpack.c.l.b16 %v428
  %v509 = vunpack.c.h.b16 %v428
  %v510 = vunpack.c.l.b16 %v429
  %v511 = vunpack.c.h.b16 %v429
  %v512 = vunpack.c.l.b16 %v430
  %v513 = vunpack.c.h.b16 %v430
  %v514 = vunpack.c.l.b16 %v431
  %v515 = vunpack.c.h.b16 %v431
  %v516 = vunpack.c.l.b16 %v432
  %v517 = vunpack.c.h.b16 %v432
  %v518 = vunpack.c.l.b16 %v433
  %v519 = vunpack.c.h.b16 %v433
  %v520 = vunpack.c.l.b16 %v434
  %v521 = vunpack.c.h.b16 %v434
  %v522 = vunpack.c.l.b16 %v435
  %v523 = vunpack.c.h.b16 %v435
  %v524 = vunpack.c.l.b16 %v436
  %v525 = vunpack.c.h.b16 %v436
  %v526 = vunpack.c.l.b16 %v437
  %v527 = vunpack.c.h.b16 %v437
  %v528 = vunpack.c.l.b16 %v438
  %v529 = vunpack.c.h.b16 %v438
  %v530 = vunpack.c.l.b16 %v439
  %v531 = vunpack.c.h.b16 %v439
  %v532 = vunpack.c.l.b16 %v440
  %v533 = vunpack.c.h.b16 %v440
  %v534 = vunpack.c.l.b16 %v441
  %v535 = vunpack.c.h.b16 %v441
  %v536 = vunpack.c.l.b16 %v442
  %v537 = vunpack.c.h.b16 %v442
  %v538 = vunpack.c.l.b16 %v443
  %v539 = vunpack.c.h.b16 %v443
  %v540 = vpack.c.b16 %v476, %v476
  %v541 = vpack.c.b16 %v477, %v477
  %v542 = vpack.c.b16 %v478, %v478
  %v543 = vpack.c.b16 %v479, %v479
  %v544 = vpack.c.b16 %v480, %v480
  %v545 = vpack.c.b16 %v481, %v481
  %v546 = vpack.c.b16 %v482, %v482
  %v547 = vpack.c.b16 %v483, %v483
  %v548 = vpack.c.b16 %v484, %v484
  %v549 = vpack.c.b16 %v485, %v485
  %v550 = vpack.c.b16 %v486, %v486
  %v551 = vpack.c.b16 %v487, %v487
  %v552 = vpack.c.b16 %v488, %v488
  %v553 = vpack.c.b16 %v489, %v489
  %v554 = vpack.c.b16 %v490, %v490
  %v555 = vpack.c.b16 %v491, %v491
  %v556 = vpack.c.b16 %v492, %v492
  %v557 = vpack.c.b16 %v493, %v493
  %v558 = vpack.c.b16 %v494, %v494
  %v559 = vpack.c.b16 %v495, %v495
  %v560 = vpack.c.b16 %v496, %v496
  %v561 = vpack.c.b16 %v497, %v497
  %v562 = vpack.c.b16 %v498, %v498
  %v563 = vpack.c.b16 %v499, %v499
  %v564 = vpack.c.b16 %v500, %v500
  %v565 = vpack.c.b16 %v501, %v501
  %v566 = vpack.c.b16 %v502, %v502
  %v567 = vpack.c.b16 %v503, %v503
  %v568 = vpack.c.b16 %v504, %v504
  %v569 = vpack.c.b16 %v505, %v505
  %v570 = vpack.c.b16 %v506, %v506
  %v571 = vpack.c.b16 %v507, %v507
  %v572 = vpack.c.b16 %v508, %v508
  %v573 = vpack.c.b16 %v509, %v509
  %v574 = vpack.c.b16 %v510, %v510
  %v575 = vpack.c.b16 %v511, %v511
  %v576 = vpack.c.b16 %v512, %v512
  %v577 = vpack.c.b16 %v513, %v513
  %v578 = vpack.c.b16 %v514, %v514
  %v579 = vpack.c.b16 %v515, %v515
  %v580 = vpack.c.b16 %v516, %v516
  %v581 = vpack.c.b16 %v517, %v517
  %v582 = vpack.c.b16 %v518, %v518
  %v583 = vpack.c.b16 %v519, %v519
  %v584 = vpack.c.b16 %v520, %v520
  %v585 = vpack.c.b16 %v521, %v521
  %v586 = vpack.c.b16 %v522, %v522
  %v587 = vpack.c.b16 %v523, %v523
  %v588 = vpack.c.b16 %v524, %v524
  %v589 = vpack.c.b16 %v525, %v525
  %v590 = vpack.c.b16 %v526, %v526
  %v591 = vpack.c.b16 %v527, %v527
  %v592 = vpack.c.b16 %v528, %v528
  %v593 = vpack.c.b16 %v529, %v529
  %v594 = vpack.c.b16 %v530, %v530
  %v595 = vpack.c.b16 %v531, %v531
  %v596 = vpack.c.b16 %v532, %v532
  %v597 = vpack.c.b16 %v533, %v533
  %v598 = vpack.c.b16 %v534, %v534
  %v599 = vpack.c.b16 %v535, %v535
  %v600 = vpack.c.b16 %v536, %v536
  %v601 = vpack.c.b16 %v537, %v537
  %v602 = vpack.c.b16 %v538, %v538
  %v603 = vpack.c.b16 %v539, %v539
  %vm668 = vcmask 125952
  %669 = vst.msk [vmem:[%s3] sm:$0xf] %vm668, %v540
  %670 = vst.msk [vmem:[%s3 + $0x4] sm:$0xf] %vm668, %v541
  %671 = vst.msk [vmem:[%s3 + $0x8] sm:$0xf] %vm668, %v542
  %672 = vst.msk [vmem:[%s3 + $0xc] sm:$0xf] %vm668, %v543
  %673 = vst.msk [vmem:[%s3 + $0x10] sm:$0xf] %vm668, %v544
  %674 = vst.msk [vmem:[%s3 + $0x14] sm:$0xf] %vm668, %v545
  %675 = vst.msk [vmem:[%s3 + $0x18] sm:$0xf] %vm668, %v546
  %676 = vst.msk [vmem:[%s3 + $0x1c] sm:$0xf] %vm668, %v547
  %677 = vst.msk [vmem:[%s3 + $0x20] sm:$0xf] %vm668, %v548
  %678 = vst.msk [vmem:[%s3 + $0x24] sm:$0xf] %vm668, %v549
  %679 = vst.msk [vmem:[%s3 + $0x28] sm:$0xf] %vm668, %v550
  %680 = vst.msk [vmem:[%s3 + $0x2c] sm:$0xf] %vm668, %v551
  %681 = vst.msk [vmem:[%s3 + $0x30] sm:$0xf] %vm668, %v552
  %682 = vst.msk [vmem:[%s3 + $0x34] sm:$0xf] %vm668, %v553
  %683 = vst.msk [vmem:[%s3 + $0x38] sm:$0xf] %vm668, %v554
  %684 = vst.msk [vmem:[%s3 + $0x3c] sm:$0xf] %vm668, %v555
  %685 = vst.msk [vmem:[%s3 + $0x40] sm:$0xf] %vm668, %v556
  %686 = vst.msk [vmem:[%s3 + $0x44] sm:$0xf] %vm668, %v557
  %687 = vst.msk [vmem:[%s3 + $0x48] sm:$0xf] %vm668, %v558
  %688 = vst.msk [vmem:[%s3 + $0x4c] sm:$0xf] %vm668, %v559
  %689 = vst.msk [vmem:[%s3 + $0x50] sm:$0xf] %vm668, %v560
  %690 = vst.msk [vmem:[%s3 + $0x54] sm:$0xf] %vm668, %v561
  %691 = vst.msk [vmem:[%s3 + $0x58] sm:$0xf] %vm668, %v562
  %692 = vst.msk [vmem:[%s3 + $0x5c] sm:$0xf] %vm668, %v563
  %693 = vst.msk [vmem:[%s3 + $0x60] sm:$0xf] %vm668, %v564
  %694 = vst.msk [vmem:[%s3 + $0x64] sm:$0xf] %vm668, %v565
  %695 = vst.msk [vmem:[%s3 + $0x68] sm:$0xf] %vm668, %v566
  %696 = vst.msk [vmem:[%s3 + $0x6c] sm:$0xf] %vm668, %v567
  %697 = vst.msk [vmem:[%s3 + $0x70] sm:$0xf] %vm668, %v568
  %698 = vst.msk [vmem:[%s3 + $0x74] sm:$0xf] %vm668, %v569
  %699 = vst.msk [vmem:[%s3 + $0x78] sm:$0xf] %vm668, %v570
  %700 = vst.msk [vmem:[%s3 + $0x7c] sm:$0xf] %vm668, %v571
  %701 = vst.msk [vmem:[%s3 + $0x80] sm:$0xf] %vm668, %v572
  %702 = vst.msk [vmem:[%s3 + $0x84] sm:$0xf] %vm668, %v573
  %703 = vst.msk [vmem:[%s3 + $0x88] sm:$0xf] %vm668, %v574
  %704 = vst.msk [vmem:[%s3 + $0x8c] sm:$0xf] %vm668, %v575
  %705 = vst.msk [vmem:[%s3 + $0x90] sm:$0xf] %vm668, %v576
  %706 = vst.msk [vmem:[%s3 + $0x94] sm:$0xf] %vm668, %v577
  %707 = vst.msk [vmem:[%s3 + $0x98] sm:$0xf] %vm668, %v578
  %708 = vst.msk [vmem:[%s3 + $0x9c] sm:$0xf] %vm668, %v579
  %709 = vst.msk [vmem:[%s3 + $0xa0] sm:$0xf] %vm668, %v580
  %710 = vst.msk [vmem:[%s3 + $0xa4] sm:$0xf] %vm668, %v581
  %711 = vst.msk [vmem:[%s3 + $0xa8] sm:$0xf] %vm668, %v582
  %712 = vst.msk [vmem:[%s3 + $0xac] sm:$0xf] %vm668, %v583
  %713 = vst.msk [vmem:[%s3 + $0xb0] sm:$0xf] %vm668, %v584
  %714 = vst.msk [vmem:[%s3 + $0xb4] sm:$0xf] %vm668, %v585
  %715 = vst.msk [vmem:[%s3 + $0xb8] sm:$0xf] %vm668, %v586
  %716 = vst.msk [vmem:[%s3 + $0xbc] sm:$0xf] %vm668, %v587
  %717 = vst.msk [vmem:[%s3 + $0xc0] sm:$0xf] %vm668, %v588
  %718 = vst.msk [vmem:[%s3 + $0xc4] sm:$0xf] %vm668, %v589
  %719 = vst.msk [vmem:[%s3 + $0xc8] sm:$0xf] %vm668, %v590
  %720 = vst.msk [vmem:[%s3 + $0xcc] sm:$0xf] %vm668, %v591
  %721 = vst.msk [vmem:[%s3 + $0xd0] sm:$0xf] %vm668, %v592
  %722 = vst.msk [vmem:[%s3 + $0xd4] sm:$0xf] %vm668, %v593
  %723 = vst.msk [vmem:[%s3 + $0xd8] sm:$0xf] %vm668, %v594
  %724 = vst.msk [vmem:[%s3 + $0xdc] sm:$0xf] %vm668, %v595
  %725 = vst.msk [vmem:[%s3 + $0xe0] sm:$0xf] %vm668, %v596
  %726 = vst.msk [vmem:[%s3 + $0xe4] sm:$0xf] %vm668, %v597
  %727 = vst.msk [vmem:[%s3 + $0xe8] sm:$0xf] %vm668, %v598
  %728 = vst.msk [vmem:[%s3 + $0xec] sm:$0xf] %vm668, %v599
  %729 = vst.msk [vmem:[%s3 + $0xf0] sm:$0xf] %vm668, %v600
  %730 = vst.msk [vmem:[%s3 + $0xf4] sm:$0xf] %vm668, %v601
  %731 = vst.msk [vmem:[%s3 + $0xf8] sm:$0xf] %vm668, %v602
  %732 = vst.msk [vmem:[%s3 + $0xfc] sm:$0xf] %vm668, %v603
  // Predicated region
  $region14: #{_lambda_.21} parent=0 // pred_check
    _
  $region15: #{_lambda_.21} parent=0 // pred_check_branch
    %734 = sbr.rel (0) target = $region17
  $region16: #{_lambda_.21} parent=0 // pred_region
    _
  $region17: #{_lambda_.21} parent=0 // pred_fallthru
    _
  // Predicated region
  $region18: #{_lambda_.21} parent=0 // pred_check
    _
  $region19: #{_lambda_.21} parent=0 // pred_check_branch
    %736 = sbr.rel (0) target = $region21
  $region20: #{_lambda_.21} parent=0 // pred_region
    _
  $region21: #{_lambda_.21} parent=0 // pred_fallthru
    _

// kernel: _lambda_.22
$region0: #{_lambda_.22}
  #allocation0 [shape = 'u32[]', space=smem, size = 0x4, offset = 0x4, fixed_abs, tag = 'smem constant byte address 0x4 - core index']
  #allocation1 [shape = 'u32[144,128]{1,0:T(1,128)}', space=vmem, size = 0x12000, scoped, tag = 'internal scratch']
  %s0 = inlined_call_operand.vmem [shape: bf16[512,16], index: 0, kind: input, shape index: {}]
  %s1 = inlined_call_operand.vmem [shape: bf16[16,48], index: 1, kind: input, shape index: {}]
  %s2 = inlined_call_operand.vmem [shape: f32[512,48], index: 2, kind: output, shape index: {}]
  %s3 = sld [smem:[#allocation0]]
  $region18: #{_lambda_.22} parent=0
    _
  %s5 = ssub.s32 1, %s3
  %s6 = scalar_select 0, %s5, %s3
  // Predicated region
  $region2: #{_lambda_.22} parent=0 // pred_check
    _
  $region3: #{_lambda_.22} parent=0 // pred_check_branch
    %8 = sbr.rel (0) target = $region5
  $region4: #{_lambda_.22} parent=0 // pred_region
    _
  $region5: #{_lambda_.22} parent=0 // pred_fallthru
    _
  // Predicated region
  $region6: #{_lambda_.22} parent=0 // pred_check
    _
  $region7: #{_lambda_.22} parent=0 // pred_check_branch
    %10 = sbr.rel (0) target = $region9
  $region8: #{_lambda_.22} parent=0 // pred_region
    _
  $region9: #{_lambda_.22} parent=0 // pred_fallthru
    _
  %v12 = vld [vmem:[%s0] sm:$0xf]
  %v13 = vld [vmem:[%s0 + $0x4] sm:$0xf]
  %v14 = vld [vmem:[%s0 + $0x8] sm:$0xf]
  %v15 = vld [vmem:[%s0 + $0xc] sm:$0xf]
  %v16 = vld [vmem:[%s0 + $0x10] sm:$0xf]
  %v17 = vld [vmem:[%s0 + $0x14] sm:$0xf]
  %v18 = vld [vmem:[%s0 + $0x18] sm:$0xf]
  %v19 = vld [vmem:[%s0 + $0x1c] sm:$0xf]
  %v20 = vld [vmem:[%s0 + $0x20] sm:$0xf]
  %v21 = vld [vmem:[%s0 + $0x24] sm:$0xf]
  %v22 = vld [vmem:[%s0 + $0x28] sm:$0xf]
  %v23 = vld [vmem:[%s0 + $0x2c] sm:$0xf]
  %v24 = vld [vmem:[%s0 + $0x30] sm:$0xf]
  %v25 = vld [vmem:[%s0 + $0x34] sm:$0xf]
  %v26 = vld [vmem:[%s0 + $0x38] sm:$0xf]
  %v27 = vld [vmem:[%s0 + $0x3c] sm:$0xf]
  %v28 = vld [vmem:[%s0 + $0x40] sm:$0xf]
  %v29 = vld [vmem:[%s0 + $0x44] sm:$0xf]
  %v30 = vld [vmem:[%s0 + $0x48] sm:$0xf]
  %v31 = vld [vmem:[%s0 + $0x4c] sm:$0xf]
  %v32 = vld [vmem:[%s0 + $0x50] sm:$0xf]
  %v33 = vld [vmem:[%s0 + $0x54] sm:$0xf]
  %v34 = vld [vmem:[%s0 + $0x58] sm:$0xf]
  %v35 = vld [vmem:[%s0 + $0x5c] sm:$0xf]
  %v36 = vld [vmem:[%s0 + $0x60] sm:$0xf]
  %v37 = vld [vmem:[%s0 + $0x64] sm:$0xf]
  %v38 = vld [vmem:[%s0 + $0x68] sm:$0xf]
  %v39 = vld [vmem:[%s0 + $0x6c] sm:$0xf]
  %v40 = vld [vmem:[%s0 + $0x70] sm:$0xf]
  %v41 = vld [vmem:[%s0 + $0x74] sm:$0xf]
  %v42 = vld [vmem:[%s0 + $0x78] sm:$0xf]
  %v43 = vld [vmem:[%s0 + $0x7c] sm:$0xf]
  %v44 = vld [vmem:[%s0 + $0x80] sm:$0xf]
  %v45 = vld [vmem:[%s0 + $0x84] sm:$0xf]
  %v46 = vld [vmem:[%s0 + $0x88] sm:$0xf]
  %v47 = vld [vmem:[%s0 + $0x8c] sm:$0xf]
  %v48 = vld [vmem:[%s0 + $0x90] sm:$0xf]
  %v49 = vld [vmem:[%s0 + $0x94] sm:$0xf]
  %v50 = vld [vmem:[%s0 + $0x98] sm:$0xf]
  %v51 = vld [vmem:[%s0 + $0x9c] sm:$0xf]
  %v52 = vld [vmem:[%s0 + $0xa0] sm:$0xf]
  %v53 = vld [vmem:[%s0 + $0xa4] sm:$0xf]
  %v54 = vld [vmem:[%s0 + $0xa8] sm:$0xf]
  %v55 = vld [vmem:[%s0 + $0xac] sm:$0xf]
  %v56 = vld [vmem:[%s0 + $0xb0] sm:$0xf]
  %v57 = vld [vmem:[%s0 + $0xb4] sm:$0xf]
  %v58 = vld [vmem:[%s0 + $0xb8] sm:$0xf]
  %v59 = vld [vmem:[%s0 + $0xbc] sm:$0xf]
  %v60 = vld [vmem:[%s0 + $0xc0] sm:$0xf]
  %v61 = vld [vmem:[%s0 + $0xc4] sm:$0xf]
  %v62 = vld [vmem:[%s0 + $0xc8] sm:$0xf]
  %v63 = vld [vmem:[%s0 + $0xcc] sm:$0xf]
  %v64 = vld [vmem:[%s0 + $0xd0] sm:$0xf]
  %v65 = vld [vmem:[%s0 + $0xd4] sm:$0xf]
  %v66 = vld [vmem:[%s0 + $0xd8] sm:$0xf]
  %v67 = vld [vmem:[%s0 + $0xdc] sm:$0xf]
  %v68 = vld [vmem:[%s0 + $0xe0] sm:$0xf]
  %v69 = vld [vmem:[%s0 + $0xe4] sm:$0xf]
  %v70 = vld [vmem:[%s0 + $0xe8] sm:$0xf]
  %v71 = vld [vmem:[%s0 + $0xec] sm:$0xf]
  %v72 = vld [vmem:[%s0 + $0xf0] sm:$0xf]
  %v73 = vld [vmem:[%s0 + $0xf4] sm:$0xf]
  %v74 = vld [vmem:[%s0 + $0xf8] sm:$0xf]
  %v75 = vld [vmem:[%s0 + $0xfc] sm:$0xf]
  %v76 = vld [vmem:[%s1] sm:$0xf]
  %v77 = vld [vmem:[%s1 + $0x4] sm:$0xf]
  %v142 = vunpack.c.l.b16 %v12
  %v143 = vunpack.c.l.b16 %v13
  %v144 = vunpack.c.l.b16 %v14
  %v145 = vunpack.c.l.b16 %v15
  %v146 = vunpack.c.l.b16 %v16
  %v147 = vunpack.c.l.b16 %v17
  %v148 = vunpack.c.l.b16 %v18
  %v149 = vunpack.c.l.b16 %v19
  %v150 = vunpack.c.l.b16 %v20
  %v151 = vunpack.c.l.b16 %v21
  %v152 = vunpack.c.l.b16 %v22
  %v153 = vunpack.c.l.b16 %v23
  %v154 = vunpack.c.l.b16 %v24
  %v155 = vunpack.c.l.b16 %v25
  %v156 = vunpack.c.l.b16 %v26
  %v157 = vunpack.c.l.b16 %v27
  %v158 = vunpack.c.l.b16 %v28
  %v159 = vunpack.c.l.b16 %v29
  %v160 = vunpack.c.l.b16 %v30
  %v161 = vunpack.c.l.b16 %v31
  %v162 = vunpack.c.l.b16 %v32
  %v163 = vunpack.c.l.b16 %v33
  %v164 = vunpack.c.l.b16 %v34
  %v165 = vunpack.c.l.b16 %v35
  %v166 = vunpack.c.l.b16 %v36
  %v167 = vunpack.c.l.b16 %v37
  %v168 = vunpack.c.l.b16 %v38
  %v169 = vunpack.c.l.b16 %v39
  %v170 = vunpack.c.l.b16 %v40
  %v171 = vunpack.c.l.b16 %v41
  %v172 = vunpack.c.l.b16 %v42
  %v173 = vunpack.c.l.b16 %v43
  %v174 = vunpack.c.l.b16 %v44
  %v175 = vunpack.c.l.b16 %v45
  %v176 = vunpack.c.l.b16 %v46
  %v177 = vunpack.c.l.b16 %v47
  %v178 = vunpack.c.l.b16 %v48
  %v179 = vunpack.c.l.b16 %v49
  %v180 = vunpack.c.l.b16 %v50
  %v181 = vunpack.c.l.b16 %v51
  %v182 = vunpack.c.l.b16 %v52
  %v183 = vunpack.c.l.b16 %v53
  %v184 = vunpack.c.l.b16 %v54
  %v185 = vunpack.c.l.b16 %v55
  %v186 = vunpack.c.l.b16 %v56
  %v187 = vunpack.c.l.b16 %v57
  %v188 = vunpack.c.l.b16 %v58
  %v189 = vunpack.c.l.b16 %v59
  %v190 = vunpack.c.l.b16 %v60
  %v191 = vunpack.c.l.b16 %v61
  %v192 = vunpack.c.l.b16 %v62
  %v193 = vunpack.c.l.b16 %v63
  %v194 = vunpack.c.l.b16 %v64
  %v195 = vunpack.c.l.b16 %v65
  %v196 = vunpack.c.l.b16 %v66
  %v197 = vunpack.c.l.b16 %v67
  %v198 = vunpack.c.l.b16 %v68
  %v199 = vunpack.c.l.b16 %v69
  %v200 = vunpack.c.l.b16 %v70
  %v201 = vunpack.c.l.b16 %v71
  %v202 = vunpack.c.l.b16 %v72
  %v203 = vunpack.c.l.b16 %v73
  %v204 = vunpack.c.l.b16 %v74
  %v205 = vunpack.c.l.b16 %v75
  %v206 = vpack.c.b16 %v143, %v142
  %v207 = vpack.c.b16 %v145, %v144
  %v208 = vpack.c.b16 %v147, %v146
  %v209 = vpack.c.b16 %v149, %v148
  %v210 = vpack.c.b16 %v151, %v150
  %v211 = vpack.c.b16 %v153, %v152
  %v212 = vpack.c.b16 %v155, %v154
  %v213 = vpack.c.b16 %v157, %v156
  %v214 = vpack.c.b16 %v159, %v158
  %v215 = vpack.c.b16 %v161, %v160
  %v216 = vpack.c.b16 %v163, %v162
  %v217 = vpack.c.b16 %v165, %v164
  %v218 = vpack.c.b16 %v167, %v166
  %v219 = vpack.c.b16 %v169, %v168
  %v220 = vpack.c.b16 %v171, %v170
  %v221 = vpack.c.b16 %v173, %v172
  %v222 = vpack.c.b16 %v175, %v174
  %v223 = vpack.c.b16 %v177, %v176
  %v224 = vpack.c.b16 %v179, %v178
  %v225 = vpack.c.b16 %v181, %v180
  %v226 = vpack.c.b16 %v183, %v182
  %v227 = vpack.c.b16 %v185, %v184
  %v228 = vpack.c.b16 %v187, %v186
  %v229 = vpack.c.b16 %v189, %v188
  %v230 = vpack.c.b16 %v191, %v190
  %v231 = vpack.c.b16 %v193, %v192
  %v232 = vpack.c.b16 %v195, %v194
  %v233 = vpack.c.b16 %v197, %v196
  %v234 = vpack.c.b16 %v199, %v198
  %v235 = vpack.c.b16 %v201, %v200
  %v236 = vpack.c.b16 %v203, %v202
  %v237 = vpack.c.b16 %v205, %v204
  %v240 = vunpack.c.l.b16 %v76
  %v241 = vunpack.c.l.b16 %v77
  %v242 = vpack.c.b16 %v241, %v240
  %vm244 = vcmask 130048
  %v246 = vsel %vm244, %v206, 0
  %v249 = vsel %vm244, %v207, 0
  %v252 = vsel %vm244, %v208, 0
  %v255 = vsel %vm244, %v209, 0
  %v258 = vsel %vm244, %v210, 0
  %v261 = vsel %vm244, %v211, 0
  %v264 = vsel %vm244, %v212, 0
  %v267 = vsel %vm244, %v213, 0
  %v270 = vsel %vm244, %v214, 0
  %v273 = vsel %vm244, %v215, 0
  %v276 = vsel %vm244, %v216, 0
  %v279 = vsel %vm244, %v217, 0
  %v282 = vsel %vm244, %v218, 0
  %v285 = vsel %vm244, %v219, 0
  %v288 = vsel %vm244, %v220, 0
  %v291 = vsel %vm244, %v221, 0
  %v294 = vsel %vm244, %v222, 0
  %v297 = vsel %vm244, %v223, 0
  %v300 = vsel %vm244, %v224, 0
  %v303 = vsel %vm244, %v225, 0
  %v306 = vsel %vm244, %v226, 0
  %v309 = vsel %vm244, %v227, 0
  %v312 = vsel %vm244, %v228, 0
  %v315 = vsel %vm244, %v229, 0
  %v318 = vsel %vm244, %v230, 0
  %v321 = vsel %vm244, %v231, 0
  %v324 = vsel %vm244, %v232, 0
  %v327 = vsel %vm244, %v233, 0
  %v330 = vsel %vm244, %v234, 0
  %v333 = vsel %vm244, %v235, 0
  %v336 = vsel %vm244, %v236, 0
  %v339 = vsel %vm244, %v237, 0
  %341 = vmatprep.subr.bf16.mxu0 0
  %342 = vmatpush1.bf16.msra.mxu0 0
  %343 = vmatprep.subr.bf16.mxu0 0
  %344 = vmatpush1.bf16.msra.mxu0 0
  %345 = vmatprep.subr.bf16.mxu0 0
  %346 = vmatpush1.bf16.msra.mxu0 0
  %347 = vmatprep.subr.bf16.mxu0 0
  %348 = vmatpush1.bf16.msra.mxu0 0
  %349 = vmatprep.subr.bf16.mxu0 0
  %350 = vmatpush1.bf16.msra.mxu0 0
  %351 = vmatprep.subr.bf16.mxu0 0
  %352 = vmatpush1.bf16.msra.mxu0 0
  %353 = vmatprep.subr.bf16.mxu0 0
  %354 = vmatpush1.bf16.msra.mxu0 0
  %355 = vmatprep.subr.bf16.mxu0 0
  %356 = vmatpush1.bf16.msra.mxu0 %v242
  %357 = vmatprep.subr.bf16.mxu0 0
  %358 = vmatpush2.bf16.msra.mxu0 0
  %359 = vmatprep.subr.bf16.mxu0 0
  %360 = vmatpush2.bf16.msra.mxu0 0
  %361 = vmatprep.subr.bf16.mxu0 0
  %362 = vmatpush2.bf16.msra.mxu0 0
  %363 = vmatprep.subr.bf16.mxu0 0
  %364 = vmatpush2.bf16.msra.mxu0 0
  %365 = vmatprep.subr.bf16.mxu0 0
  %366 = vmatpush2.bf16.msra.mxu0 0
  %367 = vmatprep.subr.bf16.mxu0 0
  %368 = vmatpush2.bf16.msra.mxu0 0
  %369 = vmatprep.subr.bf16.mxu0 0
  %370 = vmatpush2.bf16.msra.mxu0 0
  %371 = vmatprep.subr.bf16.mxu0 0
  %372 = vmatpush2.bf16.msra.mxu0 0
  %373 = vmatprep.mubr.bf16.mxu0 0
  %374 = vmatmul.mubr.bf16.gmra.mxu0 %v246
  %v375 = vpop.f32.mrf.mxu0
  %v376 = vadd.f32 0.0, %v375
  %v377 = vpop.f32.mrf.mxu0
  %v378 = vpop.f32.mrf.mxu0
  %v379 = vadd.f32 0.0, %v378
  %v380 = vpop.f32.mrf.mxu0
  %381 = vmatprep.mubr.bf16.mxu0 0
  %382 = vmatmul.mubr.bf16.gmra.mxu0 %v249
  %v383 = vpop.f32.mrf.mxu0
  %v384 = vadd.f32 0.0, %v383
  %v385 = vpop.f32.mrf.mxu0
  %v386 = vpop.f32.mrf.mxu0
  %v387 = vadd.f32 0.0, %v386
  %v388 = vpop.f32.mrf.mxu0
  %389 = vmatprep.mubr.bf16.mxu0 0
  %390 = vmatmul.mubr.bf16.gmra.mxu0 %v252
  %v391 = vpop.f32.mrf.mxu0
  %v392 = vadd.f32 0.0, %v391
  %v393 = vpop.f32.mrf.mxu0
  %v394 = vpop.f32.mrf.mxu0
  %v395 = vadd.f32 0.0, %v394
  %v396 = vpop.f32.mrf.mxu0
  %397 = vmatprep.mubr.bf16.mxu0 0
  %398 = vmatmul.mubr.bf16.gmra.mxu0 %v255
  %v399 = vpop.f32.mrf.mxu0
  %v400 = vadd.f32 0.0, %v399
  %v401 = vpop.f32.mrf.mxu0
  %v402 = vpop.f32.mrf.mxu0
  %v403 = vadd.f32 0.0, %v402
  %v404 = vpop.f32.mrf.mxu0
  %405 = vmatprep.mubr.bf16.mxu0 0
  %406 = vmatmul.mubr.bf16.gmra.mxu0 %v258
  %v407 = vpop.f32.mrf.mxu0
  %v408 = vadd.f32 0.0, %v407
  %v409 = vpop.f32.mrf.mxu0
  %v410 = vpop.f32.mrf.mxu0
  %v411 = vadd.f32 0.0, %v410
  %v412 = vpop.f32.mrf.mxu0
  %413 = vmatprep.mubr.bf16.mxu0 0
  %414 = vmatmul.mubr.bf16.gmra.mxu0 %v261
  %v415 = vpop.f32.mrf.mxu0
  %v416 = vadd.f32 0.0, %v415
  %v417 = vpop.f32.mrf.mxu0
  %v418 = vpop.f32.mrf.mxu0
  %v419 = vadd.f32 0.0, %v418
  %v420 = vpop.f32.mrf.mxu0
  %421 = vmatprep.mubr.bf16.mxu0 0
  %422 = vmatmul.mubr.bf16.gmra.mxu0 %v264
  %v423 = vpop.f32.mrf.mxu0
  %v424 = vadd.f32 0.0, %v423
  %v425 = vpop.f32.mrf.mxu0
  %v426 = vpop.f32.mrf.mxu0
  %v427 = vadd.f32 0.0, %v426
  %v428 = vpop.f32.mrf.mxu0
  %429 = vmatprep.mubr.bf16.mxu0 0
  %430 = vmatmul.mubr.bf16.gmra.mxu0 %v267
  %v431 = vpop.f32.mrf.mxu0
  %v432 = vadd.f32 0.0, %v431
  %v433 = vpop.f32.mrf.mxu0
  %v434 = vpop.f32.mrf.mxu0
  %v435 = vadd.f32 0.0, %v434
  %v436 = vpop.f32.mrf.mxu0
  %437 = vmatprep.mubr.bf16.mxu0 0
  %438 = vmatmul.mubr.bf16.gmra.mxu0 %v270
  %v439 = vpop.f32.mrf.mxu0
  %v440 = vadd.f32 0.0, %v439
  %v441 = vpop.f32.mrf.mxu0
  %v442 = vpop.f32.mrf.mxu0
  %v443 = vadd.f32 0.0, %v442
  %v444 = vpop.f32.mrf.mxu0
  %445 = vmatprep.mubr.bf16.mxu0 0
  %446 = vmatmul.mubr.bf16.gmra.mxu0 %v273
  %v447 = vpop.f32.mrf.mxu0
  %v448 = vadd.f32 0.0, %v447
  %v449 = vpop.f32.mrf.mxu0
  %v450 = vpop.f32.mrf.mxu0
  %v451 = vadd.f32 0.0, %v450
  %v452 = vpop.f32.mrf.mxu0
  %453 = vmatprep.mubr.bf16.mxu0 0
  %454 = vmatmul.mubr.bf16.gmra.mxu0 %v276
  %v455 = vpop.f32.mrf.mxu0
  %v456 = vadd.f32 0.0, %v455
  %v457 = vpop.f32.mrf.mxu0
  %v458 = vpop.f32.mrf.mxu0
  %v459 = vadd.f32 0.0, %v458
  %v460 = vpop.f32.mrf.mxu0
  %461 = vmatprep.mubr.bf16.mxu0 0
  %462 = vmatmul.mubr.bf16.gmra.mxu0 %v279
  %v463 = vpop.f32.mrf.mxu0
  %v464 = vadd.f32 0.0, %v463
  %v465 = vpop.f32.mrf.mxu0
  %v466 = vpop.f32.mrf.mxu0
  %v467 = vadd.f32 0.0, %v466
  %v468 = vpop.f32.mrf.mxu0
  %469 = vmatprep.mubr.bf16.mxu0 0
  %470 = vmatmul.mubr.bf16.gmra.mxu0 %v282
  %v471 = vpop.f32.mrf.mxu0
  %v472 = vadd.f32 0.0, %v471
  %v473 = vpop.f32.mrf.mxu0
  %v474 = vpop.f32.mrf.mxu0
  %v475 = vadd.f32 0.0, %v474
  %v476 = vpop.f32.mrf.mxu0
  %477 = vmatprep.mubr.bf16.mxu0 0
  %478 = vmatmul.mubr.bf16.gmra.mxu0 %v285
  %v479 = vpop.f32.mrf.mxu0
  %v480 = vadd.f32 0.0, %v479
  %v481 = vpop.f32.mrf.mxu0
  %v482 = vpop.f32.mrf.mxu0
  %v483 = vadd.f32 0.0, %v482
  %v484 = vpop.f32.mrf.mxu0
  %485 = vmatprep.mubr.bf16.mxu0 0
  %486 = vmatmul.mubr.bf16.gmra.mxu0 %v288
  %v487 = vpop.f32.mrf.mxu0
  %v488 = vadd.f32 0.0, %v487
  %v489 = vpop.f32.mrf.mxu0
  %v490 = vpop.f32.mrf.mxu0
  %v491 = vadd.f32 0.0, %v490
  %v492 = vpop.f32.mrf.mxu0
  %493 = vmatprep.mubr.bf16.mxu0 0
  %494 = vmatmul.mubr.bf16.gmra.mxu0 %v291
  %v495 = vpop.f32.mrf.mxu0
  %v496 = vadd.f32 0.0, %v495
  %v497 = vpop.f32.mrf.mxu0
  %v498 = vpop.f32.mrf.mxu0
  %v499 = vadd.f32 0.0, %v498
  %v500 = vpop.f32.mrf.mxu0
  %501 = vmatprep.mubr.bf16.mxu0 0
  %502 = vmatmul.mubr.bf16.gmra.mxu0 %v294
  %v503 = vpop.f32.mrf.mxu0
  %v504 = vadd.f32 0.0, %v503
  %v505 = vpop.f32.mrf.mxu0
  %v506 = vpop.f32.mrf.mxu0
  %v507 = vadd.f32 0.0, %v506
  %v508 = vpop.f32.mrf.mxu0
  %509 = vmatprep.mubr.bf16.mxu0 0
  %510 = vmatmul.mubr.bf16.gmra.mxu0 %v297
  %v511 = vpop.f32.mrf.mxu0
  %v512 = vadd.f32 0.0, %v511
  %v513 = vpop.f32.mrf.mxu0
  %v514 = vpop.f32.mrf.mxu0
  %v515 = vadd.f32 0.0, %v514
  %v516 = vpop.f32.mrf.mxu0
  %517 = vmatprep.mubr.bf16.mxu0 0
  %518 = vmatmul.mubr.bf16.gmra.mxu0 %v300
  %v519 = vpop.f32.mrf.mxu0
  %v520 = vadd.f32 0.0, %v519
  %v521 = vpop.f32.mrf.mxu0
  %v522 = vpop.f32.mrf.mxu0
  %v523 = vadd.f32 0.0, %v522
  %v524 = vpop.f32.mrf.mxu0
  %525 = vmatprep.mubr.bf16.mxu0 0
  %526 = vmatmul.mubr.bf16.gmra.mxu0 %v303
  %v527 = vpop.f32.mrf.mxu0
  %v528 = vadd.f32 0.0, %v527
  %v529 = vpop.f32.mrf.mxu0
  %v530 = vpop.f32.mrf.mxu0
  %v531 = vadd.f32 0.0, %v530
  %v532 = vpop.f32.mrf.mxu0
  %533 = vmatprep.mubr.bf16.mxu0 0
  %534 = vmatmul.mubr.bf16.gmra.mxu0 %v306
  %v535 = vpop.f32.mrf.mxu0
  %v536 = vadd.f32 0.0, %v535
  %v537 = vpop.f32.mrf.mxu0
  %v538 = vpop.f32.mrf.mxu0
  %v539 = vadd.f32 0.0, %v538
  %v540 = vpop.f32.mrf.mxu0
  %541 = vmatprep.mubr.bf16.mxu0 0
  %542 = vmatmul.mubr.bf16.gmra.mxu0 %v309
  %v543 = vpop.f32.mrf.mxu0
  %v544 = vadd.f32 0.0, %v543
  %v545 = vpop.f32.mrf.mxu0
  %v546 = vpop.f32.mrf.mxu0
  %v547 = vadd.f32 0.0, %v546
  %v548 = vpop.f32.mrf.mxu0
  %549 = vmatprep.mubr.bf16.mxu0 0
  %550 = vmatmul.mubr.bf16.gmra.mxu0 %v312
  %v551 = vpop.f32.mrf.mxu0
  %v552 = vadd.f32 0.0, %v551
  %v553 = vpop.f32.mrf.mxu0
  %v554 = vpop.f32.mrf.mxu0
  %v555 = vadd.f32 0.0, %v554
  %v556 = vpop.f32.mrf.mxu0
  %557 = vmatprep.mubr.bf16.mxu0 0
  %558 = vmatmul.mubr.bf16.gmra.mxu0 %v315
  %v559 = vpop.f32.mrf.mxu0
  %v560 = vadd.f32 0.0, %v559
  %v561 = vpop.f32.mrf.mxu0
  %v562 = vpop.f32.mrf.mxu0
  %v563 = vadd.f32 0.0, %v562
  %v564 = vpop.f32.mrf.mxu0
  %565 = vmatprep.mubr.bf16.mxu0 0
  %566 = vmatmul.mubr.bf16.gmra.mxu0 %v318
  %v567 = vpop.f32.mrf.mxu0
  %v568 = vadd.f32 0.0, %v567
  %v569 = vpop.f32.mrf.mxu0
  %v570 = vpop.f32.mrf.mxu0
  %v571 = vadd.f32 0.0, %v570
  %v572 = vpop.f32.mrf.mxu0
  %573 = vmatprep.mubr.bf16.mxu0 0
  %574 = vmatmul.mubr.bf16.gmra.mxu0 %v321
  %v575 = vpop.f32.mrf.mxu0
  %v576 = vadd.f32 0.0, %v575
  %v577 = vpop.f32.mrf.mxu0
  %v578 = vpop.f32.mrf.mxu0
  %v579 = vadd.f32 0.0, %v578
  %v580 = vpop.f32.mrf.mxu0
  %581 = vmatprep.mubr.bf16.mxu0 0
  %582 = vmatmul.mubr.bf16.gmra.mxu0 %v324
  %v583 = vpop.f32.mrf.mxu0
  %v584 = vadd.f32 0.0, %v583
  %v585 = vpop.f32.mrf.mxu0
  %v586 = vpop.f32.mrf.mxu0
  %v587 = vadd.f32 0.0, %v586
  %v588 = vpop.f32.mrf.mxu0
  %589 = vmatprep.mubr.bf16.mxu0 0
  %590 = vmatmul.mubr.bf16.gmra.mxu0 %v327
  %v591 = vpop.f32.mrf.mxu0
  %v592 = vadd.f32 0.0, %v591
  %v593 = vpop.f32.mrf.mxu0
  %v594 = vpop.f32.mrf.mxu0
  %v595 = vadd.f32 0.0, %v594
  %v596 = vpop.f32.mrf.mxu0
  %597 = vmatprep.mubr.bf16.mxu0 0
  %598 = vmatmul.mubr.bf16.gmra.mxu0 %v330
  %v599 = vpop.f32.mrf.mxu0
  %v600 = vadd.f32 0.0, %v599
  %v601 = vpop.f32.mrf.mxu0
  %v602 = vpop.f32.mrf.mxu0
  %v603 = vadd.f32 0.0, %v602
  %v604 = vpop.f32.mrf.mxu0
  %605 = vmatprep.mubr.bf16.mxu0 0
  %606 = vmatmul.mubr.bf16.gmra.mxu0 %v333
  %v607 = vpop.f32.mrf.mxu0
  %v608 = vadd.f32 0.0, %v607
  %v609 = vpop.f32.mrf.mxu0
  %v610 = vpop.f32.mrf.mxu0
  %v611 = vadd.f32 0.0, %v610
  %v612 = vpop.f32.mrf.mxu0
  %613 = vmatprep.mubr.bf16.mxu0 0
  %614 = vmatmul.mubr.bf16.gmra.mxu0 %v336
  %v615 = vpop.f32.mrf.mxu0
  %v616 = vadd.f32 0.0, %v615
  %v617 = vpop.f32.mrf.mxu0
  %v618 = vpop.f32.mrf.mxu0
  %v619 = vadd.f32 0.0, %v618
  %v620 = vpop.f32.mrf.mxu0
  %621 = vmatprep.mubr.bf16.mxu0 0
  %622 = vmatmul.mubr.bf16.gmra.mxu0 %v339
  %v623 = vpop.f32.mrf.mxu0
  %v624 = vadd.f32 0.0, %v623
  %v625 = vpop.f32.mrf.mxu0
  %v626 = vpop.f32.mrf.mxu0
  %v627 = vadd.f32 0.0, %v626
  %v628 = vpop.f32.mrf.mxu0
  %629 = vdwg.mxu0
  %vm630 = vcmask 392192
  %631 = vst.msk [vmem:[%s2] sm:$0xff] %vm630, %v376
  %632 = vst.msk [vmem:[%s2 + $0x8] sm:$0xff] %vm630, %v379
  %633 = vst.msk [vmem:[%s2 + $0x10] sm:$0xff] %vm630, %v384
  %634 = vst.msk [vmem:[%s2 + $0x18] sm:$0xff] %vm630, %v387
  %635 = vst.msk [vmem:[%s2 + $0x20] sm:$0xff] %vm630, %v392
  %636 = vst.msk [vmem:[%s2 + $0x28] sm:$0xff] %vm630, %v395
  %637 = vst.msk [vmem:[%s2 + $0x30] sm:$0xff] %vm630, %v400
  %638 = vst.msk [vmem:[%s2 + $0x38] sm:$0xff] %vm630, %v403
  %639 = vst.msk [vmem:[%s2 + $0x40] sm:$0xff] %vm630, %v408
  %640 = vst.msk [vmem:[%s2 + $0x48] sm:$0xff] %vm630, %v411
  %641 = vst.msk [vmem:[%s2 + $0x50] sm:$0xff] %vm630, %v416
  %642 = vst.msk [vmem:[%s2 + $0x58] sm:$0xff] %vm630, %v419
  %643 = vst.msk [vmem:[%s2 + $0x60] sm:$0xff] %vm630, %v424
  %644 = vst.msk [vmem:[%s2 + $0x68] sm:$0xff] %vm630, %v427
  %645 = vst.msk [vmem:[%s2 + $0x70] sm:$0xff] %vm630, %v432
  %646 = vst.msk [vmem:[%s2 + $0x78] sm:$0xff] %vm630, %v435
  %647 = vst.msk [vmem:[%s2 + $0x80] sm:$0xff] %vm630, %v440
  %648 = vst.msk [vmem:[%s2 + $0x88] sm:$0xff] %vm630, %v443
  %649 = vst.msk [vmem:[%s2 + $0x90] sm:$0xff] %vm630, %v448
  %650 = vst.msk [vmem:[%s2 + $0x98] sm:$0xff] %vm630, %v451
  %651 = vst.msk [vmem:[%s2 + $0xa0] sm:$0xff] %vm630, %v456
  %652 = vst.msk [vmem:[%s2 + $0xa8] sm:$0xff] %vm630, %v459
  %653 = vst.msk [vmem:[%s2 + $0xb0] sm:$0xff] %vm630, %v464
  %654 = vst.msk [vmem:[%s2 + $0xb8] sm:$0xff] %vm630, %v467
  %655 = vst.msk [vmem:[%s2 + $0xc0] sm:$0xff] %vm630, %v472
  %656 = vst.msk [vmem:[%s2 + $0xc8] sm:$0xff] %vm630, %v475
  %657 = vst.msk [vmem:[%s2 + $0xd0] sm:$0xff] %vm630, %v480
  %658 = vst.msk [vmem:[%s2 + $0xd8] sm:$0xff] %vm630, %v483
  %659 = vst.msk [vmem:[%s2 + $0xe0] sm:$0xff] %vm630, %v488
  %660 = vst.msk [vmem:[%s2 + $0xe8] sm:$0xff] %vm630, %v491
  %661 = vst.msk [vmem:[%s2 + $0xf0] sm:$0xff] %vm630, %v496
  %662 = vst.msk [vmem:[%s2 + $0xf8] sm:$0xff] %vm630, %v499
  %663 = vst.msk [vmem:[%s2 + $0x100] sm:$0xff] %vm630, %v504
  %664 = vst.msk [vmem:[%s2 + $0x108] sm:$0xff] %vm630, %v507
  %665 = vst.msk [vmem:[%s2 + $0x110] sm:$0xff] %vm630, %v512
  %666 = vst.msk [vmem:[%s2 + $0x118] sm:$0xff] %vm630, %v515
  %667 = vst.msk [vmem:[%s2 + $0x120] sm:$0xff] %vm630, %v520
  %668 = vst.msk [vmem:[%s2 + $0x128] sm:$0xff] %vm630, %v523
  %669 = vst.msk [vmem:[%s2 + $0x130] sm:$0xff] %vm630, %v528
  %670 = vst.msk [vmem:[%s2 + $0x138] sm:$0xff] %vm630, %v531
  %671 = vst.msk [vmem:[%s2 + $0x140] sm:$0xff] %vm630, %v536
  %672 = vst.msk [vmem:[%s2 + $0x148] sm:$0xff] %vm630, %v539
  %673 = vst.msk [vmem:[%s2 + $0x150] sm:$0xff] %vm630, %v544
  %674 = vst.msk [vmem:[%s2 + $0x158] sm:$0xff] %vm630, %v547
  %675 = vst.msk [vmem:[%s2 + $0x160] sm:$0xff] %vm630, %v552
  %676 = vst.msk [vmem:[%s2 + $0x168] sm:$0xff] %vm630, %v555
  %677 = vst.msk [vmem:[%s2 + $0x170] sm:$0xff] %vm630, %v560
  %678 = vst.msk [vmem:[%s2 + $0x178] sm:$0xff] %vm630, %v563
  %679 = vst.msk [vmem:[%s2 + $0x180] sm:$0xff] %vm630, %v568
  %680 = vst.msk [vmem:[%s2 + $0x188] sm:$0xff] %vm630, %v571
  %681 = vst.msk [vmem:[%s2 + $0x190] sm:$0xff] %vm630, %v576
  %682 = vst.msk [vmem:[%s2 + $0x198] sm:$0xff] %vm630, %v579
  %683 = vst.msk [vmem:[%s2 + $0x1a0] sm:$0xff] %vm630, %v584
  %684 = vst.msk [vmem:[%s2 + $0x1a8] sm:$0xff] %vm630, %v587
  %685 = vst.msk [vmem:[%s2 + $0x1b0] sm:$0xff] %vm630, %v592
  %686 = vst.msk [vmem:[%s2 + $0x1b8] sm:$0xff] %vm630, %v595
  %687 = vst.msk [vmem:[%s2 + $0x1c0] sm:$0xff] %vm630, %v600
  %688 = vst.msk [vmem:[%s2 + $0x1c8] sm:$0xff] %vm630, %v603
  %689 = vst.msk [vmem:[%s2 + $0x1d0] sm:$0xff] %vm630, %v608
  %690 = vst.msk [vmem:[%s2 + $0x1d8] sm:$0xff] %vm630, %v611
  %691 = vst.msk [vmem:[%s2 + $0x1e0] sm:$0xff] %vm630, %v616
  %692 = vst.msk [vmem:[%s2 + $0x1e8] sm:$0xff] %vm630, %v619
  %693 = vst.msk [vmem:[%s2 + $0x1f0] sm:$0xff] %vm630, %v624
  %694 = vst.msk [vmem:[%s2 + $0x1f8] sm:$0xff] %vm630, %v627
  // Predicated region
  $region10: #{_lambda_.22} parent=0 // pred_check
    _
  $region11: #{_lambda_.22} parent=0 // pred_check_branch
    %696 = sbr.rel (0) target = $region13
  $region12: #{_lambda_.22} parent=0 // pred_region
    _
  $region13: #{_lambda_.22} parent=0 // pred_fallthru
    _
  // Predicated region
  $region14: #{_lambda_.22} parent=0 // pred_check
    _
  $region15: #{_lambda_.22} parent=0 // pred_check_branch
    %698 = sbr.rel (0) target = $region17
  $region16: #{_lambda_.22} parent=0 // pred_region
    _
  $region17: #{_lambda_.22} parent=0 // pred_fallthru
    _

// kernel: _lambda_.23
$region0: #{_lambda_.23}
  #allocation0 [shape = 'u32[]', space=smem, size = 0x4, offset = 0x4, fixed_abs, tag = 'smem constant byte address 0x4 - core index']
  #allocation1 [shape = 'u32[144,128]{1,0:T(1,128)}', space=vmem, size = 0x12000, scoped, tag = 'internal scratch']
  %s0 = inlined_call_operand.vmem [shape: f32[2048,3], index: 0, kind: input, shape index: {}]
  %s1 = inlined_call_operand.vmem [shape: f32[1,3], index: 1, kind: input, shape index: {}]
  %s2 = inlined_call_operand.vmem [shape: f32[1,3], index: 2, kind: input, shape index: {}]
  %s3 = inlined_call_operand.vmem [shape: f32[2048,3], index: 3, kind: output, shape index: {}]
  %s4 = sld [smem:[#allocation0]]
  $region45: #{_lambda_.23} parent=0
    _
  %s6 = ssub.s32 1, %s4
  %s7 = scalar_select 0, %s6, %s4
  loop: start=0, step=1, limit=6
  $region2: #{_lambda_.23} parent=0 // loop_pre_header
    _
  $region3: #{_lambda_.23} parent=0 // loop_header
    %s9 = sphi 0, %s13
    %p10 = scmp.ge.s32.totalorder %s9, 6
    %s19 = sphi 0, %s21
    %s22 = sphi 0, %s19
    %s23 = sphi 0, %s22
    %s39 = sphi 0, %s23
    %s43 = sphi 0, %s43
    %s45 = sphi 0, %s43
    %s46 = sphi 0, %s45
    %s60 = sphi 0, %s46
    %s64 = sphi 0, %s64
    %s66 = sphi 0, %s64
    %s67 = sphi 0, %s66
    %s81 = sphi 0, %s67
    %s87 = sphi 0, %s89
    %s90 = sphi 0, %s87
    %s91 = sphi 0, %s90
    %s107 = sphi 0, %s91
  $region4: #{_lambda_.23} parent=0 // loop_header_branch
    %12 = sbr.rel (%p10) target = $region8
  $region5: #{_lambda_.23} parent=0 // loop_body
    %s14 = ssub.s32 %s9, 1
    %s15 = ssub.s32 %s9, 2
    %s16 = sadd.s32 %s9, 1
    %s17 = ssub.s32 %s9, %s16
    %p18 = scmp.eq.s32.totalorder %s17, 0
    %s20 = sadd.s32 %s19, 1
    %s21 = scalar_select %p18, %s19, %s20
    %p24 = pneg %p18
    %p25 = scmp.eq.s32.totalorder %s9, 3
    %p26 = por %p24, %p25
    %p27 = scmp.ne.s32.totalorder %s19, %s22
    %p28 = scmp.eq.s32.totalorder %s9, 0
    %p29 = por %p27, %p28
    %p30 = scmp.ne.s32.totalorder %s19, %s22
    %p31 = scmp.eq.s32.totalorder %s14, 3
    %p32 = por %p30, %p31
    %p33 = scmp.ne.s32.totalorder %s22, %s23
    %p34 = scmp.eq.s32.totalorder %s14, 0
    %p35 = por %p33, %p34
    %p36 = scmp.ne.s32.totalorder %s22, %s23
    %p37 = scmp.eq.s32.totalorder %s15, 3
    %p38 = por %p36, %p37
    %p40 = scmp.ne.s32.totalorder %s23, %s39
    %p41 = scmp.eq.s32.totalorder %s15, 0
    %p42 = por %p40, %p41
    %s44 = sadd.s32 %s43, 1
    %p47 = scmp.eq.s32.totalorder %s9, 3
    %p48 = scmp.ne.s32.totalorder %s43, %s45
    %p49 = scmp.eq.s32.totalorder %s9, 0
    %p50 = por %p48, %p49
    %p51 = scmp.ne.s32.totalorder %s43, %s45
    %p52 = scmp.eq.s32.totalorder %s14, 3
    %p53 = por %p51, %p52
    %p54 = scmp.ne.s32.totalorder %s45, %s46
    %p55 = scmp.eq.s32.totalorder %s14, 0
    %p56 = por %p54, %p55
    %p57 = scmp.ne.s32.totalorder %s45, %s46
    %p58 = scmp.eq.s32.totalorder %s15, 3
    %p59 = por %p57, %p58
    %p61 = scmp.ne.s32.totalorder %s46, %s60
    %p62 = scmp.eq.s32.totalorder %s15, 0
    %p63 = por %p61, %p62
    %s65 = sadd.s32 %s64, 1
    %p68 = scmp.eq.s32.totalorder %s9, 3
    %p69 = scmp.ne.s32.totalorder %s64, %s66
    %p70 = scmp.eq.s32.totalorder %s9, 0
    %p71 = por %p69, %p70
    %p72 = scmp.ne.s32.totalorder %s64, %s66
    %p73 = scmp.eq.s32.totalorder %s14, 3
    %p74 = por %p72, %p73
    %p75 = scmp.ne.s32.totalorder %s66, %s67
    %p76 = scmp.eq.s32.totalorder %s14, 0
    %p77 = por %p75, %p76
    %p78 = scmp.ne.s32.totalorder %s66, %s67
    %p79 = scmp.eq.s32.totalorder %s15, 3
    %p80 = por %p78, %p79
    %p82 = scmp.ne.s32.totalorder %s67, %s81
    %p83 = scmp.eq.s32.totalorder %s15, 0
    %p84 = por %p82, %p83
    %s85 = ssub.s32 %s9, %s16
    %p86 = scmp.eq.s32.totalorder %s85, 0
    %s88 = sadd.s32 %s87, 1
    %s89 = scalar_select %p86, %s87, %s88
    %p92 = pneg %p86
    %p93 = scmp.eq.s32.totalorder %s9, 3
    %p94 = por %p92, %p93
    %p95 = scmp.ne.s32.totalorder %s87, %s90
    %p96 = scmp.eq.s32.totalorder %s9, 0
    %p97 = por %p95, %p96
    %p98 = scmp.ne.s32.totalorder %s87, %s90
    %p99 = scmp.eq.s32.totalorder %s14, 3
    %p100 = por %p98, %p99
    %p101 = scmp.ne.s32.totalorder %s90, %s91
    %p102 = scmp.eq.s32.totalorder %s14, 0
    %p103 = por %p101, %p102
    %p104 = scmp.ne.s32.totalorder %s90, %s91
    %p105 = scmp.eq.s32.totalorder %s15, 3
    %p106 = por %p104, %p105
    %p108 = scmp.ne.s32.totalorder %s91, %s107
    %p109 = scmp.eq.s32.totalorder %s15, 0
    %p110 = por %p108, %p109
    %p111 = scmp.le.s32.totalorder 1, %s9
    %p112 = scmp.lt.s32.totalorder %s9, 5
    %p113 = pnand %p111, %p112
    %p114 = pneg %p113
    // Predicated region
    $region9: #{_lambda_.23} parent=5 // pred_check
      _
    $region10: #{_lambda_.23} parent=5 // pred_check_branch
      %116 = sbr.rel (%p113) target = $region12
    $region11: #{_lambda_.23} parent=5 // pred_region
      %s117 = ssub.s32 %s9, 1
      // Predicated region
      $region13: #{_lambda_.23} parent=11 // pred_check
        %p118 = pneg %p56
      $region14: #{_lambda_.23} parent=11 // pred_check_branch
        %120 = sbr.rel (%p118) target = $region16
      $region15: #{_lambda_.23} parent=11 // pred_region
        _
      $region16: #{_lambda_.23} parent=11 // pred_fallthru
        _
      // Predicated region
      $region17: #{_lambda_.23} parent=11 // pred_check
        %p121 = pneg %p77
      $region18: #{_lambda_.23} parent=11 // pred_check_branch
        %123 = sbr.rel (%p121) target = $region20
      $region19: #{_lambda_.23} parent=11 // pred_region
        _
      $region20: #{_lambda_.23} parent=11 // pred_fallthru
        _
    $region12: #{_lambda_.23} parent=5 // pred_fallthru
      _
    %p124 = scmp.lt.s32.totalorder %s9, 4
    // Predicated region
    $region21: #{_lambda_.23} parent=5 // pred_check
      %p125 = pneg %p124
    $region22: #{_lambda_.23} parent=5 // pred_check_branch
      %127 = sbr.rel (%p125) target = $region24
    $region23: #{_lambda_.23} parent=5 // pred_region
      // Predicated region
      $region25: #{_lambda_.23} parent=23 // pred_check
        %p128 = pneg %p29
      $region26: #{_lambda_.23} parent=23 // pred_check_branch
        %130 = sbr.rel (%p128) target = $region28
      $region27: #{_lambda_.23} parent=23 // pred_region
        %s131 = smul.u32 64, %s9
        %p132 = scmp.lt.s32.totalorder %s131, 255
        %s133 = scalar_select %p132, %s131, 255
        %s134 = smul.addr %s133, 8
        %s135 = scalar_lea.vmem %s0, %s134
        %s136 = smul.u32 64, %s9
      $region28: #{_lambda_.23} parent=23 // pred_fallthru
        _
    $region24: #{_lambda_.23} parent=5 // pred_fallthru
      _
    %p137 = scmp.le.s32.totalorder 1, %s9
    %p138 = scmp.lt.s32.totalorder %s9, 5
    %p139 = pnand %p137, %p138
    %p140 = pneg %p139
    // Predicated region
    $region29: #{_lambda_.23} parent=5 // pred_check
      _
    $region30: #{_lambda_.23} parent=5 // pred_check_branch
      %142 = sbr.rel (%p139) target = $region32
    $region31: #{_lambda_.23} parent=5 // pred_region
      %s143 = ssub.s32 %s9, 1
      %s144 = smul.u32 64, %s14
      %p145 = scmp.lt.s32.totalorder %s144, 255
      %s146 = scalar_select %p145, %s144, 255
      %s147 = smul.addr %s146, 8
      %s148 = scalar_lea.vmem %s0, %s147
      %p149 = pneg %p35
      %p150 = pneg %p32
      %p151 = pneg %p56
      %p152 = pneg %p53
      %p153 = pneg %p77
      %p154 = pneg %p74
      %p155 = pneg %p103
      %p156 = pneg %p100
      %s157 = smul.u32 64, %s14
      %p158 = scmp.lt.s32.totalorder %s157, 255
      %s159 = scalar_select %p158, %s157, 255
      %s160 = smul.addr %s159, 8
      %s161 = scalar_lea.vmem %s3, %s160
      %s162 = smul.u32 64, %s14
      %p163 = scmp.lt.s32.totalorder %s162, 255
      %s164 = scalar_select %p163, %s162, 255
      %s165 = smul.addr %s164, 8
      %s166 = scalar_lea.vmem %s0, %s165
      %s167 = smul.u32 64, %s14
      %s168 = smul.u32 64, %s14
      %p169 = scmp.lt.s32.totalorder %s168, 255
      %s170 = scalar_select %p169, %s168, 255
      %s171 = smul.addr %s170, 8
      %s172 = scalar_lea.vmem %s3, %s171
      %s173 = smul.u32 64, %s14
      %v174 = vld [vmem:[%s166] sm:$0xff]
      %v175 = vld [vmem:[%s166 + $0x8] sm:$0xff]
      %v176 = vld [vmem:[%s166 + $0x10] sm:$0xff]
      %v177 = vld [vmem:[%s166 + $0x18] sm:$0xff]
      %v178 = vld [vmem:[%s166 + $0x20] sm:$0xff]
      %v179 = vld [vmem:[%s166 + $0x28] sm:$0xff]
      %v180 = vld [vmem:[%s166 + $0x30] sm:$0xff]
      %v181 = vld [vmem:[%s166 + $0x38] sm:$0xff]
      %v182 = vld [vmem:[%s166 + $0x40] sm:$0xff]
      %v183 = vld [vmem:[%s166 + $0x48] sm:$0xff]
      %v184 = vld [vmem:[%s166 + $0x50] sm:$0xff]
      %v185 = vld [vmem:[%s166 + $0x58] sm:$0xff]
      %v186 = vld [vmem:[%s166 + $0x60] sm:$0xff]
      %v187 = vld [vmem:[%s166 + $0x68] sm:$0xff]
      %v188 = vld [vmem:[%s166 + $0x70] sm:$0xff]
      %v189 = vld [vmem:[%s166 + $0x78] sm:$0xff]
      %v190 = vld [vmem:[%s166 + $0x80] sm:$0xff]
      %v191 = vld [vmem:[%s166 + $0x88] sm:$0xff]
      %v192 = vld [vmem:[%s166 + $0x90] sm:$0xff]
      %v193 = vld [vmem:[%s166 + $0x98] sm:$0xff]
      %v194 = vld [vmem:[%s166 + $0xa0] sm:$0xff]
      %v195 = vld [vmem:[%s166 + $0xa8] sm:$0xff]
      %v196 = vld [vmem:[%s166 + $0xb0] sm:$0xff]
      %v197 = vld [vmem:[%s166 + $0xb8] sm:$0xff]
      %v198 = vld [vmem:[%s166 + $0xc0] sm:$0xff]
      %v199 = vld [vmem:[%s166 + $0xc8] sm:$0xff]
      %v200 = vld [vmem:[%s166 + $0xd0] sm:$0xff]
      %v201 = vld [vmem:[%s166 + $0xd8] sm:$0xff]
      %v202 = vld [vmem:[%s166 + $0xe0] sm:$0xff]
      %v203 = vld [vmem:[%s166 + $0xe8] sm:$0xff]
      %v204 = vld [vmem:[%s166 + $0xf0] sm:$0xff]
      %v205 = vld [vmem:[%s166 + $0xf8] sm:$0xff]
      %v206 = vld [vmem:[%s166 + $0x100] sm:$0xff]
      %v207 = vld [vmem:[%s166 + $0x108] sm:$0xff]
      %v208 = vld [vmem:[%s166 + $0x110] sm:$0xff]
      %v209 = vld [vmem:[%s166 + $0x118] sm:$0xff]
      %v210 = vld [vmem:[%s166 + $0x120] sm:$0xff]
      %v211 = vld [vmem:[%s166 + $0x128] sm:$0xff]
      %v212 = vld [vmem:[%s166 + $0x130] sm:$0xff]
      %v213 = vld [vmem:[%s166 + $0x138] sm:$0xff]
      %v214 = vld [vmem:[%s166 + $0x140] sm:$0xff]
      %v215 = vld [vmem:[%s166 + $0x148] sm:$0xff]
      %v216 = vld [vmem:[%s166 + $0x150] sm:$0xff]
      %v217 = vld [vmem:[%s166 + $0x158] sm:$0xff]
      %v218 = vld [vmem:[%s166 + $0x160] sm:$0xff]
      %v219 = vld [vmem:[%s166 + $0x168] sm:$0xff]
      %v220 = vld [vmem:[%s166 + $0x170] sm:$0xff]
      %v221 = vld [vmem:[%s166 + $0x178] sm:$0xff]
      %v222 = vld [vmem:[%s166 + $0x180] sm:$0xff]
      %v223 = vld [vmem:[%s166 + $0x188] sm:$0xff]
      %v224 = vld [vmem:[%s166 + $0x190] sm:$0xff]
      %v225 = vld [vmem:[%s166 + $0x198] sm:$0xff]
      %v226 = vld [vmem:[%s166 + $0x1a0] sm:$0xff]
      %v227 = vld [vmem:[%s166 + $0x1a8] sm:$0xff]
      %v228 = vld [vmem:[%s166 + $0x1b0] sm:$0xff]
      %v229 = vld [vmem:[%s166 + $0x1b8] sm:$0xff]
      %v230 = vld [vmem:[%s166 + $0x1c0] sm:$0xff]
      %v231 = vld [vmem:[%s166 + $0x1c8] sm:$0xff]
      %v232 = vld [vmem:[%s166 + $0x1d0] sm:$0xff]
      %v233 = vld [vmem:[%s166 + $0x1d8] sm:$0xff]
      %v234 = vld [vmem:[%s166 + $0x1e0] sm:$0xff]
      %v235 = vld [vmem:[%s166 + $0x1e8] sm:$0xff]
      %v236 = vld [vmem:[%s166 + $0x1f0] sm:$0xff]
      %v237 = vld [vmem:[%s166 + $0x1f8] sm:$0xff]
      %v238 = vld [vmem:[%s1] sm:$0x1]
      %v240 = vlaneseq
      %v241 = vshrl.u32 %v240, 7
      %v242 = vsub.s32 0, %v241
      %v243 = vrot.slane %v238, %v242
      %v245 = vmul.f32 %v174, %v243
      %v246 = vmul.f32 %v175, %v243
      %v247 = vmul.f32 %v176, %v243
      %v248 = vmul.f32 %v177, %v243
      %v249 = vmul.f32 %v178, %v243
      %v250 = vmul.f32 %v179, %v243
      %v251 = vmul.f32 %v180, %v243
      %v252 = vmul.f32 %v181, %v243
      %v253 = vmul.f32 %v182, %v243
      %v254 = vmul.f32 %v183, %v243
      %v255 = vmul.f32 %v184, %v243
      %v256 = vmul.f32 %v185, %v243
      %v257 = vmul.f32 %v186, %v243
      %v258 = vmul.f32 %v187, %v243
      %v259 = vmul.f32 %v188, %v243
      %v260 = vmul.f32 %v189, %v243
      %v261 = vmul.f32 %v190, %v243
      %v262 = vmul.f32 %v191, %v243
      %v263 = vmul.f32 %v192, %v243
      %v264 = vmul.f32 %v193, %v243
      %v265 = vmul.f32 %v194, %v243
      %v266 = vmul.f32 %v195, %v243
      %v267 = vmul.f32 %v196, %v243
      %v268 = vmul.f32 %v197, %v243
      %v269 = vmul.f32 %v198, %v243
      %v270 = vmul.f32 %v199, %v243
      %v271 = vmul.f32 %v200, %v243
      %v272 = vmul.f32 %v201, %v243
      %v273 = vmul.f32 %v202, %v243
      %v274 = vmul.f32 %v203, %v243
      %v275 = vmul.f32 %v204, %v243
      %v276 = vmul.f32 %v205, %v243
      %v277 = vmul.f32 %v206, %v243
      %v278 = vmul.f32 %v207, %v243
      %v279 = vmul.f32 %v208, %v243
      %v280 = vmul.f32 %v209, %v243
      %v281 = vmul.f32 %v210, %v243
      %v282 = vmul.f32 %v211, %v243
      %v283 = vmul.f32 %v212, %v243
      %v284 = vmul.f32 %v213, %v243
      %v285 = vmul.f32 %v214, %v243
      %v286 = vmul.f32 %v215, %v243
      %v287 = vmul.f32 %v216, %v243
      %v288 = vmul.f32 %v217, %v243
      %v289 = vmul.f32 %v218, %v243
      %v290 = vmul.f32 %v219, %v243
      %v291 = vmul.f32 %v220, %v243
      %v292 = vmul.f32 %v221, %v243
      %v293 = vmul.f32 %v222, %v243
      %v294 = vmul.f32 %v223, %v243
      %v295 = vmul.f32 %v224, %v243
      %v296 = vmul.f32 %v225, %v243
      %v297 = vmul.f32 %v226, %v243
      %v298 = vmul.f32 %v227, %v243
      %v299 = vmul.f32 %v228, %v243
      %v300 = vmul.f32 %v229, %v243
      %v301 = vmul.f32 %v230, %v243
      %v302 = vmul.f32 %v231, %v243
      %v303 = vmul.f32 %v232, %v243
      %v304 = vmul.f32 %v233, %v243
      %v305 = vmul.f32 %v234, %v243
      %v306 = vmul.f32 %v235, %v243
      %v307 = vmul.f32 %v236, %v243
      %v308 = vmul.f32 %v237, %v243
      %v309 = vld [vmem:[%s2] sm:$0x1]
      %v311 = vlaneseq
      %v312 = vshrl.u32 %v311, 7
      %v313 = vsub.s32 0, %v312
      %v314 = vrot.slane %v309, %v313
      %v316 = vadd.f32 %v245, %v314
      %v317 = vadd.f32 %v246, %v314
      %v318 = vadd.f32 %v247, %v314
      %v319 = vadd.f32 %v248, %v314
      %v320 = vadd.f32 %v249, %v314
      %v321 = vadd.f32 %v250, %v314
      %v322 = vadd.f32 %v251, %v314
      %v323 = vadd.f32 %v252, %v314
      %v324 = vadd.f32 %v253, %v314
      %v325 = vadd.f32 %v254, %v314
      %v326 = vadd.f32 %v255, %v314
      %v327 = vadd.f32 %v256, %v314
      %v328 = vadd.f32 %v257, %v314
      %v329 = vadd.f32 %v258, %v314
      %v330 = vadd.f32 %v259, %v314
      %v331 = vadd.f32 %v260, %v314
      %v332 = vadd.f32 %v261, %v314
      %v333 = vadd.f32 %v262, %v314
      %v334 = vadd.f32 %v263, %v314
      %v335 = vadd.f32 %v264, %v314
      %v336 = vadd.f32 %v265, %v314
      %v337 = vadd.f32 %v266, %v314
      %v338 = vadd.f32 %v267, %v314
      %v339 = vadd.f32 %v268, %v314
      %v340 = vadd.f32 %v269, %v314
      %v341 = vadd.f32 %v270, %v314
      %v342 = vadd.f32 %v271, %v314
      %v343 = vadd.f32 %v272, %v314
      %v344 = vadd.f32 %v273, %v314
      %v345 = vadd.f32 %v274, %v314
      %v346 = vadd.f32 %v275, %v314
      %v347 = vadd.f32 %v276, %v314
      %v348 = vadd.f32 %v277, %v314
      %v349 = vadd.f32 %v278, %v314
      %v350 = vadd.f32 %v279, %v314
      %v351 = vadd.f32 %v280, %v314
      %v352 = vadd.f32 %v281, %v314
      %v353 = vadd.f32 %v282, %v314
      %v354 = vadd.f32 %v283, %v314
      %v355 = vadd.f32 %v284, %v314
      %v356 = vadd.f32 %v285, %v314
      %v357 = vadd.f32 %v286, %v314
      %v358 = vadd.f32 %v287, %v314
      %v359 = vadd.f32 %v288, %v314
      %v360 = vadd.f32 %v289, %v314
      %v361 = vadd.f32 %v290, %v314
      %v362 = vadd.f32 %v291, %v314
      %v363 = vadd.f32 %v292, %v314
      %v364 = vadd.f32 %v293, %v314
      %v365 = vadd.f32 %v294, %v314
      %v366 = vadd.f32 %v295, %v314
      %v367 = vadd.f32 %v296, %v314
      %v368 = vadd.f32 %v297, %v314
      %v369 = vadd.f32 %v298, %v314
      %v370 = vadd.f32 %v299, %v314
      %v371 = vadd.f32 %v300, %v314
      %v372 = vadd.f32 %v301, %v314
      %v373 = vadd.f32 %v302, %v314
      %v374 = vadd.f32 %v303, %v314
      %v375 = vadd.f32 %v304, %v314
      %v376 = vadd.f32 %v305, %v314
      %v377 = vadd.f32 %v306, %v314
      %v378 = vadd.f32 %v307, %v314
      %v379 = vadd.f32 %v308, %v314
      %v380 = vsub.f32 0.0, %v316
      %v381 = vsub.f32 0.0, %v317
      %v382 = vsub.f32 0.0, %v318
      %v383 = vsub.f32 0.0, %v319
      %v384 = vsub.f32 0.0, %v320
      %v385 = vsub.f32 0.0, %v321
      %v386 = vsub.f32 0.0, %v322
      %v387 = vsub.f32 0.0, %v323
      %v388 = vsub.f32 0.0, %v324
      %v389 = vsub.f32 0.0, %v325
      %v390 = vsub.f32 0.0, %v326
      %v391 = vsub.f32 0.0, %v327
      %v392 = vsub.f32 0.0, %v328
      %v393 = vsub.f32 0.0, %v329
      %v394 = vsub.f32 0.0, %v330
      %v395 = vsub.f32 0.0, %v331
      %v396 = vsub.f32 0.0, %v332
      %v397 = vsub.f32 0.0, %v333
      %v398 = vsub.f32 0.0, %v334
      %v399 = vsub.f32 0.0, %v335
      %v400 = vsub.f32 0.0, %v336
      %v401 = vsub.f32 0.0, %v337
      %v402 = vsub.f32 0.0, %v338
      %v403 = vsub.f32 0.0, %v339
      %v404 = vsub.f32 0.0, %v340
      %v405 = vsub.f32 0.0, %v341
      %v406 = vsub.f32 0.0, %v342
      %v407 = vsub.f32 0.0, %v343
      %v408 = vsub.f32 0.0, %v344
      %v409 = vsub.f32 0.0, %v345
      %v410 = vsub.f32 0.0, %v346
      %v411 = vsub.f32 0.0, %v347
      %v412 = vsub.f32 0.0, %v348
      %v413 = vsub.f32 0.0, %v349
      %v414 = vsub.f32 0.0, %v350
      %v415 = vsub.f32 0.0, %v351
      %v416 = vsub.f32 0.0, %v352
      %v417 = vsub.f32 0.0, %v353
      %v418 = vsub.f32 0.0, %v354
      %v419 = vsub.f32 0.0, %v355
      %v420 = vsub.f32 0.0, %v356
      %v421 = vsub.f32 0.0, %v357
      %v422 = vsub.f32 0.0, %v358
      %v423 = vsub.f32 0.0, %v359
      %v424 = vsub.f32 0.0, %v360
      %v425 = vsub.f32 0.0, %v361
      %v426 = vsub.f32 0.0, %v362
      %v427 = vsub.f32 0.0, %v363
      %v428 = vsub.f32 0.0, %v364
      %v429 = vsub.f32 0.0, %v365
      %v430 = vsub.f32 0.0, %v366
      %v431 = vsub.f32 0.0, %v367
      %v432 = vsub.f32 0.0, %v368
      %v433 = vsub.f32 0.0, %v369
      %v434 = vsub.f32 0.0, %v370
      %v435 = vsub.f32 0.0, %v371
      %v436 = vsub.f32 0.0, %v372
      %v437 = vsub.f32 0.0, %v373
      %v438 = vsub.f32 0.0, %v374
      %v439 = vsub.f32 0.0, %v375
      %v440 = vsub.f32 0.0, %v376
      %v441 = vsub.f32 0.0, %v377
      %v442 = vsub.f32 0.0, %v378
      %v443 = vsub.f32 0.0, %v379
      %v444 = vmul.f32 %v380, 1.442695
      %v445 = vpow.pop %v444
      %v446 = vmul.f32 %v381, 1.442695
      %v447 = vpow.pop %v446
      %v448 = vmul.f32 %v382, 1.442695
      %v449 = vpow.pop %v448
      %v450 = vmul.f32 %v383, 1.442695
      %v451 = vpow.pop %v450
      %v452 = vmul.f32 %v384, 1.442695
      %v453 = vpow.pop %v452
      %v454 = vmul.f32 %v385, 1.442695
      %v455 = vpow.pop %v454
      %v456 = vmul.f32 %v386, 1.442695
      %v457 = vpow.pop %v456
      %v458 = vmul.f32 %v387, 1.442695
      %v459 = vpow.pop %v458
      %v460 = vmul.f32 %v388, 1.442695
      %v461 = vpow.pop %v460
      %v462 = vmul.f32 %v389, 1.442695
      %v463 = vpow.pop %v462
      %v464 = vmul.f32 %v390, 1.442695
      %v465 = vpow.pop %v464
      %v466 = vmul.f32 %v391, 1.442695
      %v467 = vpow.pop %v466
      %v468 = vmul.f32 %v392, 1.442695
      %v469 = vpow.pop %v468
      %v470 = vmul.f32 %v393, 1.442695
      %v471 = vpow.pop %v470
      %v472 = vmul.f32 %v394, 1.442695
      %v473 = vpow.pop %v472
      %v474 = vmul.f32 %v395, 1.442695
      %v475 = vpow.pop %v474
      %v476 = vmul.f32 %v396, 1.442695
      %v477 = vpow.pop %v476
      %v478 = vmul.f32 %v397, 1.442695
      %v479 = vpow.pop %v478
      %v480 = vmul.f32 %v398, 1.442695
      %v481 = vpow.pop %v480
      %v482 = vmul.f32 %v399, 1.442695
      %v483 = vpow.pop %v482
      %v484 = vmul.f32 %v400, 1.442695
      %v485 = vpow.pop %v484
      %v486 = vmul.f32 %v401, 1.442695
      %v487 = vpow.pop %v486
      %v488 = vmul.f32 %v402, 1.442695
      %v489 = vpow.pop %v488
      %v490 = vmul.f32 %v403, 1.442695
      %v491 = vpow.pop %v490
      %v492 = vmul.f32 %v404, 1.442695
      %v493 = vpow.pop %v492
      %v494 = vmul.f32 %v405, 1.442695
      %v495 = vpow.pop %v494
      %v496 = vmul.f32 %v406, 1.442695
      %v497 = vpow.pop %v496
      %v498 = vmul.f32 %v407, 1.442695
      %v499 = vpow.pop %v498
      %v500 = vmul.f32 %v408, 1.442695
      %v501 = vpow.pop %v500
      %v502 = vmul.f32 %v409, 1.442695
      %v503 = vpow.pop %v502
      %v504 = vmul.f32 %v410, 1.442695
      %v505 = vpow.pop %v504
      %v506 = vmul.f32 %v411, 1.442695
      %v507 = vpow.pop %v506
      %v508 = vmul.f32 %v412, 1.442695
      %v509 = vpow.pop %v508
      %v510 = vmul.f32 %v413, 1.442695
      %v511 = vpow.pop %v510
      %v512 = vmul.f32 %v414, 1.442695
      %v513 = vpow.pop %v512
      %v514 = vmul.f32 %v415, 1.442695
      %v515 = vpow.pop %v514
      %v516 = vmul.f32 %v416, 1.442695
      %v517 = vpow.pop %v516
      %v518 = vmul.f32 %v417, 1.442695
      %v519 = vpow.pop %v518
      %v520 = vmul.f32 %v418, 1.442695
      %v521 = vpow.pop %v520
      %v522 = vmul.f32 %v419, 1.442695
      %v523 = vpow.pop %v522
      %v524 = vmul.f32 %v420, 1.442695
      %v525 = vpow.pop %v524
      %v526 = vmul.f32 %v421, 1.442695
      %v527 = vpow.pop %v526
      %v528 = vmul.f32 %v422, 1.442695
      %v529 = vpow.pop %v528
      %v530 = vmul.f32 %v423, 1.442695
      %v531 = vpow.pop %v530
      %v532 = vmul.f32 %v424, 1.442695
      %v533 = vpow.pop %v532
      %v534 = vmul.f32 %v425, 1.442695
      %v535 = vpow.pop %v534
      %v536 = vmul.f32 %v426, 1.442695
      %v537 = vpow.pop %v536
      %v538 = vmul.f32 %v427, 1.442695
      %v539 = vpow.pop %v538
      %v540 = vmul.f32 %v428, 1.442695
      %v541 = vpow.pop %v540
      %v542 = vmul.f32 %v429, 1.442695
      %v543 = vpow.pop %v542
      %v544 = vmul.f32 %v430, 1.442695
      %v545 = vpow.pop %v544
      %v546 = vmul.f32 %v431, 1.442695
      %v547 = vpow.pop %v546
      %v548 = vmul.f32 %v432, 1.442695
      %v549 = vpow.pop %v548
      %v550 = vmul.f32 %v433, 1.442695
      %v551 = vpow.pop %v550
      %v552 = vmul.f32 %v434, 1.442695
      %v553 = vpow.pop %v552
      %v554 = vmul.f32 %v435, 1.442695
      %v555 = vpow.pop %v554
      %v556 = vmul.f32 %v436, 1.442695
      %v557 = vpow.pop %v556
      %v558 = vmul.f32 %v437, 1.442695
      %v559 = vpow.pop %v558
      %v560 = vmul.f32 %v438, 1.442695
      %v561 = vpow.pop %v560
      %v562 = vmul.f32 %v439, 1.442695
      %v563 = vpow.pop %v562
      %v564 = vmul.f32 %v440, 1.442695
      %v565 = vpow.pop %v564
      %v566 = vmul.f32 %v441, 1.442695
      %v567 = vpow.pop %v566
      %v568 = vmul.f32 %v442, 1.442695
      %v569 = vpow.pop %v568
      %v570 = vmul.f32 %v443, 1.442695
      %v571 = vpow.pop %v570
      %v572 = vadd.f32 %v445, 1.0
      %v573 = vadd.f32 %v447, 1.0
      %v574 = vadd.f32 %v449, 1.0
      %v575 = vadd.f32 %v451, 1.0
      %v576 = vadd.f32 %v453, 1.0
      %v577 = vadd.f32 %v455, 1.0
      %v578 = vadd.f32 %v457, 1.0
      %v579 = vadd.f32 %v459, 1.0
      %v580 = vadd.f32 %v461, 1.0
      %v581 = vadd.f32 %v463, 1.0
      %v582 = vadd.f32 %v465, 1.0
      %v583 = vadd.f32 %v467, 1.0
      %v584 = vadd.f32 %v469, 1.0
      %v585 = vadd.f32 %v471, 1.0
      %v586 = vadd.f32 %v473, 1.0
      %v587 = vadd.f32 %v475, 1.0
      %v588 = vadd.f32 %v477, 1.0
      %v589 = vadd.f32 %v479, 1.0
      %v590 = vadd.f32 %v481, 1.0
      %v591 = vadd.f32 %v483, 1.0
      %v592 = vadd.f32 %v485, 1.0
      %v593 = vadd.f32 %v487, 1.0
      %v594 = vadd.f32 %v489, 1.0
      %v595 = vadd.f32 %v491, 1.0
      %v596 = vadd.f32 %v493, 1.0
      %v597 = vadd.f32 %v495, 1.0
      %v598 = vadd.f32 %v497, 1.0
      %v599 = vadd.f32 %v499, 1.0
      %v600 = vadd.f32 %v501, 1.0
      %v601 = vadd.f32 %v503, 1.0
      %v602 = vadd.f32 %v505, 1.0
      %v603 = vadd.f32 %v507, 1.0
      %v604 = vadd.f32 %v509, 1.0
      %v605 = vadd.f32 %v511, 1.0
      %v606 = vadd.f32 %v513, 1.0
      %v607 = vadd.f32 %v515, 1.0
      %v608 = vadd.f32 %v517, 1.0
      %v609 = vadd.f32 %v519, 1.0
      %v610 = vadd.f32 %v521, 1.0
      %v611 = vadd.f32 %v523, 1.0
      %v612 = vadd.f32 %v525, 1.0
      %v613 = vadd.f32 %v527, 1.0
      %v614 = vadd.f32 %v529, 1.0
      %v615 = vadd.f32 %v531, 1.0
      %v616 = vadd.f32 %v533, 1.0
      %v617 = vadd.f32 %v535, 1.0
      %v618 = vadd.f32 %v537, 1.0
      %v619 = vadd.f32 %v539, 1.0
      %v620 = vadd.f32 %v541, 1.0
      %v621 = vadd.f32 %v543, 1.0
      %v622 = vadd.f32 %v545, 1.0
      %v623 = vadd.f32 %v547, 1.0
      %v624 = vadd.f32 %v549, 1.0
      %v625 = vadd.f32 %v551, 1.0
      %v626 = vadd.f32 %v553, 1.0
      %v627 = vadd.f32 %v555, 1.0
      %v628 = vadd.f32 %v557, 1.0
      %v629 = vadd.f32 %v559, 1.0
      %v630 = vadd.f32 %v561, 1.0
      %v631 = vadd.f32 %v563, 1.0
      %v632 = vadd.f32 %v565, 1.0
      %v633 = vadd.f32 %v567, 1.0
      %v634 = vadd.f32 %v569, 1.0
      %v635 = vadd.f32 %v571, 1.0
      %v636 = vrcp.pop %v572
      %v637 = vrcp.pop %v573
      %v638 = vrcp.pop %v574
      %v639 = vrcp.pop %v575
      %v640 = vrcp.pop %v576
      %v641 = vrcp.pop %v577
      %v642 = vrcp.pop %v578
      %v643 = vrcp.pop %v579
      %v644 = vrcp.pop %v580
      %v645 = vrcp.pop %v581
      %v646 = vrcp.pop %v582
      %v647 = vrcp.pop %v583
      %v648 = vrcp.pop %v584
      %v649 = vrcp.pop %v585
      %v650 = vrcp.pop %v586
      %v651 = vrcp.pop %v587
      %v652 = vrcp.pop %v588
      %v653 = vrcp.pop %v589
      %v654 = vrcp.pop %v590
      %v655 = vrcp.pop %v591
      %v656 = vrcp.pop %v592
      %v657 = vrcp.pop %v593
      %v658 = vrcp.pop %v594
      %v659 = vrcp.pop %v595
      %v660 = vrcp.pop %v596
      %v661 = vrcp.pop %v597
      %v662 = vrcp.pop %v598
      %v663 = vrcp.pop %v599
      %v664 = vrcp.pop %v600
      %v665 = vrcp.pop %v601
      %v666 = vrcp.pop %v602
      %v667 = vrcp.pop %v603
      %v668 = vrcp.pop %v604
      %v669 = vrcp.pop %v605
      %v670 = vrcp.pop %v606
      %v671 = vrcp.pop %v607
      %v672 = vrcp.pop %v608
      %v673 = vrcp.pop %v609
      %v674 = vrcp.pop %v610
      %v675 = vrcp.pop %v611
      %v676 = vrcp.pop %v612
      %v677 = vrcp.pop %v613
      %v678 = vrcp.pop %v614
      %v679 = vrcp.pop %v615
      %v680 = vrcp.pop %v616
      %v681 = vrcp.pop %v617
      %v682 = vrcp.pop %v618
      %v683 = vrcp.pop %v619
      %v684 = vrcp.pop %v620
      %v685 = vrcp.pop %v621
      %v686 = vrcp.pop %v622
      %v687 = vrcp.pop %v623
      %v688 = vrcp.pop %v624
      %v689 = vrcp.pop %v625
      %v690 = vrcp.pop %v626
      %v691 = vrcp.pop %v627
      %v692 = vrcp.pop %v628
      %v693 = vrcp.pop %v629
      %v694 = vrcp.pop %v630
      %v695 = vrcp.pop %v631
      %v696 = vrcp.pop %v632
      %v697 = vrcp.pop %v633
      %v698 = vrcp.pop %v634
      %v699 = vrcp.pop %v635
      %vm700 = vcmask 23552
      %701 = vst.msk [vmem:[%s172] sm:$0xff] %vm700, %v636
      %702 = vst.msk [vmem:[%s172 + $0x8] sm:$0xff] %vm700, %v637
      %703 = vst.msk [vmem:[%s172 + $0x10] sm:$0xff] %vm700, %v638
      %704 = vst.msk [vmem:[%s172 + $0x18] sm:$0xff] %vm700, %v639
      %705 = vst.msk [vmem:[%s172 + $0x20] sm:$0xff] %vm700, %v640
      %706 = vst.msk [vmem:[%s172 + $0x28] sm:$0xff] %vm700, %v641
      %707 = vst.msk [vmem:[%s172 + $0x30] sm:$0xff] %vm700, %v642
      %708 = vst.msk [vmem:[%s172 + $0x38] sm:$0xff] %vm700, %v643
      %709 = vst.msk [vmem:[%s172 + $0x40] sm:$0xff] %vm700, %v644
      %710 = vst.msk [vmem:[%s172 + $0x48] sm:$0xff] %vm700, %v645
      %711 = vst.msk [vmem:[%s172 + $0x50] sm:$0xff] %vm700, %v646
      %712 = vst.msk [vmem:[%s172 + $0x58] sm:$0xff] %vm700, %v647
      %713 = vst.msk [vmem:[%s172 + $0x60] sm:$0xff] %vm700, %v648
      %714 = vst.msk [vmem:[%s172 + $0x68] sm:$0xff] %vm700, %v649
      %715 = vst.msk [vmem:[%s172 + $0x70] sm:$0xff] %vm700, %v650
      %716 = vst.msk [vmem:[%s172 + $0x78] sm:$0xff] %vm700, %v651
      %717 = vst.msk [vmem:[%s172 + $0x80] sm:$0xff] %vm700, %v652
      %718 = vst.msk [vmem:[%s172 + $0x88] sm:$0xff] %vm700, %v653
      %719 = vst.msk [vmem:[%s172 + $0x90] sm:$0xff] %vm700, %v654
      %720 = vst.msk [vmem:[%s172 + $0x98] sm:$0xff] %vm700, %v655
      %721 = vst.msk [vmem:[%s172 + $0xa0] sm:$0xff] %vm700, %v656
      %722 = vst.msk [vmem:[%s172 + $0xa8] sm:$0xff] %vm700, %v657
      %723 = vst.msk [vmem:[%s172 + $0xb0] sm:$0xff] %vm700, %v658
      %724 = vst.msk [vmem:[%s172 + $0xb8] sm:$0xff] %vm700, %v659
      %725 = vst.msk [vmem:[%s172 + $0xc0] sm:$0xff] %vm700, %v660
      %726 = vst.msk [vmem:[%s172 + $0xc8] sm:$0xff] %vm700, %v661
      %727 = vst.msk [vmem:[%s172 + $0xd0] sm:$0xff] %vm700, %v662
      %728 = vst.msk [vmem:[%s172 + $0xd8] sm:$0xff] %vm700, %v663
      %729 = vst.msk [vmem:[%s172 + $0xe0] sm:$0xff] %vm700, %v664
      %730 = vst.msk [vmem:[%s172 + $0xe8] sm:$0xff] %vm700, %v665
      %731 = vst.msk [vmem:[%s172 + $0xf0] sm:$0xff] %vm700, %v666
      %732 = vst.msk [vmem:[%s172 + $0xf8] sm:$0xff] %vm700, %v667
      %733 = vst.msk [vmem:[%s172 + $0x100] sm:$0xff] %vm700, %v668
      %734 = vst.msk [vmem:[%s172 + $0x108] sm:$0xff] %vm700, %v669
      %735 = vst.msk [vmem:[%s172 + $0x110] sm:$0xff] %vm700, %v670
      %736 = vst.msk [vmem:[%s172 + $0x118] sm:$0xff] %vm700, %v671
      %737 = vst.msk [vmem:[%s172 + $0x120] sm:$0xff] %vm700, %v672
      %738 = vst.msk [vmem:[%s172 + $0x128] sm:$0xff] %vm700, %v673
      %739 = vst.msk [vmem:[%s172 + $0x130] sm:$0xff] %vm700, %v674
      %740 = vst.msk [vmem:[%s172 + $0x138] sm:$0xff] %vm700, %v675
      %741 = vst.msk [vmem:[%s172 + $0x140] sm:$0xff] %vm700, %v676
      %742 = vst.msk [vmem:[%s172 + $0x148] sm:$0xff] %vm700, %v677
      %743 = vst.msk [vmem:[%s172 + $0x150] sm:$0xff] %vm700, %v678
      %744 = vst.msk [vmem:[%s172 + $0x158] sm:$0xff] %vm700, %v679
      %745 = vst.msk [vmem:[%s172 + $0x160] sm:$0xff] %vm700, %v680
      %746 = vst.msk [vmem:[%s172 + $0x168] sm:$0xff] %vm700, %v681
      %747 = vst.msk [vmem:[%s172 + $0x170] sm:$0xff] %vm700, %v682
      %748 = vst.msk [vmem:[%s172 + $0x178] sm:$0xff] %vm700, %v683
      %749 = vst.msk [vmem:[%s172 + $0x180] sm:$0xff] %vm700, %v684
      %750 = vst.msk [vmem:[%s172 + $0x188] sm:$0xff] %vm700, %v685
      %751 = vst.msk [vmem:[%s172 + $0x190] sm:$0xff] %vm700, %v686
      %752 = vst.msk [vmem:[%s172 + $0x198] sm:$0xff] %vm700, %v687
      %753 = vst.msk [vmem:[%s172 + $0x1a0] sm:$0xff] %vm700, %v688
      %754 = vst.msk [vmem:[%s172 + $0x1a8] sm:$0xff] %vm700, %v689
      %755 = vst.msk [vmem:[%s172 + $0x1b0] sm:$0xff] %vm700, %v690
      %756 = vst.msk [vmem:[%s172 + $0x1b8] sm:$0xff] %vm700, %v691
      %757 = vst.msk [vmem:[%s172 + $0x1c0] sm:$0xff] %vm700, %v692
      %758 = vst.msk [vmem:[%s172 + $0x1c8] sm:$0xff] %vm700, %v693
      %759 = vst.msk [vmem:[%s172 + $0x1d0] sm:$0xff] %vm700, %v694
      %760 = vst.msk [vmem:[%s172 + $0x1d8] sm:$0xff] %vm700, %v695
      %761 = vst.msk [vmem:[%s172 + $0x1e0] sm:$0xff] %vm700, %v696
      %762 = vst.msk [vmem:[%s172 + $0x1e8] sm:$0xff] %vm700, %v697
      %763 = vst.msk [vmem:[%s172 + $0x1f0] sm:$0xff] %vm700, %v698
      %764 = vst.msk [vmem:[%s172 + $0x1f8] sm:$0xff] %vm700, %v699
      %s765 = smul.u32 64, %s14
      %p766 = scmp.lt.s32.totalorder %s765, 255
      %s767 = scalar_select %p766, %s765, 255
      %s768 = smul.addr %s767, 8
      %s769 = scalar_lea.vmem %s3, %s768
      // Predicated region
      $region33: #{_lambda_.23} parent=31 // pred_check
        %p770 = pneg %p100
      $region34: #{_lambda_.23} parent=31 // pred_check_branch
        %772 = sbr.rel (%p770) target = $region36
      $region35: #{_lambda_.23} parent=31 // pred_region
        %s773 = smul.u32 64, %s14
      $region36: #{_lambda_.23} parent=31 // pred_fallthru
        _
    $region32: #{_lambda_.23} parent=5 // pred_fallthru
      _
    %p774 = scmp.le.s32.totalorder 2, %s9
    // Predicated region
    $region37: #{_lambda_.23} parent=5 // pred_check
      %p775 = pneg %p774
    $region38: #{_lambda_.23} parent=5 // pred_check_branch
      %777 = sbr.rel (%p775) target = $region40
    $region39: #{_lambda_.23} parent=5 // pred_region
      %s778 = ssub.s32 %s9, 2
      // Predicated region
      $region41: #{_lambda_.23} parent=39 // pred_check
        %p779 = pneg %p106
      $region42: #{_lambda_.23} parent=39 // pred_check_branch
        %781 = sbr.rel (%p779) target = $region44
      $region43: #{_lambda_.23} parent=39 // pred_region
        %s782 = smul.u32 64, %s15
        %p783 = scmp.lt.s32.totalorder %s782, 255
        %s784 = scalar_select %p783, %s782, 255
        %s785 = smul.addr %s784, 8
        %s786 = scalar_lea.vmem %s3, %s785
      $region44: #{_lambda_.23} parent=39 // pred_fallthru
        _
    $region40: #{_lambda_.23} parent=5 // pred_fallthru
      _
  $region6: #{_lambda_.23} parent=0 // loop_footer
    %s13 = sadd.s32 1, %s9
  $region7: #{_lambda_.23} parent=0 // loop_footer_branch
    %8 = sbr.rel target = $region3
  $region8: #{_lambda_.23} parent=0 // loop_exit
    _

</llo_original>
